<compile_context>
chip_gen: v7x
topology: tpu7x:2x2x1
jax: 0.10.0
libtpu: 0.0.40
codegen_flags: <defaults>
</compile_context>

<pallas_src>
import math

import jax
import jax.numpy as jnp
from jax import lax
from jax.experimental import pallas as pl
from jax.experimental.pallas import tpu as pltpu

# ---------------- config (small, consistent with the module) ----------------
VOCAB = 64
VOCAB_PAD = 128          # lane-dense padded vocab for the output store
D_MODEL = 128
N_HEADS = 4
HEAD_DIM = D_MODEL // N_HEADS
N_LAYERS = 2
FF_DIM = 4 * D_MODEL
BATCH = 2
SEQ = 8
MAX_SEQ_LEN = 64
LN_EPS = 1e-5


# ------------------------------ helpers --------------------------------------
def _layernorm(x, w, b, eps=LN_EPS):
    mu = jnp.mean(x, axis=-1, keepdims=True)
    var = jnp.mean((x - mu) ** 2, axis=-1, keepdims=True)
    return (x - mu) * lax.rsqrt(var + eps) * w + b


# ------------------------------ fused kernel ---------------------------------
def fused_forward_kernel(tok_ref, embed_ref, pe_ref, mask_ref,
                         wqkv_ref, bqkv_ref, wo_ref, bo_ref,
                         ln1w_ref, ln1b_ref,
                         wff1_ref, bff1_ref, wff2_ref, bff2_ref,
                         ln2w_ref, ln2b_ref,
                         fcw_ref, fcb_ref,
                         logits_ref):
    """Single invocation: embed -> 2 unrolled encoder layers -> vocab projection."""
    BS = tok_ref.shape[0]
    V, D = embed_ref.shape

    # --- embedding lookup via exact one-hot bf16 MXU gather; embed pre-scaled by sqrt(D),
    #     positional encoding pre-tiled to (BS, D) on host ---
    onehot = (lax.broadcasted_iota(jnp.int32, (BS, V), 1)
              == tok_ref[...]).astype(jnp.bfloat16)
    x = jnp.dot(onehot, embed_ref[...],
                preferred_element_type=jnp.float32) + pe_ref[...]        # (BS, D) f32

    for l in range(N_LAYERS):                                            # static unroll
        xb = x.astype(jnp.bfloat16)

        # fused QKV projection (bf16 MXU, f32 accum); Q pre-scaled by 1/sqrt(hd)
        qkv = jnp.dot(xb, wqkv_ref[l],
                      preferred_element_type=jnp.float32) + bqkv_ref[l]  # (BS, 3D)
        q, k, v = qkv[:, :D], qkv[:, D:2 * D], qkv[:, 2 * D:]

        attn = jnp.zeros((BS, D), jnp.float32)
        for h in range(N_HEADS):                                         # static unroll
            sl = slice(h * HEAD_DIM, (h + 1) * HEAD_DIM)
            qh = q[:, sl].astype(jnp.bfloat16)
            kh = k[:, sl].astype(jnp.bfloat16)
            vh = v[:, sl].astype(jnp.bfloat16)
            s = lax.dot_general(qh, kh, (((1,), (1,)), ((), ())),
                                preferred_element_type=jnp.float32)       # (BS, BS) f32
            s = s + mask_ref[...]                                         # additive bias
            s = s - jnp.max(s, axis=-1, keepdims=True)
            p = jnp.exp(s)
            p = p * pl.reciprocal(jnp.sum(p, axis=-1, keepdims=True), approx=True)
            ctx_h = jnp.dot(p.astype(jnp.bfloat16), vh,
                            preferred_element_type=jnp.float32)           # (BS, hd)
            # accumulate output projection per head (no lane-shuffle concat)
            attn = attn + jnp.dot(ctx_h.astype(jnp.bfloat16), wo_ref[l, h],
                                  preferred_element_type=jnp.float32)
        attn = attn + bo_ref[l]

        # residual + LayerNorm1 (post-norm), all f32
        x1 = _layernorm(x + attn, ln1w_ref[l], ln1b_ref[l])

        # feed-forward: ReLU MLP (bf16 MXU, f32 elementwise)
        hdn = jnp.dot(x1.astype(jnp.bfloat16), wff1_ref[l],
                      preferred_element_type=jnp.float32) + bff1_ref[l]
        hdn = jnp.maximum(hdn, 0.0)
        ff = jnp.dot(hdn.astype(jnp.bfloat16), wff2_ref[l],
                     preferred_element_type=jnp.float32) + bff2_ref[l]

        # residual + LayerNorm2 -> carried as a value to the next layer
        x = _layernorm(x1 + ff, ln2w_ref[l], ln2b_ref[l])

    # --- final lane-dense (128-wide padded) vocab projection ---
    logits_ref[...] = (jnp.dot(x.astype(jnp.bfloat16), fcw_ref[...],
                               preferred_element_type=jnp.float32)
                       + fcb_ref[...])


# ------------------------------- wrapper --------------------------------------
@jax.jit
def small_transformer_forward(tokens, kp):
    """tokens: [B, S] int32 -> logits [B, S, VOCAB]. Entire forward = 1 pallas_call."""
    B, S = tokens.shape
    BS = B * S
    tok = tokens.reshape(BS, 1).astype(jnp.int32)

    inputs = (tok, kp["embed"], kp["pe_bs"], kp["mask"],
              kp["wqkv_t"], kp["bqkv"], kp["wo_h"], kp["bo"],
              kp["ln1_w"], kp["ln1_b"],
              kp["wff1_t"], kp["bff1"], kp["wff2_t"], kp["bff2"],
              kp["ln2_w"], kp["ln2_b"],
              kp["fc_w_t"], kp["fc_b"])

    vmem = pl.BlockSpec(memory_space=pltpu.MemorySpace.VMEM)
    out = pl.pallas_call(
        fused_forward_kernel,
        out_shape=jax.ShapeDtypeStruct((BS, VOCAB_PAD), jnp.float32),
        in_specs=[vmem] * len(inputs),
        out_specs=vmem,
    )(*inputs)

    return out[:, :VOCAB].reshape(B, S, VOCAB)


# ----------------------- parameters & positional encoding --------------------
def sinusoidal_pe(max_len, d_model):
    position = jnp.arange(max_len, dtype=jnp.float32)[:, None]
    div_term = jnp.exp(jnp.arange(0, d_model, 2, dtype=jnp.float32)
                       * (-math.log(10000.0) / d_model))
    pe = jnp.zeros((max_len, d_model), jnp.float32)
    pe = pe.at[:, 0::2].set(jnp.sin(position * div_term))
    pe = pe.at[:, 1::2].set(jnp.cos(position * div_term))
    return pe


def init_params(key):
    """f32 reference parameters; per-layer tensors stacked along a leading [L] axis."""
    def nrm(k, shape, scale=0.02):
        return scale * jax.random.normal(k, shape, dtype=jnp.float32)

    keys = iter(jax.random.split(key, 32))
    L = N_LAYERS
    return {
        "embed":  nrm(next(keys), (VOCAB, D_MODEL)),
        "wqkv_t": nrm(next(keys), (L, D_MODEL, 3 * D_MODEL)),   # (in, out) layout
        "bqkv":   nrm(next(keys), (L, 1, 3 * D_MODEL)),
        "wo_t":   nrm(next(keys), (L, D_MODEL, D_MODEL)),
        "bo":     nrm(next(keys), (L, 1, D_MODEL)),
        "ln1_w":  jnp.ones((L, 1, D_MODEL), jnp.float32),
        "ln1_b":  jnp.zeros((L, 1, D_MODEL), jnp.float32),
        "wff1_t": nrm(next(keys), (L, D_MODEL, FF_DIM)),
        "bff1":   nrm(next(keys), (L, 1, FF_DIM)),
        "wff2_t": nrm(next(keys), (L, FF_DIM, D_MODEL)),
        "bff2":   nrm(next(keys), (L, 1, D_MODEL)),
        "ln2_w":  jnp.ones((L, 1, D_MODEL), jnp.float32),
        "ln2_b":  jnp.zeros((L, 1, D_MODEL), jnp.float32),
        "fc_w_t": nrm(next(keys), (D_MODEL, VOCAB)),
        "fc_b":   nrm(next(keys), (1, VOCAB)),
        "pe_s":   sinusoidal_pe(MAX_SEQ_LEN, D_MODEL)[:SEQ],
    }


def prepare_kernel_params(p, batch=BATCH, seq=SEQ):
    """Host-side folding: scales into weights, per-head Wo split, tiled PE, additive mask,
    bf16 matmul weights, lane-dense padded vocab projection."""
    kp = {}
    inv_sqrt_hd = 1.0 / math.sqrt(HEAD_DIM)

    # embedding pre-scaled by sqrt(d_model), cast to bf16 for the one-hot gather matmul
    kp["embed"] = (p["embed"] * math.sqrt(D_MODEL)).astype(jnp.bfloat16)

    # fold 1/sqrt(hd) into the Q columns of W_qkv and into the Q bias
    qkv_scale = jnp.concatenate(
        [jnp.full((D_MODEL,), inv_sqrt_hd, jnp.float32),
         jnp.ones((2 * D_MODEL,), jnp.float32)])
    kp["wqkv_t"] = (p["wqkv_t"] * qkv_scale[None, None, :]).astype(jnp.bfloat16)
    kp["bqkv"] = p["bqkv"] * qkv_scale[None, None, :]

    # output projection split per head: (L, D, D) -> (L, H, hd, D)
    kp["wo_h"] = p["wo_t"].reshape(N_LAYERS, N_HEADS, HEAD_DIM, D_MODEL).astype(jnp.bfloat16)
    kp["bo"] = p["bo"]

    kp["ln1_w"], kp["ln1_b"] = p["ln1_w"], p["ln1_b"]
    kp["wff1_t"] = p["wff1_t"].astype(jnp.bfloat16)
    kp["bff1"] = p["bff1"]
    kp["wff2_t"] = p["wff2_t"].astype(jnp.bfloat16)
    kp["bff2"] = p["bff2"]
    kp["ln2_w"], kp["ln2_b"] = p["ln2_w"], p["ln2_b"]

    # lane-dense padded vocab projection
    fcw = jnp.zeros((D_MODEL, VOCAB_PAD), jnp.float32).at[:, :VOCAB].set(p["fc_w_t"])
    fcb = jnp.zeros((1, VOCAB_PAD), jnp.float32).at[:, :VOCAB].set(p["fc_b"])
    kp["fc_w_t"] = fcw.astype(jnp.bfloat16)
    kp["fc_b"] = fcb

    # positional encoding pre-tiled over the folded batch rows
    kp["pe_bs"] = jnp.tile(p["pe_s"], (batch, 1))                        # (B*S, D)

    # block-diagonal causal additive mask over the folded rows (0 / -1e30)
    bs = batch * seq
    row = jnp.arange(bs)[:, None]
    col = jnp.arange(bs)[None, :]
    allowed = (row // seq == col // seq) & (row >= col)
    kp["mask"] = jnp.where(allowed, 0.0, -1e30).astype(jnp.float32)      # (B*S, B*S)
    return kp


# ------------------------------ pure-JAX f32 reference -------------------------
def reference_forward(tokens, p):
    B, S = tokens.shape
    x = p["embed"][tokens] * math.sqrt(D_MODEL) + p["pe_s"][None, :, :]
    causal = jnp.tril(jnp.ones((S, S), bool))
    hd = HEAD_DIM
    for l in range(N_LAYERS):
        qkv = x @ p["wqkv_t"][l] + p["bqkv"][l, 0]
        q, k, v = qkv[..., :D_MODEL], qkv[..., D_MODEL:2 * D_MODEL], qkv[..., 2 * D_MODEL:]
        q = q.reshape(B, S, N_HEADS, hd).transpose(0, 2, 1, 3)
        k = k.reshape(B, S, N_HEADS, hd).transpose(0, 2, 1, 3)
        v = v.reshape(B, S, N_HEADS, hd).transpose(0, 2, 1, 3)
        s = jnp.einsum("bhqd,bhkd->bhqk", q, k) / math.sqrt(hd)
        s = jnp.where(causal[None, None], s, -1e30)
        pr = jax.nn.softmax(s, axis=-1)
        ctx = jnp.einsum("bhqk,bhkd->bhqd", pr, v).transpose(0, 2, 1, 3).reshape(B, S, D_MODEL)
        attn = ctx @ p["wo_t"][l] + p["bo"][l, 0]
        x = _layernorm(x + attn, p["ln1_w"][l, 0], p["ln1_b"][l, 0])
        ff = (jnp.maximum(x @ p["wff1_t"][l] + p["bff1"][l, 0], 0.0)
              @ p["wff2_t"][l] + p["bff2"][l, 0])
        x = _layernorm(x + ff, p["ln2_w"][l, 0], p["ln2_b"][l, 0])
    return x @ p["fc_w_t"] + p["fc_b"][0]


# ----------------------------------- main --------------------------------------
if __name__ == "__main__":
    key = jax.random.PRNGKey(0)
    pkey, tkey = jax.random.split(key)
    params = init_params(pkey)                 # f32 reference params
    kparams = prepare_kernel_params(params)    # folded/casted kernel params
    tokens = jax.random.randint(tkey, (BATCH, SEQ), 0, VOCAB, dtype=jnp.int32)

    logits = small_transformer_forward(tokens, kparams)
    logits = jax.block_until_ready(logits)
    assert logits.shape == (BATCH, SEQ, VOCAB)

    ref = reference_forward(tokens, params)
    # bf16 MXU operands (incl. bf16 embedding table) vs f32 reference -> loosened tolerance
    if not jnp.allclose(logits, ref, rtol=2e-2, atol=2e-2):
        err = float(jnp.max(jnp.abs(logits - ref)))
        raise AssertionError(f"Pallas output does not match JAX reference (max|d|={err})")

    print("KERNEL_OK")
</pallas_src>

<mosaic_0001>
module attributes {stable_mosaic.version = 11 : i64} {
  func.func @fused_forward_kernel(%arg0: memref<16x1xi32, #tpu.memory_space<vmem>>, %arg1: memref<64x128xbf16, #tpu.memory_space<vmem>>, %arg2: memref<16x128xf32, #tpu.memory_space<vmem>>, %arg3: memref<16x16xf32, #tpu.memory_space<vmem>>, %arg4: memref<2x128x384xbf16, #tpu.memory_space<vmem>>, %arg5: memref<2x1x384xf32, #tpu.memory_space<vmem>>, %arg6: memref<2x4x32x128xbf16, #tpu.memory_space<vmem>>, %arg7: memref<2x1x128xf32, #tpu.memory_space<vmem>>, %arg8: memref<2x1x128xf32, #tpu.memory_space<vmem>>, %arg9: memref<2x1x128xf32, #tpu.memory_space<vmem>>, %arg10: memref<2x128x512xbf16, #tpu.memory_space<vmem>>, %arg11: memref<2x1x512xf32, #tpu.memory_space<vmem>>, %arg12: memref<2x512x128xbf16, #tpu.memory_space<vmem>>, %arg13: memref<2x1x128xf32, #tpu.memory_space<vmem>>, %arg14: memref<2x1x128xf32, #tpu.memory_space<vmem>>, %arg15: memref<2x1x128xf32, #tpu.memory_space<vmem>>, %arg16: memref<128x128xbf16, #tpu.memory_space<vmem>>, %arg17: memref<1x128xf32, #tpu.memory_space<vmem>>, %arg18: memref<16x128xf32, #tpu.memory_space<vmem>>) attributes {dimension_semantics = [], scalar_prefetch = 0 : i64, scratch_operands = 0 : i64, tpu.core_type = #tpu.core_type<tc>} {
    %0 = tpu.iota {dimensions = array<i32: 1>} : vector<16x64xi32>
    %c0 = arith.constant 0 : index
    %c0_0 = arith.constant 0 : index
    %1 = vector.load %arg0[%c0, %c0_0] : memref<16x1xi32, #tpu.memory_space<vmem>>, vector<16x1xi32>
    %2 = vector.broadcast %1 : vector<16x1xi32> to vector<16x64xi32>
    %3 = arith.cmpi eq, %0, %2 : vector<16x64xi32>
    %4 = arith.extui %3 : vector<16x64xi1> to vector<16x64xi32>
    %5 = arith.sitofp %4 : vector<16x64xi32> to vector<16x64xf32>
    %6 = arith.truncf %5 : vector<16x64xf32> to vector<16x64xbf16>
    %c0_1 = arith.constant 0 : index
    %c0_2 = arith.constant 0 : index
    %7 = vector.load %arg1[%c0_1, %c0_2] : memref<64x128xbf16, #tpu.memory_space<vmem>>, vector<64x128xbf16>
    %cst = arith.constant dense<0.000000e+00> : vector<16x128xf32>
    %8 = tpu.matmul %6, %7, %cst {dimension_numbers = #tpu.dot_dimension_numbers<[1], [0], [0], [1], [0, 0, 1, 1], [], []>} : vector<16x64xbf16>, vector<64x128xbf16>, vector<16x128xf32> -> vector<16x128xf32>
    %c0_3 = arith.constant 0 : index
    %c0_4 = arith.constant 0 : index
    %9 = vector.load %arg2[%c0_3, %c0_4] : memref<16x128xf32, #tpu.memory_space<vmem>>, vector<16x128xf32>
    %10 = arith.addf %8, %9 : vector<16x128xf32>
    %11 = arith.truncf %10 : vector<16x128xf32> to vector<16x128xbf16>
    %c0_5 = arith.constant 0 : index
    %c0_6 = arith.constant 0 : index
    %c0_7 = arith.constant 0 : index
    %12 = vector.load %arg4[%c0_5, %c0_6, %c0_7] : memref<2x128x384xbf16, #tpu.memory_space<vmem>>, vector<1x128x384xbf16>
    %13 = vector.shape_cast %12 : vector<1x128x384xbf16> to vector<128x384xbf16>
    %cst_8 = arith.constant dense<0.000000e+00> : vector<16x384xf32>
    %14 = tpu.matmul %11, %13, %cst_8 {dimension_numbers = #tpu.dot_dimension_numbers<[1], [0], [0], [1], [0, 0, 1, 1], [], []>} : vector<16x128xbf16>, vector<128x384xbf16>, vector<16x384xf32> -> vector<16x384xf32>
    %c0_9 = arith.constant 0 : index
    %c0_10 = arith.constant 0 : index
    %c0_11 = arith.constant 0 : index
    %15 = vector.load %arg5[%c0_9, %c0_10, %c0_11] : memref<2x1x384xf32, #tpu.memory_space<vmem>>, vector<1x1x384xf32>
    %16 = vector.shape_cast %15 : vector<1x1x384xf32> to vector<1x384xf32>
    %17 = vector.broadcast %16 : vector<1x384xf32> to vector<16x384xf32>
    %18 = arith.addf %14, %17 : vector<16x384xf32>
    %19 = vector.extract_strided_slice %18 {offsets = [0, 0], sizes = [16, 128], strides = [1, 1]} : vector<16x384xf32> to vector<16x128xf32>
    %20 = vector.extract_strided_slice %18 {offsets = [0, 128], sizes = [16, 128], strides = [1, 1]} : vector<16x384xf32> to vector<16x128xf32>
    %21 = vector.extract_strided_slice %18 {offsets = [0, 256], sizes = [16, 128], strides = [1, 1]} : vector<16x384xf32> to vector<16x128xf32>
    %cst_12 = arith.constant 0.000000e+00 : f32
    %22 = vector.broadcast %cst_12 : f32 to vector<16x128xf32>
    %23 = vector.extract_strided_slice %19 {offsets = [0, 0], sizes = [16, 32], strides = [1, 1]} : vector<16x128xf32> to vector<16x32xf32>
    %24 = arith.truncf %23 : vector<16x32xf32> to vector<16x32xbf16>
    %25 = vector.extract_strided_slice %20 {offsets = [0, 0], sizes = [16, 32], strides = [1, 1]} : vector<16x128xf32> to vector<16x32xf32>
    %26 = arith.truncf %25 : vector<16x32xf32> to vector<16x32xbf16>
    %27 = vector.extract_strided_slice %21 {offsets = [0, 0], sizes = [16, 32], strides = [1, 1]} : vector<16x128xf32> to vector<16x32xf32>
    %28 = arith.truncf %27 : vector<16x32xf32> to vector<16x32xbf16>
    %cst_13 = arith.constant dense<0.000000e+00> : vector<16x16xf32>
    %29 = tpu.matmul %24, %26, %cst_13 {dimension_numbers = #tpu.dot_dimension_numbers<[1], [1], [0], [0], [0, 0, 1, 0], [], []>} : vector<16x32xbf16>, vector<16x32xbf16>, vector<16x16xf32> -> vector<16x16xf32>
    %c0_14 = arith.constant 0 : index
    %c0_15 = arith.constant 0 : index
    %30 = vector.load %arg3[%c0_14, %c0_15] : memref<16x16xf32, #tpu.memory_space<vmem>>, vector<16x16xf32>
    %31 = arith.addf %29, %30 : vector<16x16xf32>
    %cst_16 = arith.constant dense<0xFF800000> : vector<16xf32>
    %32 = vector.multi_reduction <maximumf>, %31, %cst_16 [1] : vector<16x16xf32> to vector<16xf32>
    %33 = vector.shape_cast %32 : vector<16xf32> to vector<16x1xf32>
    %34 = vector.broadcast %33 : vector<16x1xf32> to vector<16x16xf32>
    %35 = arith.subf %31, %34 : vector<16x16xf32>
    %36 = math.exp %35 : vector<16x16xf32>
    %cst_17 = arith.constant dense<0.000000e+00> : vector<16xf32>
    %37 = vector.multi_reduction <add>, %36, %cst_17 [1] : vector<16x16xf32> to vector<16xf32>
    %38 = vector.shape_cast %37 : vector<16xf32> to vector<16x1xf32>
    %39 = tpu.reciprocal %38 {approx = true} : vector<16x1xf32> -> vector<16x1xf32>
    %40 = vector.broadcast %39 : vector<16x1xf32> to vector<16x16xf32>
    %41 = arith.mulf %36, %40 : vector<16x16xf32>
    %42 = arith.truncf %41 : vector<16x16xf32> to vector<16x16xbf16>
    %cst_18 = arith.constant dense<0.000000e+00> : vector<16x32xf32>
    %43 = tpu.matmul %42, %28, %cst_18 {dimension_numbers = #tpu.dot_dimension_numbers<[1], [0], [0], [1], [0, 0, 1, 1], [], []>} : vector<16x16xbf16>, vector<16x32xbf16>, vector<16x32xf32> -> vector<16x32xf32>
    %44 = arith.truncf %43 : vector<16x32xf32> to vector<16x32xbf16>
    %c0_19 = arith.constant 0 : index
    %c0_20 = arith.constant 0 : index
    %c0_21 = arith.constant 0 : index
    %c0_22 = arith.constant 0 : index
    %45 = vector.load %arg6[%c0_19, %c0_20, %c0_21, %c0_22] : memref<2x4x32x128xbf16, #tpu.memory_space<vmem>>, vector<1x1x32x128xbf16>
    %46 = vector.shape_cast %45 : vector<1x1x32x128xbf16> to vector<32x128xbf16>
    %cst_23 = arith.constant dense<0.000000e+00> : vector<16x128xf32>
    %47 = tpu.matmul %44, %46, %cst_23 {dimension_numbers = #tpu.dot_dimension_numbers<[1], [0], [0], [1], [0, 0, 1, 1], [], []>} : vector<16x32xbf16>, vector<32x128xbf16>, vector<16x128xf32> -> vector<16x128xf32>
    %48 = arith.addf %22, %47 : vector<16x128xf32>
    %49 = vector.extract_strided_slice %19 {offsets = [0, 32], sizes = [16, 32], strides = [1, 1]} : vector<16x128xf32> to vector<16x32xf32>
    %50 = arith.truncf %49 : vector<16x32xf32> to vector<16x32xbf16>
    %51 = vector.extract_strided_slice %20 {offsets = [0, 32], sizes = [16, 32], strides = [1, 1]} : vector<16x128xf32> to vector<16x32xf32>
    %52 = arith.truncf %51 : vector<16x32xf32> to vector<16x32xbf16>
    %53 = vector.extract_strided_slice %21 {offsets = [0, 32], sizes = [16, 32], strides = [1, 1]} : vector<16x128xf32> to vector<16x32xf32>
    %54 = arith.truncf %53 : vector<16x32xf32> to vector<16x32xbf16>
    %cst_24 = arith.constant dense<0.000000e+00> : vector<16x16xf32>
    %55 = tpu.matmul %50, %52, %cst_24 {dimension_numbers = #tpu.dot_dimension_numbers<[1], [1], [0], [0], [0, 0, 1, 0], [], []>} : vector<16x32xbf16>, vector<16x32xbf16>, vector<16x16xf32> -> vector<16x16xf32>
    %c0_25 = arith.constant 0 : index
    %c0_26 = arith.constant 0 : index
    %56 = vector.load %arg3[%c0_25, %c0_26] : memref<16x16xf32, #tpu.memory_space<vmem>>, vector<16x16xf32>
    %57 = arith.addf %55, %56 : vector<16x16xf32>
    %cst_27 = arith.constant dense<0xFF800000> : vector<16xf32>
    %58 = vector.multi_reduction <maximumf>, %57, %cst_27 [1] : vector<16x16xf32> to vector<16xf32>
    %59 = vector.shape_cast %58 : vector<16xf32> to vector<16x1xf32>
    %60 = vector.broadcast %59 : vector<16x1xf32> to vector<16x16xf32>
    %61 = arith.subf %57, %60 : vector<16x16xf32>
    %62 = math.exp %61 : vector<16x16xf32>
    %cst_28 = arith.constant dense<0.000000e+00> : vector<16xf32>
    %63 = vector.multi_reduction <add>, %62, %cst_28 [1] : vector<16x16xf32> to vector<16xf32>
    %64 = vector.shape_cast %63 : vector<16xf32> to vector<16x1xf32>
    %65 = tpu.reciprocal %64 {approx = true} : vector<16x1xf32> -> vector<16x1xf32>
    %66 = vector.broadcast %65 : vector<16x1xf32> to vector<16x16xf32>
    %67 = arith.mulf %62, %66 : vector<16x16xf32>
    %68 = arith.truncf %67 : vector<16x16xf32> to vector<16x16xbf16>
    %cst_29 = arith.constant dense<0.000000e+00> : vector<16x32xf32>
    %69 = tpu.matmul %68, %54, %cst_29 {dimension_numbers = #tpu.dot_dimension_numbers<[1], [0], [0], [1], [0, 0, 1, 1], [], []>} : vector<16x16xbf16>, vector<16x32xbf16>, vector<16x32xf32> -> vector<16x32xf32>
    %70 = arith.truncf %69 : vector<16x32xf32> to vector<16x32xbf16>
    %c0_30 = arith.constant 0 : index
    %c1 = arith.constant 1 : index
    %c0_31 = arith.constant 0 : index
    %c0_32 = arith.constant 0 : index
    %71 = vector.load %arg6[%c0_30, %c1, %c0_31, %c0_32] : memref<2x4x32x128xbf16, #tpu.memory_space<vmem>>, vector<1x1x32x128xbf16>
    %72 = vector.shape_cast %71 : vector<1x1x32x128xbf16> to vector<32x128xbf16>
    %cst_33 = arith.constant dense<0.000000e+00> : vector<16x128xf32>
    %73 = tpu.matmul %70, %72, %cst_33 {dimension_numbers = #tpu.dot_dimension_numbers<[1], [0], [0], [1], [0, 0, 1, 1], [], []>} : vector<16x32xbf16>, vector<32x128xbf16>, vector<16x128xf32> -> vector<16x128xf32>
    %74 = arith.addf %48, %73 : vector<16x128xf32>
    %75 = vector.extract_strided_slice %19 {offsets = [0, 64], sizes = [16, 32], strides = [1, 1]} : vector<16x128xf32> to vector<16x32xf32>
    %76 = arith.truncf %75 : vector<16x32xf32> to vector<16x32xbf16>
    %77 = vector.extract_strided_slice %20 {offsets = [0, 64], sizes = [16, 32], strides = [1, 1]} : vector<16x128xf32> to vector<16x32xf32>
    %78 = arith.truncf %77 : vector<16x32xf32> to vector<16x32xbf16>
    %79 = vector.extract_strided_slice %21 {offsets = [0, 64], sizes = [16, 32], strides = [1, 1]} : vector<16x128xf32> to vector<16x32xf32>
    %80 = arith.truncf %79 : vector<16x32xf32> to vector<16x32xbf16>
    %cst_34 = arith.constant dense<0.000000e+00> : vector<16x16xf32>
    %81 = tpu.matmul %76, %78, %cst_34 {dimension_numbers = #tpu.dot_dimension_numbers<[1], [1], [0], [0], [0, 0, 1, 0], [], []>} : vector<16x32xbf16>, vector<16x32xbf16>, vector<16x16xf32> -> vector<16x16xf32>
    %c0_35 = arith.constant 0 : index
    %c0_36 = arith.constant 0 : index
    %82 = vector.load %arg3[%c0_35, %c0_36] : memref<16x16xf32, #tpu.memory_space<vmem>>, vector<16x16xf32>
    %83 = arith.addf %81, %82 : vector<16x16xf32>
    %cst_37 = arith.constant dense<0xFF800000> : vector<16xf32>
    %84 = vector.multi_reduction <maximumf>, %83, %cst_37 [1] : vector<16x16xf32> to vector<16xf32>
    %85 = vector.shape_cast %84 : vector<16xf32> to vector<16x1xf32>
    %86 = vector.broadcast %85 : vector<16x1xf32> to vector<16x16xf32>
    %87 = arith.subf %83, %86 : vector<16x16xf32>
    %88 = math.exp %87 : vector<16x16xf32>
    %cst_38 = arith.constant dense<0.000000e+00> : vector<16xf32>
    %89 = vector.multi_reduction <add>, %88, %cst_38 [1] : vector<16x16xf32> to vector<16xf32>
    %90 = vector.shape_cast %89 : vector<16xf32> to vector<16x1xf32>
    %91 = tpu.reciprocal %90 {approx = true} : vector<16x1xf32> -> vector<16x1xf32>
    %92 = vector.broadcast %91 : vector<16x1xf32> to vector<16x16xf32>
    %93 = arith.mulf %88, %92 : vector<16x16xf32>
    %94 = arith.truncf %93 : vector<16x16xf32> to vector<16x16xbf16>
    %cst_39 = arith.constant dense<0.000000e+00> : vector<16x32xf32>
    %95 = tpu.matmul %94, %80, %cst_39 {dimension_numbers = #tpu.dot_dimension_numbers<[1], [0], [0], [1], [0, 0, 1, 1], [], []>} : vector<16x16xbf16>, vector<16x32xbf16>, vector<16x32xf32> -> vector<16x32xf32>
    %96 = arith.truncf %95 : vector<16x32xf32> to vector<16x32xbf16>
    %c0_40 = arith.constant 0 : index
    %c2 = arith.constant 2 : index
    %c0_41 = arith.constant 0 : index
    %c0_42 = arith.constant 0 : index
    %97 = vector.load %arg6[%c0_40, %c2, %c0_41, %c0_42] : memref<2x4x32x128xbf16, #tpu.memory_space<vmem>>, vector<1x1x32x128xbf16>
    %98 = vector.shape_cast %97 : vector<1x1x32x128xbf16> to vector<32x128xbf16>
    %cst_43 = arith.constant dense<0.000000e+00> : vector<16x128xf32>
    %99 = tpu.matmul %96, %98, %cst_43 {dimension_numbers = #tpu.dot_dimension_numbers<[1], [0], [0], [1], [0, 0, 1, 1], [], []>} : vector<16x32xbf16>, vector<32x128xbf16>, vector<16x128xf32> -> vector<16x128xf32>
    %100 = arith.addf %74, %99 : vector<16x128xf32>
    %101 = vector.extract_strided_slice %19 {offsets = [0, 96], sizes = [16, 32], strides = [1, 1]} : vector<16x128xf32> to vector<16x32xf32>
    %102 = arith.truncf %101 : vector<16x32xf32> to vector<16x32xbf16>
    %103 = vector.extract_strided_slice %20 {offsets = [0, 96], sizes = [16, 32], strides = [1, 1]} : vector<16x128xf32> to vector<16x32xf32>
    %104 = arith.truncf %103 : vector<16x32xf32> to vector<16x32xbf16>
    %105 = vector.extract_strided_slice %21 {offsets = [0, 96], sizes = [16, 32], strides = [1, 1]} : vector<16x128xf32> to vector<16x32xf32>
    %106 = arith.truncf %105 : vector<16x32xf32> to vector<16x32xbf16>
    %cst_44 = arith.constant dense<0.000000e+00> : vector<16x16xf32>
    %107 = tpu.matmul %102, %104, %cst_44 {dimension_numbers = #tpu.dot_dimension_numbers<[1], [1], [0], [0], [0, 0, 1, 0], [], []>} : vector<16x32xbf16>, vector<16x32xbf16>, vector<16x16xf32> -> vector<16x16xf32>
    %c0_45 = arith.constant 0 : index
    %c0_46 = arith.constant 0 : index
    %108 = vector.load %arg3[%c0_45, %c0_46] : memref<16x16xf32, #tpu.memory_space<vmem>>, vector<16x16xf32>
    %109 = arith.addf %107, %108 : vector<16x16xf32>
    %cst_47 = arith.constant dense<0xFF800000> : vector<16xf32>
    %110 = vector.multi_reduction <maximumf>, %109, %cst_47 [1] : vector<16x16xf32> to vector<16xf32>
    %111 = vector.shape_cast %110 : vector<16xf32> to vector<16x1xf32>
    %112 = vector.broadcast %111 : vector<16x1xf32> to vector<16x16xf32>
    %113 = arith.subf %109, %112 : vector<16x16xf32>
    %114 = math.exp %113 : vector<16x16xf32>
    %cst_48 = arith.constant dense<0.000000e+00> : vector<16xf32>
    %115 = vector.multi_reduction <add>, %114, %cst_48 [1] : vector<16x16xf32> to vector<16xf32>
    %116 = vector.shape_cast %115 : vector<16xf32> to vector<16x1xf32>
    %117 = tpu.reciprocal %116 {approx = true} : vector<16x1xf32> -> vector<16x1xf32>
    %118 = vector.broadcast %117 : vector<16x1xf32> to vector<16x16xf32>
    %119 = arith.mulf %114, %118 : vector<16x16xf32>
    %120 = arith.truncf %119 : vector<16x16xf32> to vector<16x16xbf16>
    %cst_49 = arith.constant dense<0.000000e+00> : vector<16x32xf32>
    %121 = tpu.matmul %120, %106, %cst_49 {dimension_numbers = #tpu.dot_dimension_numbers<[1], [0], [0], [1], [0, 0, 1, 1], [], []>} : vector<16x16xbf16>, vector<16x32xbf16>, vector<16x32xf32> -> vector<16x32xf32>
    %122 = arith.truncf %121 : vector<16x32xf32> to vector<16x32xbf16>
    %c0_50 = arith.constant 0 : index
    %c3 = arith.constant 3 : index
    %c0_51 = arith.constant 0 : index
    %c0_52 = arith.constant 0 : index
    %123 = vector.load %arg6[%c0_50, %c3, %c0_51, %c0_52] : memref<2x4x32x128xbf16, #tpu.memory_space<vmem>>, vector<1x1x32x128xbf16>
    %124 = vector.shape_cast %123 : vector<1x1x32x128xbf16> to vector<32x128xbf16>
    %cst_53 = arith.constant dense<0.000000e+00> : vector<16x128xf32>
    %125 = tpu.matmul %122, %124, %cst_53 {dimension_numbers = #tpu.dot_dimension_numbers<[1], [0], [0], [1], [0, 0, 1, 1], [], []>} : vector<16x32xbf16>, vector<32x128xbf16>, vector<16x128xf32> -> vector<16x128xf32>
    %126 = arith.addf %100, %125 : vector<16x128xf32>
    %c0_54 = arith.constant 0 : index
    %c0_55 = arith.constant 0 : index
    %c0_56 = arith.constant 0 : index
    %127 = vector.load %arg7[%c0_54, %c0_55, %c0_56] : memref<2x1x128xf32, #tpu.memory_space<vmem>>, vector<1x1x128xf32>
    %128 = vector.shape_cast %127 : vector<1x1x128xf32> to vector<1x128xf32>
    %129 = vector.broadcast %128 : vector<1x128xf32> to vector<16x128xf32>
    %130 = arith.addf %126, %129 : vector<16x128xf32>
    %131 = arith.addf %10, %130 : vector<16x128xf32>
    %c0_57 = arith.constant 0 : index
    %c0_58 = arith.constant 0 : index
    %c0_59 = arith.constant 0 : index
    %132 = vector.load %arg8[%c0_57, %c0_58, %c0_59] : memref<2x1x128xf32, #tpu.memory_space<vmem>>, vector<1x1x128xf32>
    %133 = vector.shape_cast %132 : vector<1x1x128xf32> to vector<1x128xf32>
    %c0_60 = arith.constant 0 : index
    %c0_61 = arith.constant 0 : index
    %c0_62 = arith.constant 0 : index
    %134 = vector.load %arg9[%c0_60, %c0_61, %c0_62] : memref<2x1x128xf32, #tpu.memory_space<vmem>>, vector<1x1x128xf32>
    %135 = vector.shape_cast %134 : vector<1x1x128xf32> to vector<1x128xf32>
    %cst_63 = arith.constant dense<0.000000e+00> : vector<16xf32>
    %136 = vector.multi_reduction <add>, %131, %cst_63 [1] : vector<16x128xf32> to vector<16xf32>
    %137 = vector.shape_cast %136 : vector<16xf32> to vector<16x1xf32>
    %cst_64 = arith.constant 1.280000e+02 : f32
    %138 = vector.broadcast %cst_64 : f32 to vector<16x1xf32>
    %139 = arith.divf %137, %138 : vector<16x1xf32>
    %140 = vector.broadcast %139 : vector<16x1xf32> to vector<16x128xf32>
    %141 = arith.subf %131, %140 : vector<16x128xf32>
    %142 = arith.mulf %141, %141 : vector<16x128xf32>
    %cst_65 = arith.constant dense<0.000000e+00> : vector<16xf32>
    %143 = vector.multi_reduction <add>, %142, %cst_65 [1] : vector<16x128xf32> to vector<16xf32>
    %144 = vector.shape_cast %143 : vector<16xf32> to vector<16x1xf32>
    %cst_66 = arith.constant 1.280000e+02 : f32
    %145 = vector.broadcast %cst_66 : f32 to vector<16x1xf32>
    %146 = arith.divf %144, %145 : vector<16x1xf32>
    %147 = vector.broadcast %139 : vector<16x1xf32> to vector<16x128xf32>
    %148 = arith.subf %131, %147 : vector<16x128xf32>
    %cst_67 = arith.constant 9.99999974E-6 : f32
    %149 = vector.broadcast %cst_67 : f32 to vector<16x1xf32>
    %150 = arith.addf %146, %149 : vector<16x1xf32>
    %151 = math.rsqrt %150 : vector<16x1xf32>
    %152 = vector.broadcast %151 : vector<16x1xf32> to vector<16x128xf32>
    %153 = arith.mulf %148, %152 : vector<16x128xf32>
    %154 = vector.broadcast %133 : vector<1x128xf32> to vector<16x128xf32>
    %155 = arith.mulf %153, %154 : vector<16x128xf32>
    %156 = vector.broadcast %135 : vector<1x128xf32> to vector<16x128xf32>
    %157 = arith.addf %155, %156 : vector<16x128xf32>
    %158 = arith.truncf %157 : vector<16x128xf32> to vector<16x128xbf16>
    %c0_68 = arith.constant 0 : index
    %c0_69 = arith.constant 0 : index
    %c0_70 = arith.constant 0 : index
    %159 = vector.load %arg10[%c0_68, %c0_69, %c0_70] : memref<2x128x512xbf16, #tpu.memory_space<vmem>>, vector<1x128x512xbf16>
    %160 = vector.shape_cast %159 : vector<1x128x512xbf16> to vector<128x512xbf16>
    %cst_71 = arith.constant dense<0.000000e+00> : vector<16x512xf32>
    %161 = tpu.matmul %158, %160, %cst_71 {dimension_numbers = #tpu.dot_dimension_numbers<[1], [0], [0], [1], [0, 0, 1, 1], [], []>} : vector<16x128xbf16>, vector<128x512xbf16>, vector<16x512xf32> -> vector<16x512xf32>
    %c0_72 = arith.constant 0 : index
    %c0_73 = arith.constant 0 : index
    %c0_74 = arith.constant 0 : index
    %162 = vector.load %arg11[%c0_72, %c0_73, %c0_74] : memref<2x1x512xf32, #tpu.memory_space<vmem>>, vector<1x1x512xf32>
    %163 = vector.shape_cast %162 : vector<1x1x512xf32> to vector<1x512xf32>
    %164 = vector.broadcast %163 : vector<1x512xf32> to vector<16x512xf32>
    %165 = arith.addf %161, %164 : vector<16x512xf32>
    %cst_75 = arith.constant 0.000000e+00 : f32
    %166 = vector.broadcast %cst_75 : f32 to vector<16x512xf32>
    %167 = arith.maximumf %165, %166 : vector<16x512xf32>
    %168 = arith.truncf %167 : vector<16x512xf32> to vector<16x512xbf16>
    %c0_76 = arith.constant 0 : index
    %c0_77 = arith.constant 0 : index
    %c0_78 = arith.constant 0 : index
    %169 = vector.load %arg12[%c0_76, %c0_77, %c0_78] : memref<2x512x128xbf16, #tpu.memory_space<vmem>>, vector<1x512x128xbf16>
    %170 = vector.shape_cast %169 : vector<1x512x128xbf16> to vector<512x128xbf16>
    %cst_79 = arith.constant dense<0.000000e+00> : vector<16x128xf32>
    %171 = tpu.matmul %168, %170, %cst_79 {dimension_numbers = #tpu.dot_dimension_numbers<[1], [0], [0], [1], [0, 0, 1, 1], [], []>} : vector<16x512xbf16>, vector<512x128xbf16>, vector<16x128xf32> -> vector<16x128xf32>
    %c0_80 = arith.constant 0 : index
    %c0_81 = arith.constant 0 : index
    %c0_82 = arith.constant 0 : index
    %172 = vector.load %arg13[%c0_80, %c0_81, %c0_82] : memref<2x1x128xf32, #tpu.memory_space<vmem>>, vector<1x1x128xf32>
    %173 = vector.shape_cast %172 : vector<1x1x128xf32> to vector<1x128xf32>
    %174 = vector.broadcast %173 : vector<1x128xf32> to vector<16x128xf32>
    %175 = arith.addf %171, %174 : vector<16x128xf32>
    %176 = arith.addf %157, %175 : vector<16x128xf32>
    %c0_83 = arith.constant 0 : index
    %c0_84 = arith.constant 0 : index
    %c0_85 = arith.constant 0 : index
    %177 = vector.load %arg14[%c0_83, %c0_84, %c0_85] : memref<2x1x128xf32, #tpu.memory_space<vmem>>, vector<1x1x128xf32>
    %178 = vector.shape_cast %177 : vector<1x1x128xf32> to vector<1x128xf32>
    %c0_86 = arith.constant 0 : index
    %c0_87 = arith.constant 0 : index
    %c0_88 = arith.constant 0 : index
    %179 = vector.load %arg15[%c0_86, %c0_87, %c0_88] : memref<2x1x128xf32, #tpu.memory_space<vmem>>, vector<1x1x128xf32>
    %180 = vector.shape_cast %179 : vector<1x1x128xf32> to vector<1x128xf32>
    %cst_89 = arith.constant dense<0.000000e+00> : vector<16xf32>
    %181 = vector.multi_reduction <add>, %176, %cst_89 [1] : vector<16x128xf32> to vector<16xf32>
    %182 = vector.shape_cast %181 : vector<16xf32> to vector<16x1xf32>
    %cst_90 = arith.constant 1.280000e+02 : f32
    %183 = vector.broadcast %cst_90 : f32 to vector<16x1xf32>
    %184 = arith.divf %182, %183 : vector<16x1xf32>
    %185 = vector.broadcast %184 : vector<16x1xf32> to vector<16x128xf32>
    %186 = arith.subf %176, %185 : vector<16x128xf32>
    %187 = arith.mulf %186, %186 : vector<16x128xf32>
    %cst_91 = arith.constant dense<0.000000e+00> : vector<16xf32>
    %188 = vector.multi_reduction <add>, %187, %cst_91 [1] : vector<16x128xf32> to vector<16xf32>
    %189 = vector.shape_cast %188 : vector<16xf32> to vector<16x1xf32>
    %cst_92 = arith.constant 1.280000e+02 : f32
    %190 = vector.broadcast %cst_92 : f32 to vector<16x1xf32>
    %191 = arith.divf %189, %190 : vector<16x1xf32>
    %192 = vector.broadcast %184 : vector<16x1xf32> to vector<16x128xf32>
    %193 = arith.subf %176, %192 : vector<16x128xf32>
    %cst_93 = arith.constant 9.99999974E-6 : f32
    %194 = vector.broadcast %cst_93 : f32 to vector<16x1xf32>
    %195 = arith.addf %191, %194 : vector<16x1xf32>
    %196 = math.rsqrt %195 : vector<16x1xf32>
    %197 = vector.broadcast %196 : vector<16x1xf32> to vector<16x128xf32>
    %198 = arith.mulf %193, %197 : vector<16x128xf32>
    %199 = vector.broadcast %178 : vector<1x128xf32> to vector<16x128xf32>
    %200 = arith.mulf %198, %199 : vector<16x128xf32>
    %201 = vector.broadcast %180 : vector<1x128xf32> to vector<16x128xf32>
    %202 = arith.addf %200, %201 : vector<16x128xf32>
    %203 = arith.truncf %202 : vector<16x128xf32> to vector<16x128xbf16>
    %c1_94 = arith.constant 1 : index
    %c0_95 = arith.constant 0 : index
    %c0_96 = arith.constant 0 : index
    %204 = vector.load %arg4[%c1_94, %c0_95, %c0_96] : memref<2x128x384xbf16, #tpu.memory_space<vmem>>, vector<1x128x384xbf16>
    %205 = vector.shape_cast %204 : vector<1x128x384xbf16> to vector<128x384xbf16>
    %cst_97 = arith.constant dense<0.000000e+00> : vector<16x384xf32>
    %206 = tpu.matmul %203, %205, %cst_97 {dimension_numbers = #tpu.dot_dimension_numbers<[1], [0], [0], [1], [0, 0, 1, 1], [], []>} : vector<16x128xbf16>, vector<128x384xbf16>, vector<16x384xf32> -> vector<16x384xf32>
    %c1_98 = arith.constant 1 : index
    %c0_99 = arith.constant 0 : index
    %c0_100 = arith.constant 0 : index
    %207 = vector.load %arg5[%c1_98, %c0_99, %c0_100] : memref<2x1x384xf32, #tpu.memory_space<vmem>>, vector<1x1x384xf32>
    %208 = vector.shape_cast %207 : vector<1x1x384xf32> to vector<1x384xf32>
    %209 = vector.broadcast %208 : vector<1x384xf32> to vector<16x384xf32>
    %210 = arith.addf %206, %209 : vector<16x384xf32>
    %211 = vector.extract_strided_slice %210 {offsets = [0, 0], sizes = [16, 128], strides = [1, 1]} : vector<16x384xf32> to vector<16x128xf32>
    %212 = vector.extract_strided_slice %210 {offsets = [0, 128], sizes = [16, 128], strides = [1, 1]} : vector<16x384xf32> to vector<16x128xf32>
    %213 = vector.extract_strided_slice %210 {offsets = [0, 256], sizes = [16, 128], strides = [1, 1]} : vector<16x384xf32> to vector<16x128xf32>
    %cst_101 = arith.constant 0.000000e+00 : f32
    %214 = vector.broadcast %cst_101 : f32 to vector<16x128xf32>
    %215 = vector.extract_strided_slice %211 {offsets = [0, 0], sizes = [16, 32], strides = [1, 1]} : vector<16x128xf32> to vector<16x32xf32>
    %216 = arith.truncf %215 : vector<16x32xf32> to vector<16x32xbf16>
    %217 = vector.extract_strided_slice %212 {offsets = [0, 0], sizes = [16, 32], strides = [1, 1]} : vector<16x128xf32> to vector<16x32xf32>
    %218 = arith.truncf %217 : vector<16x32xf32> to vector<16x32xbf16>
    %219 = vector.extract_strided_slice %213 {offsets = [0, 0], sizes = [16, 32], strides = [1, 1]} : vector<16x128xf32> to vector<16x32xf32>
    %220 = arith.truncf %219 : vector<16x32xf32> to vector<16x32xbf16>
    %cst_102 = arith.constant dense<0.000000e+00> : vector<16x16xf32>
    %221 = tpu.matmul %216, %218, %cst_102 {dimension_numbers = #tpu.dot_dimension_numbers<[1], [1], [0], [0], [0, 0, 1, 0], [], []>} : vector<16x32xbf16>, vector<16x32xbf16>, vector<16x16xf32> -> vector<16x16xf32>
    %c0_103 = arith.constant 0 : index
    %c0_104 = arith.constant 0 : index
    %222 = vector.load %arg3[%c0_103, %c0_104] : memref<16x16xf32, #tpu.memory_space<vmem>>, vector<16x16xf32>
    %223 = arith.addf %221, %222 : vector<16x16xf32>
    %cst_105 = arith.constant dense<0xFF800000> : vector<16xf32>
    %224 = vector.multi_reduction <maximumf>, %223, %cst_105 [1] : vector<16x16xf32> to vector<16xf32>
    %225 = vector.shape_cast %224 : vector<16xf32> to vector<16x1xf32>
    %226 = vector.broadcast %225 : vector<16x1xf32> to vector<16x16xf32>
    %227 = arith.subf %223, %226 : vector<16x16xf32>
    %228 = math.exp %227 : vector<16x16xf32>
    %cst_106 = arith.constant dense<0.000000e+00> : vector<16xf32>
    %229 = vector.multi_reduction <add>, %228, %cst_106 [1] : vector<16x16xf32> to vector<16xf32>
    %230 = vector.shape_cast %229 : vector<16xf32> to vector<16x1xf32>
    %231 = tpu.reciprocal %230 {approx = true} : vector<16x1xf32> -> vector<16x1xf32>
    %232 = vector.broadcast %231 : vector<16x1xf32> to vector<16x16xf32>
    %233 = arith.mulf %228, %232 : vector<16x16xf32>
    %234 = arith.truncf %233 : vector<16x16xf32> to vector<16x16xbf16>
    %cst_107 = arith.constant dense<0.000000e+00> : vector<16x32xf32>
    %235 = tpu.matmul %234, %220, %cst_107 {dimension_numbers = #tpu.dot_dimension_numbers<[1], [0], [0], [1], [0, 0, 1, 1], [], []>} : vector<16x16xbf16>, vector<16x32xbf16>, vector<16x32xf32> -> vector<16x32xf32>
    %236 = arith.truncf %235 : vector<16x32xf32> to vector<16x32xbf16>
    %c1_108 = arith.constant 1 : index
    %c0_109 = arith.constant 0 : index
    %c0_110 = arith.constant 0 : index
    %c0_111 = arith.constant 0 : index
    %237 = vector.load %arg6[%c1_108, %c0_109, %c0_110, %c0_111] : memref<2x4x32x128xbf16, #tpu.memory_space<vmem>>, vector<1x1x32x128xbf16>
    %238 = vector.shape_cast %237 : vector<1x1x32x128xbf16> to vector<32x128xbf16>
    %cst_112 = arith.constant dense<0.000000e+00> : vector<16x128xf32>
    %239 = tpu.matmul %236, %238, %cst_112 {dimension_numbers = #tpu.dot_dimension_numbers<[1], [0], [0], [1], [0, 0, 1, 1], [], []>} : vector<16x32xbf16>, vector<32x128xbf16>, vector<16x128xf32> -> vector<16x128xf32>
    %240 = arith.addf %214, %239 : vector<16x128xf32>
    %241 = vector.extract_strided_slice %211 {offsets = [0, 32], sizes = [16, 32], strides = [1, 1]} : vector<16x128xf32> to vector<16x32xf32>
    %242 = arith.truncf %241 : vector<16x32xf32> to vector<16x32xbf16>
    %243 = vector.extract_strided_slice %212 {offsets = [0, 32], sizes = [16, 32], strides = [1, 1]} : vector<16x128xf32> to vector<16x32xf32>
    %244 = arith.truncf %243 : vector<16x32xf32> to vector<16x32xbf16>
    %245 = vector.extract_strided_slice %213 {offsets = [0, 32], sizes = [16, 32], strides = [1, 1]} : vector<16x128xf32> to vector<16x32xf32>
    %246 = arith.truncf %245 : vector<16x32xf32> to vector<16x32xbf16>
    %cst_113 = arith.constant dense<0.000000e+00> : vector<16x16xf32>
    %247 = tpu.matmul %242, %244, %cst_113 {dimension_numbers = #tpu.dot_dimension_numbers<[1], [1], [0], [0], [0, 0, 1, 0], [], []>} : vector<16x32xbf16>, vector<16x32xbf16>, vector<16x16xf32> -> vector<16x16xf32>
    %c0_114 = arith.constant 0 : index
    %c0_115 = arith.constant 0 : index
    %248 = vector.load %arg3[%c0_114, %c0_115] : memref<16x16xf32, #tpu.memory_space<vmem>>, vector<16x16xf32>
    %249 = arith.addf %247, %248 : vector<16x16xf32>
    %cst_116 = arith.constant dense<0xFF800000> : vector<16xf32>
    %250 = vector.multi_reduction <maximumf>, %249, %cst_116 [1] : vector<16x16xf32> to vector<16xf32>
    %251 = vector.shape_cast %250 : vector<16xf32> to vector<16x1xf32>
    %252 = vector.broadcast %251 : vector<16x1xf32> to vector<16x16xf32>
    %253 = arith.subf %249, %252 : vector<16x16xf32>
    %254 = math.exp %253 : vector<16x16xf32>
    %cst_117 = arith.constant dense<0.000000e+00> : vector<16xf32>
    %255 = vector.multi_reduction <add>, %254, %cst_117 [1] : vector<16x16xf32> to vector<16xf32>
    %256 = vector.shape_cast %255 : vector<16xf32> to vector<16x1xf32>
    %257 = tpu.reciprocal %256 {approx = true} : vector<16x1xf32> -> vector<16x1xf32>
    %258 = vector.broadcast %257 : vector<16x1xf32> to vector<16x16xf32>
    %259 = arith.mulf %254, %258 : vector<16x16xf32>
    %260 = arith.truncf %259 : vector<16x16xf32> to vector<16x16xbf16>
    %cst_118 = arith.constant dense<0.000000e+00> : vector<16x32xf32>
    %261 = tpu.matmul %260, %246, %cst_118 {dimension_numbers = #tpu.dot_dimension_numbers<[1], [0], [0], [1], [0, 0, 1, 1], [], []>} : vector<16x16xbf16>, vector<16x32xbf16>, vector<16x32xf32> -> vector<16x32xf32>
    %262 = arith.truncf %261 : vector<16x32xf32> to vector<16x32xbf16>
    %c1_119 = arith.constant 1 : index
    %c1_120 = arith.constant 1 : index
    %c0_121 = arith.constant 0 : index
    %c0_122 = arith.constant 0 : index
    %263 = vector.load %arg6[%c1_119, %c1_120, %c0_121, %c0_122] : memref<2x4x32x128xbf16, #tpu.memory_space<vmem>>, vector<1x1x32x128xbf16>
    %264 = vector.shape_cast %263 : vector<1x1x32x128xbf16> to vector<32x128xbf16>
    %cst_123 = arith.constant dense<0.000000e+00> : vector<16x128xf32>
    %265 = tpu.matmul %262, %264, %cst_123 {dimension_numbers = #tpu.dot_dimension_numbers<[1], [0], [0], [1], [0, 0, 1, 1], [], []>} : vector<16x32xbf16>, vector<32x128xbf16>, vector<16x128xf32> -> vector<16x128xf32>
    %266 = arith.addf %240, %265 : vector<16x128xf32>
    %267 = vector.extract_strided_slice %211 {offsets = [0, 64], sizes = [16, 32], strides = [1, 1]} : vector<16x128xf32> to vector<16x32xf32>
    %268 = arith.truncf %267 : vector<16x32xf32> to vector<16x32xbf16>
    %269 = vector.extract_strided_slice %212 {offsets = [0, 64], sizes = [16, 32], strides = [1, 1]} : vector<16x128xf32> to vector<16x32xf32>
    %270 = arith.truncf %269 : vector<16x32xf32> to vector<16x32xbf16>
    %271 = vector.extract_strided_slice %213 {offsets = [0, 64], sizes = [16, 32], strides = [1, 1]} : vector<16x128xf32> to vector<16x32xf32>
    %272 = arith.truncf %271 : vector<16x32xf32> to vector<16x32xbf16>
    %cst_124 = arith.constant dense<0.000000e+00> : vector<16x16xf32>
    %273 = tpu.matmul %268, %270, %cst_124 {dimension_numbers = #tpu.dot_dimension_numbers<[1], [1], [0], [0], [0, 0, 1, 0], [], []>} : vector<16x32xbf16>, vector<16x32xbf16>, vector<16x16xf32> -> vector<16x16xf32>
    %c0_125 = arith.constant 0 : index
    %c0_126 = arith.constant 0 : index
    %274 = vector.load %arg3[%c0_125, %c0_126] : memref<16x16xf32, #tpu.memory_space<vmem>>, vector<16x16xf32>
    %275 = arith.addf %273, %274 : vector<16x16xf32>
    %cst_127 = arith.constant dense<0xFF800000> : vector<16xf32>
    %276 = vector.multi_reduction <maximumf>, %275, %cst_127 [1] : vector<16x16xf32> to vector<16xf32>
    %277 = vector.shape_cast %276 : vector<16xf32> to vector<16x1xf32>
    %278 = vector.broadcast %277 : vector<16x1xf32> to vector<16x16xf32>
    %279 = arith.subf %275, %278 : vector<16x16xf32>
    %280 = math.exp %279 : vector<16x16xf32>
    %cst_128 = arith.constant dense<0.000000e+00> : vector<16xf32>
    %281 = vector.multi_reduction <add>, %280, %cst_128 [1] : vector<16x16xf32> to vector<16xf32>
    %282 = vector.shape_cast %281 : vector<16xf32> to vector<16x1xf32>
    %283 = tpu.reciprocal %282 {approx = true} : vector<16x1xf32> -> vector<16x1xf32>
    %284 = vector.broadcast %283 : vector<16x1xf32> to vector<16x16xf32>
    %285 = arith.mulf %280, %284 : vector<16x16xf32>
    %286 = arith.truncf %285 : vector<16x16xf32> to vector<16x16xbf16>
    %cst_129 = arith.constant dense<0.000000e+00> : vector<16x32xf32>
    %287 = tpu.matmul %286, %272, %cst_129 {dimension_numbers = #tpu.dot_dimension_numbers<[1], [0], [0], [1], [0, 0, 1, 1], [], []>} : vector<16x16xbf16>, vector<16x32xbf16>, vector<16x32xf32> -> vector<16x32xf32>
    %288 = arith.truncf %287 : vector<16x32xf32> to vector<16x32xbf16>
    %c1_130 = arith.constant 1 : index
    %c2_131 = arith.constant 2 : index
    %c0_132 = arith.constant 0 : index
    %c0_133 = arith.constant 0 : index
    %289 = vector.load %arg6[%c1_130, %c2_131, %c0_132, %c0_133] : memref<2x4x32x128xbf16, #tpu.memory_space<vmem>>, vector<1x1x32x128xbf16>
    %290 = vector.shape_cast %289 : vector<1x1x32x128xbf16> to vector<32x128xbf16>
    %cst_134 = arith.constant dense<0.000000e+00> : vector<16x128xf32>
    %291 = tpu.matmul %288, %290, %cst_134 {dimension_numbers = #tpu.dot_dimension_numbers<[1], [0], [0], [1], [0, 0, 1, 1], [], []>} : vector<16x32xbf16>, vector<32x128xbf16>, vector<16x128xf32> -> vector<16x128xf32>
    %292 = arith.addf %266, %291 : vector<16x128xf32>
    %293 = vector.extract_strided_slice %211 {offsets = [0, 96], sizes = [16, 32], strides = [1, 1]} : vector<16x128xf32> to vector<16x32xf32>
    %294 = arith.truncf %293 : vector<16x32xf32> to vector<16x32xbf16>
    %295 = vector.extract_strided_slice %212 {offsets = [0, 96], sizes = [16, 32], strides = [1, 1]} : vector<16x128xf32> to vector<16x32xf32>
    %296 = arith.truncf %295 : vector<16x32xf32> to vector<16x32xbf16>
    %297 = vector.extract_strided_slice %213 {offsets = [0, 96], sizes = [16, 32], strides = [1, 1]} : vector<16x128xf32> to vector<16x32xf32>
    %298 = arith.truncf %297 : vector<16x32xf32> to vector<16x32xbf16>
    %cst_135 = arith.constant dense<0.000000e+00> : vector<16x16xf32>
    %299 = tpu.matmul %294, %296, %cst_135 {dimension_numbers = #tpu.dot_dimension_numbers<[1], [1], [0], [0], [0, 0, 1, 0], [], []>} : vector<16x32xbf16>, vector<16x32xbf16>, vector<16x16xf32> -> vector<16x16xf32>
    %c0_136 = arith.constant 0 : index
    %c0_137 = arith.constant 0 : index
    %300 = vector.load %arg3[%c0_136, %c0_137] : memref<16x16xf32, #tpu.memory_space<vmem>>, vector<16x16xf32>
    %301 = arith.addf %299, %300 : vector<16x16xf32>
    %cst_138 = arith.constant dense<0xFF800000> : vector<16xf32>
    %302 = vector.multi_reduction <maximumf>, %301, %cst_138 [1] : vector<16x16xf32> to vector<16xf32>
    %303 = vector.shape_cast %302 : vector<16xf32> to vector<16x1xf32>
    %304 = vector.broadcast %303 : vector<16x1xf32> to vector<16x16xf32>
    %305 = arith.subf %301, %304 : vector<16x16xf32>
    %306 = math.exp %305 : vector<16x16xf32>
    %cst_139 = arith.constant dense<0.000000e+00> : vector<16xf32>
    %307 = vector.multi_reduction <add>, %306, %cst_139 [1] : vector<16x16xf32> to vector<16xf32>
    %308 = vector.shape_cast %307 : vector<16xf32> to vector<16x1xf32>
    %309 = tpu.reciprocal %308 {approx = true} : vector<16x1xf32> -> vector<16x1xf32>
    %310 = vector.broadcast %309 : vector<16x1xf32> to vector<16x16xf32>
    %311 = arith.mulf %306, %310 : vector<16x16xf32>
    %312 = arith.truncf %311 : vector<16x16xf32> to vector<16x16xbf16>
    %cst_140 = arith.constant dense<0.000000e+00> : vector<16x32xf32>
    %313 = tpu.matmul %312, %298, %cst_140 {dimension_numbers = #tpu.dot_dimension_numbers<[1], [0], [0], [1], [0, 0, 1, 1], [], []>} : vector<16x16xbf16>, vector<16x32xbf16>, vector<16x32xf32> -> vector<16x32xf32>
    %314 = arith.truncf %313 : vector<16x32xf32> to vector<16x32xbf16>
    %c1_141 = arith.constant 1 : index
    %c3_142 = arith.constant 3 : index
    %c0_143 = arith.constant 0 : index
    %c0_144 = arith.constant 0 : index
    %315 = vector.load %arg6[%c1_141, %c3_142, %c0_143, %c0_144] : memref<2x4x32x128xbf16, #tpu.memory_space<vmem>>, vector<1x1x32x128xbf16>
    %316 = vector.shape_cast %315 : vector<1x1x32x128xbf16> to vector<32x128xbf16>
    %cst_145 = arith.constant dense<0.000000e+00> : vector<16x128xf32>
    %317 = tpu.matmul %314, %316, %cst_145 {dimension_numbers = #tpu.dot_dimension_numbers<[1], [0], [0], [1], [0, 0, 1, 1], [], []>} : vector<16x32xbf16>, vector<32x128xbf16>, vector<16x128xf32> -> vector<16x128xf32>
    %318 = arith.addf %292, %317 : vector<16x128xf32>
    %c1_146 = arith.constant 1 : index
    %c0_147 = arith.constant 0 : index
    %c0_148 = arith.constant 0 : index
    %319 = vector.load %arg7[%c1_146, %c0_147, %c0_148] : memref<2x1x128xf32, #tpu.memory_space<vmem>>, vector<1x1x128xf32>
    %320 = vector.shape_cast %319 : vector<1x1x128xf32> to vector<1x128xf32>
    %321 = vector.broadcast %320 : vector<1x128xf32> to vector<16x128xf32>
    %322 = arith.addf %318, %321 : vector<16x128xf32>
    %323 = arith.addf %202, %322 : vector<16x128xf32>
    %c1_149 = arith.constant 1 : index
    %c0_150 = arith.constant 0 : index
    %c0_151 = arith.constant 0 : index
    %324 = vector.load %arg8[%c1_149, %c0_150, %c0_151] : memref<2x1x128xf32, #tpu.memory_space<vmem>>, vector<1x1x128xf32>
    %325 = vector.shape_cast %324 : vector<1x1x128xf32> to vector<1x128xf32>
    %c1_152 = arith.constant 1 : index
    %c0_153 = arith.constant 0 : index
    %c0_154 = arith.constant 0 : index
    %326 = vector.load %arg9[%c1_152, %c0_153, %c0_154] : memref<2x1x128xf32, #tpu.memory_space<vmem>>, vector<1x1x128xf32>
    %327 = vector.shape_cast %326 : vector<1x1x128xf32> to vector<1x128xf32>
    %cst_155 = arith.constant dense<0.000000e+00> : vector<16xf32>
    %328 = vector.multi_reduction <add>, %323, %cst_155 [1] : vector<16x128xf32> to vector<16xf32>
    %329 = vector.shape_cast %328 : vector<16xf32> to vector<16x1xf32>
    %cst_156 = arith.constant 1.280000e+02 : f32
    %330 = vector.broadcast %cst_156 : f32 to vector<16x1xf32>
    %331 = arith.divf %329, %330 : vector<16x1xf32>
    %332 = vector.broadcast %331 : vector<16x1xf32> to vector<16x128xf32>
    %333 = arith.subf %323, %332 : vector<16x128xf32>
    %334 = arith.mulf %333, %333 : vector<16x128xf32>
    %cst_157 = arith.constant dense<0.000000e+00> : vector<16xf32>
    %335 = vector.multi_reduction <add>, %334, %cst_157 [1] : vector<16x128xf32> to vector<16xf32>
    %336 = vector.shape_cast %335 : vector<16xf32> to vector<16x1xf32>
    %cst_158 = arith.constant 1.280000e+02 : f32
    %337 = vector.broadcast %cst_158 : f32 to vector<16x1xf32>
    %338 = arith.divf %336, %337 : vector<16x1xf32>
    %339 = vector.broadcast %331 : vector<16x1xf32> to vector<16x128xf32>
    %340 = arith.subf %323, %339 : vector<16x128xf32>
    %cst_159 = arith.constant 9.99999974E-6 : f32
    %341 = vector.broadcast %cst_159 : f32 to vector<16x1xf32>
    %342 = arith.addf %338, %341 : vector<16x1xf32>
    %343 = math.rsqrt %342 : vector<16x1xf32>
    %344 = vector.broadcast %343 : vector<16x1xf32> to vector<16x128xf32>
    %345 = arith.mulf %340, %344 : vector<16x128xf32>
    %346 = vector.broadcast %325 : vector<1x128xf32> to vector<16x128xf32>
    %347 = arith.mulf %345, %346 : vector<16x128xf32>
    %348 = vector.broadcast %327 : vector<1x128xf32> to vector<16x128xf32>
    %349 = arith.addf %347, %348 : vector<16x128xf32>
    %350 = arith.truncf %349 : vector<16x128xf32> to vector<16x128xbf16>
    %c1_160 = arith.constant 1 : index
    %c0_161 = arith.constant 0 : index
    %c0_162 = arith.constant 0 : index
    %351 = vector.load %arg10[%c1_160, %c0_161, %c0_162] : memref<2x128x512xbf16, #tpu.memory_space<vmem>>, vector<1x128x512xbf16>
    %352 = vector.shape_cast %351 : vector<1x128x512xbf16> to vector<128x512xbf16>
    %cst_163 = arith.constant dense<0.000000e+00> : vector<16x512xf32>
    %353 = tpu.matmul %350, %352, %cst_163 {dimension_numbers = #tpu.dot_dimension_numbers<[1], [0], [0], [1], [0, 0, 1, 1], [], []>} : vector<16x128xbf16>, vector<128x512xbf16>, vector<16x512xf32> -> vector<16x512xf32>
    %c1_164 = arith.constant 1 : index
    %c0_165 = arith.constant 0 : index
    %c0_166 = arith.constant 0 : index
    %354 = vector.load %arg11[%c1_164, %c0_165, %c0_166] : memref<2x1x512xf32, #tpu.memory_space<vmem>>, vector<1x1x512xf32>
    %355 = vector.shape_cast %354 : vector<1x1x512xf32> to vector<1x512xf32>
    %356 = vector.broadcast %355 : vector<1x512xf32> to vector<16x512xf32>
    %357 = arith.addf %353, %356 : vector<16x512xf32>
    %cst_167 = arith.constant 0.000000e+00 : f32
    %358 = vector.broadcast %cst_167 : f32 to vector<16x512xf32>
    %359 = arith.maximumf %357, %358 : vector<16x512xf32>
    %360 = arith.truncf %359 : vector<16x512xf32> to vector<16x512xbf16>
    %c1_168 = arith.constant 1 : index
    %c0_169 = arith.constant 0 : index
    %c0_170 = arith.constant 0 : index
    %361 = vector.load %arg12[%c1_168, %c0_169, %c0_170] : memref<2x512x128xbf16, #tpu.memory_space<vmem>>, vector<1x512x128xbf16>
    %362 = vector.shape_cast %361 : vector<1x512x128xbf16> to vector<512x128xbf16>
    %cst_171 = arith.constant dense<0.000000e+00> : vector<16x128xf32>
    %363 = tpu.matmul %360, %362, %cst_171 {dimension_numbers = #tpu.dot_dimension_numbers<[1], [0], [0], [1], [0, 0, 1, 1], [], []>} : vector<16x512xbf16>, vector<512x128xbf16>, vector<16x128xf32> -> vector<16x128xf32>
    %c1_172 = arith.constant 1 : index
    %c0_173 = arith.constant 0 : index
    %c0_174 = arith.constant 0 : index
    %364 = vector.load %arg13[%c1_172, %c0_173, %c0_174] : memref<2x1x128xf32, #tpu.memory_space<vmem>>, vector<1x1x128xf32>
    %365 = vector.shape_cast %364 : vector<1x1x128xf32> to vector<1x128xf32>
    %366 = vector.broadcast %365 : vector<1x128xf32> to vector<16x128xf32>
    %367 = arith.addf %363, %366 : vector<16x128xf32>
    %368 = arith.addf %349, %367 : vector<16x128xf32>
    %c1_175 = arith.constant 1 : index
    %c0_176 = arith.constant 0 : index
    %c0_177 = arith.constant 0 : index
    %369 = vector.load %arg14[%c1_175, %c0_176, %c0_177] : memref<2x1x128xf32, #tpu.memory_space<vmem>>, vector<1x1x128xf32>
    %370 = vector.shape_cast %369 : vector<1x1x128xf32> to vector<1x128xf32>
    %c1_178 = arith.constant 1 : index
    %c0_179 = arith.constant 0 : index
    %c0_180 = arith.constant 0 : index
    %371 = vector.load %arg15[%c1_178, %c0_179, %c0_180] : memref<2x1x128xf32, #tpu.memory_space<vmem>>, vector<1x1x128xf32>
    %372 = vector.shape_cast %371 : vector<1x1x128xf32> to vector<1x128xf32>
    %cst_181 = arith.constant dense<0.000000e+00> : vector<16xf32>
    %373 = vector.multi_reduction <add>, %368, %cst_181 [1] : vector<16x128xf32> to vector<16xf32>
    %374 = vector.shape_cast %373 : vector<16xf32> to vector<16x1xf32>
    %cst_182 = arith.constant 1.280000e+02 : f32
    %375 = vector.broadcast %cst_182 : f32 to vector<16x1xf32>
    %376 = arith.divf %374, %375 : vector<16x1xf32>
    %377 = vector.broadcast %376 : vector<16x1xf32> to vector<16x128xf32>
    %378 = arith.subf %368, %377 : vector<16x128xf32>
    %379 = arith.mulf %378, %378 : vector<16x128xf32>
    %cst_183 = arith.constant dense<0.000000e+00> : vector<16xf32>
    %380 = vector.multi_reduction <add>, %379, %cst_183 [1] : vector<16x128xf32> to vector<16xf32>
    %381 = vector.shape_cast %380 : vector<16xf32> to vector<16x1xf32>
    %cst_184 = arith.constant 1.280000e+02 : f32
    %382 = vector.broadcast %cst_184 : f32 to vector<16x1xf32>
    %383 = arith.divf %381, %382 : vector<16x1xf32>
    %384 = vector.broadcast %376 : vector<16x1xf32> to vector<16x128xf32>
    %385 = arith.subf %368, %384 : vector<16x128xf32>
    %cst_185 = arith.constant 9.99999974E-6 : f32
    %386 = vector.broadcast %cst_185 : f32 to vector<16x1xf32>
    %387 = arith.addf %383, %386 : vector<16x1xf32>
    %388 = math.rsqrt %387 : vector<16x1xf32>
    %389 = vector.broadcast %388 : vector<16x1xf32> to vector<16x128xf32>
    %390 = arith.mulf %385, %389 : vector<16x128xf32>
    %391 = vector.broadcast %370 : vector<1x128xf32> to vector<16x128xf32>
    %392 = arith.mulf %390, %391 : vector<16x128xf32>
    %393 = vector.broadcast %372 : vector<1x128xf32> to vector<16x128xf32>
    %394 = arith.addf %392, %393 : vector<16x128xf32>
    %395 = arith.truncf %394 : vector<16x128xf32> to vector<16x128xbf16>
    %c0_186 = arith.constant 0 : index
    %c0_187 = arith.constant 0 : index
    %396 = vector.load %arg16[%c0_186, %c0_187] : memref<128x128xbf16, #tpu.memory_space<vmem>>, vector<128x128xbf16>
    %cst_188 = arith.constant dense<0.000000e+00> : vector<16x128xf32>
    %397 = tpu.matmul %395, %396, %cst_188 {dimension_numbers = #tpu.dot_dimension_numbers<[1], [0], [0], [1], [0, 0, 1, 1], [], []>} : vector<16x128xbf16>, vector<128x128xbf16>, vector<16x128xf32> -> vector<16x128xf32>
    %c0_189 = arith.constant 0 : index
    %c0_190 = arith.constant 0 : index
    %398 = vector.load %arg17[%c0_189, %c0_190] : memref<1x128xf32, #tpu.memory_space<vmem>>, vector<1x128xf32>
    %399 = vector.broadcast %398 : vector<1x128xf32> to vector<16x128xf32>
    %400 = arith.addf %397, %399 : vector<16x128xf32>
    %c0_191 = arith.constant 0 : index
    %c0_192 = arith.constant 0 : index
    %401 = vector.load %arg18[%c0_191, %c0_192] : memref<16x128xf32, #tpu.memory_space<vmem>>, vector<16x128xf32>
    tpu.vector_store %arg18[%c0_191, %c0_192], %400 {strides = array<i32>} : memref<16x128xf32, #tpu.memory_space<vmem>>, vector<16x128xf32>,
    return
  }
}

</mosaic_0001>

<llo_original>
// kernel: small_transformer_forward.1
$region0: #{small_transformer_forward.1}
  #allocation0 [shape = 'u32[]', space=smem, size = 0x4, offset = 0x4, fixed_abs, tag = 'smem constant byte address 0x4 - core index']
  #allocation1 [shape = 'u32[144,128]{1,0:T(1,128)}', space=vmem, size = 0x12000, scoped, tag = 'internal scratch']
  %s0 = inlined_call_operand.vmem [shape: s32[16,1], index: 0, kind: input, shape index: {}]
  %s1 = inlined_call_operand.vmem [shape: bf16[64,128], index: 1, kind: input, shape index: {}]
  %s2 = inlined_call_operand.vmem [shape: f32[16,128], index: 2, kind: input, shape index: {}]
  %s3 = inlined_call_operand.hbm [shape: f32[16,16], index: 3, kind: input, shape index: {}]
  %s4 = inlined_call_operand.hbm [shape: bf16[2,128,384], index: 4, kind: input, shape index: {}]
  %s5 = inlined_call_operand.hbm [shape: f32[2,1,384], index: 5, kind: input, shape index: {}]
  %s6 = inlined_call_operand.hbm [shape: bf16[2,4,32,128], index: 6, kind: input, shape index: {}]
  %s7 = inlined_call_operand.hbm [shape: f32[2,1,128], index: 7, kind: input, shape index: {}]
  %s8 = inlined_call_operand.vmem [shape: f32[2,1,128], index: 8, kind: input, shape index: {}]
  %s9 = inlined_call_operand.hbm [shape: f32[2,1,128], index: 9, kind: input, shape index: {}]
  %s10 = inlined_call_operand.hbm [shape: bf16[2,128,512], index: 10, kind: input, shape index: {}]
  %s11 = inlined_call_operand.hbm [shape: f32[2,1,512], index: 11, kind: input, shape index: {}]
  %s12 = inlined_call_operand.hbm [shape: bf16[2,512,128], index: 12, kind: input, shape index: {}]
  %s13 = inlined_call_operand.hbm [shape: f32[2,1,128], index: 13, kind: input, shape index: {}]
  %s14 = inlined_call_operand.vmem [shape: f32[2,1,128], index: 14, kind: input, shape index: {}]
  %s15 = inlined_call_operand.vmem [shape: f32[2,1,128], index: 15, kind: input, shape index: {}]
  %s16 = inlined_call_operand.hbm [shape: bf16[128,128], index: 16, kind: input, shape index: {}]
  %s17 = inlined_call_operand.hbm [shape: f32[1,128], index: 17, kind: input, shape index: {}]
  %s18 = inlined_call_operand.vmem [shape: f32[16,128], index: 18, kind: output, shape index: {}]
  %s19 = sld [smem:[#allocation0]]
  $region130: #{small_transformer_forward.1} parent=0
    _
  %s21 = ssub.s32 1, %s19
  %s22 = scalar_select 0, %s21, %s19
  $region1: #{small_transformer_forward.1} parent=0
    #allocation2 [shape = 'u8[8192]{0}', space=vmem, size = 0x2000, scoped, tag = 'input window, operand 3, single buffered']
    #allocation3 [shape = 's32[1]{0}', space=sflag, size = 0x4, scoped, tag = 'scoped memory for small_transformer_forward.1']
    #allocation4 [shape = 'u8[196608]{0}', space=vmem, size = 0x30000, scoped, tag = 'input window, operand 4, single buffered']
    #allocation5 [shape = 's32[1]{0}', space=sflag, size = 0x4, scoped, tag = 'scoped memory for small_transformer_forward.1']
    #allocation6 [shape = 'u8[3072]{0}', space=vmem, size = 0xc00, scoped, tag = 'input window, operand 5, single buffered']
    #allocation7 [shape = 'u8[65536]{0}', space=vmem, size = 0x10000, scoped, tag = 'input window, operand 6, single buffered']
    #allocation8 [shape = 's32[1]{0}', space=sflag, size = 0x4, scoped, tag = 'scoped memory for small_transformer_forward.1']
    #allocation9 [shape = 'u8[1024]{0}', space=vmem, size = 0x400, scoped, tag = 'input window, operand 7, single buffered']
    #allocation10 [shape = 'u8[1024]{0}', space=vmem, size = 0x400, scoped, tag = 'input window, operand 9, single buffered']
    #allocation11 [shape = 's32[1]{0}', space=sflag, size = 0x4, scoped, tag = 'scoped memory for small_transformer_forward.1']
    #allocation12 [shape = 'u8[262144]{0}', space=vmem, size = 0x40000, scoped, tag = 'input window, operand 10, single buffered']
    #allocation13 [shape = 'u8[4096]{0}', space=vmem, size = 0x1000, scoped, tag = 'input window, operand 11, single buffered']
    #allocation14 [shape = 's32[1]{0}', space=sflag, size = 0x4, scoped, tag = 'scoped memory for small_transformer_forward.1']
    #allocation15 [shape = 'u8[262144]{0}', space=vmem, size = 0x40000, scoped, tag = 'input window, operand 12, single buffered']
    #allocation16 [shape = 'u8[1024]{0}', space=vmem, size = 0x400, scoped, tag = 'input window, operand 13, single buffered']
    #allocation17 [shape = 's32[1]{0}', space=sflag, size = 0x4, scoped, tag = 'scoped memory for small_transformer_forward.1']
    #allocation18 [shape = 'u8[32768]{0}', space=vmem, size = 0x8000, scoped, tag = 'input window, operand 16, single buffered']
    #allocation19 [shape = 'u8[512]{0}', space=vmem, size = 0x400, scoped, tag = 'input window, operand 17, single buffered']
    #allocation20 [shape = 's32[1]{0}', space=sflag, size = 0x4, scoped, tag = 'scoped memory for small_transformer_forward.1']
    %23 = vsyncpa [#allocation3], 0
    %24 = vsyncpa [#allocation5], 0
    %25 = vsyncpa [#allocation8], 0
    %26 = vsyncpa [#allocation11], 0
    %27 = vsyncpa [#allocation14], 0
    %28 = vsyncpa [#allocation17], 0
    %29 = vsyncpa [#allocation20], 0
    // Predicated region
    $region2: #{small_transformer_forward.1} parent=1 // pred_check
      _
    $region3: #{small_transformer_forward.1} parent=1 // pred_check_branch
      %31 = sbr.rel (0) target = $region5
    $region4: #{small_transformer_forward.1} parent=1 // pred_region
      _
    $region5: #{small_transformer_forward.1} parent=1 // pred_fallthru
      _
    // Predicated region
    $region6: #{small_transformer_forward.1} parent=1 // pred_check
      _
    $region7: #{small_transformer_forward.1} parent=1 // pred_check_branch
      %33 = sbr.rel (0) target = $region9
    $region8: #{small_transformer_forward.1} parent=1 // pred_region
      _
    $region9: #{small_transformer_forward.1} parent=1 // pred_fallthru
      _
    // Predicated region
    $region10: #{small_transformer_forward.1} parent=1 // pred_check
      _
    $region11: #{small_transformer_forward.1} parent=1 // pred_check_branch
      %35 = sbr.rel (0) target = $region13
    $region12: #{small_transformer_forward.1} parent=1 // pred_region
      _
    $region13: #{small_transformer_forward.1} parent=1 // pred_fallthru
      _
    // Predicated region
    $region14: #{small_transformer_forward.1} parent=1 // pred_check
      _
    $region15: #{small_transformer_forward.1} parent=1 // pred_check_branch
      %37 = sbr.rel (0) target = $region17
    $region16: #{small_transformer_forward.1} parent=1 // pred_region
      %s39 = ssub.s32 256, 256
      %40 = vsyncadd [#allocation3], %s39
      %s41 = sshll.u32 [#allocation2], 4
      %s42 = int_to_ptr.vmem [resolvable:$true] %s41
      %47 = dma.hbm_to_vmem [thread:$0]  %s3, 256, %s42, [#allocation3], 128, 128, 8
    $region17: #{small_transformer_forward.1} parent=1 // pred_fallthru
      _
    // Predicated region
    $region18: #{small_transformer_forward.1} parent=1 // pred_check
      _
    $region19: #{small_transformer_forward.1} parent=1 // pred_check_branch
      %49 = sbr.rel (0) target = $region21
    $region20: #{small_transformer_forward.1} parent=1 // pred_region
      %s51 = ssub.s32 6144, 6144
      %52 = vsyncadd [#allocation5], %s51
      %s53 = sshll.u32 [#allocation4], 4
      %s54 = int_to_ptr.vmem [resolvable:$true] %s53
      %59 = dma.hbm_to_vmem [thread:$0]  %s4, 6144, %s54, [#allocation5], 192, 192, 12
    $region21: #{small_transformer_forward.1} parent=1 // pred_fallthru
      _
    // Predicated region
    $region22: #{small_transformer_forward.1} parent=1 // pred_check
      _
    $region23: #{small_transformer_forward.1} parent=1 // pred_check_branch
      %61 = sbr.rel (0) target = $region25
    $region24: #{small_transformer_forward.1} parent=1 // pred_region
      %s63 = ssub.s32 96, 96
      %64 = vsyncadd [#allocation5], %s63
      %s65 = sshll.u32 [#allocation6], 4
      %s66 = int_to_ptr.vmem [resolvable:$true] %s65
      %71 = dma.hbm_to_vmem [thread:$0]  %s5, 96, %s66, [#allocation5], 48, 48, 3
    $region25: #{small_transformer_forward.1} parent=1 // pred_fallthru
      _
    // Predicated region
    $region26: #{small_transformer_forward.1} parent=1 // pred_check
      _
    $region27: #{small_transformer_forward.1} parent=1 // pred_check_branch
      %73 = sbr.rel (0) target = $region29
    $region28: #{small_transformer_forward.1} parent=1 // pred_region
      %s75 = ssub.s32 2048, 2048
      %76 = vsyncadd [#allocation8], %s75
      %s77 = sshll.u32 [#allocation7], 4
      %s78 = int_to_ptr.vmem [resolvable:$true] %s77
      %83 = dma.hbm_to_vmem [thread:$0]  %s6, 2048, %s78, [#allocation8], 64, 64, 4
    $region29: #{small_transformer_forward.1} parent=1 // pred_fallthru
      _
    // Predicated region
    $region30: #{small_transformer_forward.1} parent=1 // pred_check
      _
    $region31: #{small_transformer_forward.1} parent=1 // pred_check_branch
      %85 = sbr.rel (0) target = $region33
    $region32: #{small_transformer_forward.1} parent=1 // pred_region
      %s87 = ssub.s32 32, 32
      %88 = vsyncadd [#allocation8], %s87
      %s89 = sshll.u32 [#allocation9], 4
      %s90 = int_to_ptr.vmem [resolvable:$true] %s89
      %95 = dma.hbm_to_vmem [thread:$0]  %s7, 32, %s90, [#allocation8], 16, 16, 1
    $region33: #{small_transformer_forward.1} parent=1 // pred_fallthru
      _
    // Predicated region
    $region34: #{small_transformer_forward.1} parent=1 // pred_check
      _
    $region35: #{small_transformer_forward.1} parent=1 // pred_check_branch
      %97 = sbr.rel (0) target = $region37
    $region36: #{small_transformer_forward.1} parent=1 // pred_region
      _
    $region37: #{small_transformer_forward.1} parent=1 // pred_fallthru
      _
    // Predicated region
    $region38: #{small_transformer_forward.1} parent=1 // pred_check
      _
    $region39: #{small_transformer_forward.1} parent=1 // pred_check_branch
      %99 = sbr.rel (0) target = $region41
    $region40: #{small_transformer_forward.1} parent=1 // pred_region
      %s101 = ssub.s32 32, 32
      %102 = vsyncadd [#allocation11], %s101
      %s103 = sshll.u32 [#allocation10], 4
      %s104 = int_to_ptr.vmem [resolvable:$true] %s103
      %109 = dma.hbm_to_vmem [thread:$0]  %s9, 32, %s104, [#allocation11], 16, 16, 1
    $region41: #{small_transformer_forward.1} parent=1 // pred_fallthru
      _
    // Predicated region
    $region42: #{small_transformer_forward.1} parent=1 // pred_check
      _
    $region43: #{small_transformer_forward.1} parent=1 // pred_check_branch
      %111 = sbr.rel (0) target = $region45
    $region44: #{small_transformer_forward.1} parent=1 // pred_region
      %s113 = ssub.s32 8192, 8192
      %114 = vsyncadd [#allocation11], %s113
      %s115 = sshll.u32 [#allocation12], 4
      %s116 = int_to_ptr.vmem [resolvable:$true] %s115
      %121 = dma.hbm_to_vmem [thread:$0]  %s10, 8192, %s116, [#allocation11], 256, 256, 16
    $region45: #{small_transformer_forward.1} parent=1 // pred_fallthru
      _
    // Predicated region
    $region46: #{small_transformer_forward.1} parent=1 // pred_check
      _
    $region47: #{small_transformer_forward.1} parent=1 // pred_check_branch
      %123 = sbr.rel (0) target = $region49
    $region48: #{small_transformer_forward.1} parent=1 // pred_region
      %s125 = ssub.s32 128, 128
      %126 = vsyncadd [#allocation14], %s125
      %s127 = sshll.u32 [#allocation13], 4
      %s128 = int_to_ptr.vmem [resolvable:$true] %s127
      %133 = dma.hbm_to_vmem [thread:$0]  %s11, 128, %s128, [#allocation14], 64, 64, 4
    $region49: #{small_transformer_forward.1} parent=1 // pred_fallthru
      _
    // Predicated region
    $region50: #{small_transformer_forward.1} parent=1 // pred_check
      _
    $region51: #{small_transformer_forward.1} parent=1 // pred_check_branch
      %135 = sbr.rel (0) target = $region53
    $region52: #{small_transformer_forward.1} parent=1 // pred_region
      %s137 = ssub.s32 8192, 8192
      %138 = vsyncadd [#allocation14], %s137
      %s139 = sshll.u32 [#allocation15], 4
      %s140 = int_to_ptr.vmem [resolvable:$true] %s139
      %145 = dma.hbm_to_vmem [thread:$0]  %s12, 8192, %s140, [#allocation14], 64, 64, 4
    $region53: #{small_transformer_forward.1} parent=1 // pred_fallthru
      _
    // Predicated region
    $region54: #{small_transformer_forward.1} parent=1 // pred_check
      _
    $region55: #{small_transformer_forward.1} parent=1 // pred_check_branch
      %147 = sbr.rel (0) target = $region57
    $region56: #{small_transformer_forward.1} parent=1 // pred_region
      %s149 = ssub.s32 32, 32
      %150 = vsyncadd [#allocation17], %s149
      %s151 = sshll.u32 [#allocation16], 4
      %s152 = int_to_ptr.vmem [resolvable:$true] %s151
      %157 = dma.hbm_to_vmem [thread:$0]  %s13, 32, %s152, [#allocation17], 16, 16, 1
    $region57: #{small_transformer_forward.1} parent=1 // pred_fallthru
      _
    // Predicated region
    $region58: #{small_transformer_forward.1} parent=1 // pred_check
      _
    $region59: #{small_transformer_forward.1} parent=1 // pred_check_branch
      %159 = sbr.rel (0) target = $region61
    $region60: #{small_transformer_forward.1} parent=1 // pred_region
      _
    $region61: #{small_transformer_forward.1} parent=1 // pred_fallthru
      _
    // Predicated region
    $region62: #{small_transformer_forward.1} parent=1 // pred_check
      _
    $region63: #{small_transformer_forward.1} parent=1 // pred_check_branch
      %161 = sbr.rel (0) target = $region65
    $region64: #{small_transformer_forward.1} parent=1 // pred_region
      _
    $region65: #{small_transformer_forward.1} parent=1 // pred_fallthru
      _
    // Predicated region
    $region66: #{small_transformer_forward.1} parent=1 // pred_check
      _
    $region67: #{small_transformer_forward.1} parent=1 // pred_check_branch
      %163 = sbr.rel (0) target = $region69
    $region68: #{small_transformer_forward.1} parent=1 // pred_region
      %s165 = ssub.s32 1024, 1024
      %166 = vsyncadd [#allocation17], %s165
      %s167 = sshll.u32 [#allocation18], 4
      %s168 = int_to_ptr.vmem [resolvable:$true] %s167
      %173 = dma.hbm_to_vmem [thread:$0]  %s16, 1024, %s168, [#allocation17], 64, 64, 4
    $region69: #{small_transformer_forward.1} parent=1 // pred_fallthru
      _
    // Predicated region
    $region70: #{small_transformer_forward.1} parent=1 // pred_check
      _
    $region71: #{small_transformer_forward.1} parent=1 // pred_check_branch
      %175 = sbr.rel (0) target = $region73
    $region72: #{small_transformer_forward.1} parent=1 // pred_region
      %s177 = ssub.s32 16, 16
      %178 = vsyncadd [#allocation20], %s177
      %s180 = sshll.u32 [#allocation19], 4
      %s181 = int_to_ptr.vmem [resolvable:$true] %s180
      %183 = dma.hbm_to_vmem [thread:$0]  %s17, 16, %s181, [#allocation20]
    $region73: #{small_transformer_forward.1} parent=1 // pred_fallthru
      _
    // Predicated region
    $region74: #{small_transformer_forward.1} parent=1 // pred_check
      _
    $region75: #{small_transformer_forward.1} parent=1 // pred_check_branch
      %185 = sbr.rel (0) target = $region77
    $region76: #{small_transformer_forward.1} parent=1 // pred_region
      %186 = dma.done [#allocation3], 256
    $region77: #{small_transformer_forward.1} parent=1 // pred_fallthru
      _
    // Predicated region
    $region78: #{small_transformer_forward.1} parent=1 // pred_check
      _
    $region79: #{small_transformer_forward.1} parent=1 // pred_check_branch
      %188 = sbr.rel (0) target = $region81
    $region80: #{small_transformer_forward.1} parent=1 // pred_region
      %189 = dma.done [#allocation5], 6144
    $region81: #{small_transformer_forward.1} parent=1 // pred_fallthru
      _
    // Predicated region
    $region82: #{small_transformer_forward.1} parent=1 // pred_check
      _
    $region83: #{small_transformer_forward.1} parent=1 // pred_check_branch
      %191 = sbr.rel (0) target = $region85
    $region84: #{small_transformer_forward.1} parent=1 // pred_region
      %192 = dma.done [#allocation5], 96
    $region85: #{small_transformer_forward.1} parent=1 // pred_fallthru
      _
    // Predicated region
    $region86: #{small_transformer_forward.1} parent=1 // pred_check
      _
    $region87: #{small_transformer_forward.1} parent=1 // pred_check_branch
      %194 = sbr.rel (0) target = $region89
    $region88: #{small_transformer_forward.1} parent=1 // pred_region
      %195 = dma.done [#allocation8], 2048
    $region89: #{small_transformer_forward.1} parent=1 // pred_fallthru
      _
    // Predicated region
    $region90: #{small_transformer_forward.1} parent=1 // pred_check
      _
    $region91: #{small_transformer_forward.1} parent=1 // pred_check_branch
      %197 = sbr.rel (0) target = $region93
    $region92: #{small_transformer_forward.1} parent=1 // pred_region
      %198 = dma.done [#allocation8], 32
    $region93: #{small_transformer_forward.1} parent=1 // pred_fallthru
      _
    // Predicated region
    $region94: #{small_transformer_forward.1} parent=1 // pred_check
      _
    $region95: #{small_transformer_forward.1} parent=1 // pred_check_branch
      %200 = sbr.rel (0) target = $region97
    $region96: #{small_transformer_forward.1} parent=1 // pred_region
      %201 = dma.done [#allocation11], 32
    $region97: #{small_transformer_forward.1} parent=1 // pred_fallthru
      _
    // Predicated region
    $region98: #{small_transformer_forward.1} parent=1 // pred_check
      _
    $region99: #{small_transformer_forward.1} parent=1 // pred_check_branch
      %203 = sbr.rel (0) target = $region101
    $region100: #{small_transformer_forward.1} parent=1 // pred_region
      %204 = dma.done [#allocation11], 8192
    $region101: #{small_transformer_forward.1} parent=1 // pred_fallthru
      _
    // Predicated region
    $region102: #{small_transformer_forward.1} parent=1 // pred_check
      _
    $region103: #{small_transformer_forward.1} parent=1 // pred_check_branch
      %206 = sbr.rel (0) target = $region105
    $region104: #{small_transformer_forward.1} parent=1 // pred_region
      %207 = dma.done [#allocation14], 128
    $region105: #{small_transformer_forward.1} parent=1 // pred_fallthru
      _
    // Predicated region
    $region106: #{small_transformer_forward.1} parent=1 // pred_check
      _
    $region107: #{small_transformer_forward.1} parent=1 // pred_check_branch
      %209 = sbr.rel (0) target = $region109
    $region108: #{small_transformer_forward.1} parent=1 // pred_region
      %210 = dma.done [#allocation14], 8192
    $region109: #{small_transformer_forward.1} parent=1 // pred_fallthru
      _
    // Predicated region
    $region110: #{small_transformer_forward.1} parent=1 // pred_check
      _
    $region111: #{small_transformer_forward.1} parent=1 // pred_check_branch
      %212 = sbr.rel (0) target = $region113
    $region112: #{small_transformer_forward.1} parent=1 // pred_region
      %213 = dma.done [#allocation17], 32
    $region113: #{small_transformer_forward.1} parent=1 // pred_fallthru
      _
    // Predicated region
    $region114: #{small_transformer_forward.1} parent=1 // pred_check
      _
    $region115: #{small_transformer_forward.1} parent=1 // pred_check_branch
      %215 = sbr.rel (0) target = $region117
    $region116: #{small_transformer_forward.1} parent=1 // pred_region
      %216 = dma.done [#allocation17], 1024
    $region117: #{small_transformer_forward.1} parent=1 // pred_fallthru
      _
    // Predicated region
    $region118: #{small_transformer_forward.1} parent=1 // pred_check
      _
    $region119: #{small_transformer_forward.1} parent=1 // pred_check_branch
      %218 = sbr.rel (0) target = $region121
    $region120: #{small_transformer_forward.1} parent=1 // pred_region
      %219 = dma.done [#allocation20], 16
    $region121: #{small_transformer_forward.1} parent=1 // pred_fallthru
      _
    %v221 = vlaneseq
    %v222 = vand.u32 %v221, 127
    %v223 = vld [vmem:[%s0] sm:$0xff]
    %v224 = vld [vmem:[%s0 + $0x8] sm:$0xff]
    %225 = vset.pattern.permute.xlu0 0
    %226 = vperm.xlu0 %225, %v223
    %v227 = vpop.permute.xlu0 %226
    %228 = vset.pattern.permute.xlu0 0
    %229 = vperm.xlu0 %228, %v224
    %v230 = vpop.permute.xlu0 %229
    %vm231 = vcmp.eq.s32.totalorder %v222, %v227
    %vm232 = vcmp.eq.s32.totalorder %v222, %v230
    %v233 = vsel %vm231, 1, 0
    %v234 = vsel %vm232, 1, 0
    %v235 = vcvt.s32.f32 %v233
    %v236 = vcvt.s32.f32 %v234
    %v237 = vpack.c.bf16 %v236, %v235
    %v238 = vld [vmem:[%s1] sm:$0xf]
    %v239 = vld [vmem:[%s1 + $0x4] sm:$0xf]
    %v240 = vld [vmem:[%s1 + $0x8] sm:$0xf]
    %v241 = vld [vmem:[%s1 + $0xc] sm:$0xf]
    %v242 = vld [vmem:[%s1 + $0x10] sm:$0xf]
    %v243 = vld [vmem:[%s1 + $0x14] sm:$0xf]
    %v244 = vld [vmem:[%s1 + $0x18] sm:$0xf]
    %v245 = vld [vmem:[%s1 + $0x1c] sm:$0xf]
    %v246 = vld [vmem:[%s2] sm:$0xff]
    %v247 = vld [vmem:[%s2 + $0x8] sm:$0xff]
    %v256 = vunpack.c.l.b16 %v238
    %v257 = vunpack.c.l.b16 %v239
    %v258 = vunpack.c.l.b16 %v240
    %v259 = vunpack.c.l.b16 %v241
    %v260 = vunpack.c.l.b16 %v242
    %v261 = vunpack.c.l.b16 %v243
    %v262 = vunpack.c.l.b16 %v244
    %v263 = vunpack.c.l.b16 %v245
    %v264 = vpack.c.b16 %v257, %v256
    %v265 = vpack.c.b16 %v259, %v258
    %v266 = vpack.c.b16 %v261, %v260
    %v267 = vpack.c.b16 %v263, %v262
    %vm272 = vcmask 523264
    %v274 = vsel %vm272, %v237, 0
    %276 = vmatprep.subr.bf16.mxu0 0
    %277 = vmatpush1.bf16.msra.mxu0 %v264
    %278 = vmatprep.subr.bf16.mxu0 0
    %279 = vmatpush1.bf16.msra.mxu0 %v265
    %280 = vmatprep.subr.bf16.mxu0 0
    %281 = vmatpush1.bf16.msra.mxu0 %v266
    %282 = vmatprep.subr.bf16.mxu0 0
    %283 = vmatpush1.bf16.msra.mxu0 %v267
    %284 = vmatprep.subr.bf16.mxu0 0
    %285 = vmatpush1.bf16.msra.mxu0 0
    %286 = vmatprep.subr.bf16.mxu0 0
    %287 = vmatpush1.bf16.msra.mxu0 0
    %288 = vmatprep.subr.bf16.mxu0 0
    %289 = vmatpush1.bf16.msra.mxu0 0
    %290 = vmatprep.subr.bf16.mxu0 0
    %291 = vmatpush1.bf16.msra.mxu0 0
    %292 = vmatprep.subr.bf16.mxu0 0
    %293 = vmatpush1.bf16.msra.mxu0 0
    %294 = vmatprep.subr.bf16.mxu0 0
    %295 = vmatpush1.bf16.msra.mxu0 0
    %296 = vmatprep.subr.bf16.mxu0 0
    %297 = vmatpush1.bf16.msra.mxu0 0
    %298 = vmatprep.subr.bf16.mxu0 0
    %299 = vmatpush1.bf16.msra.mxu0 0
    %300 = vmatprep.subr.bf16.mxu0 0
    %301 = vmatpush1.bf16.msra.mxu0 0
    %302 = vmatprep.subr.bf16.mxu0 0
    %303 = vmatpush1.bf16.msra.mxu0 0
    %304 = vmatprep.subr.bf16.mxu0 0
    %305 = vmatpush1.bf16.msra.mxu0 0
    %306 = vmatprep.subr.bf16.mxu0 0
    %307 = vmatpush1.bf16.msra.mxu0 0
    %308 = vmatprep.mubr.bf16.mxu0 0
    %309 = vmatmul.mubr.bf16.gmra.mrb[0].mxu0 %v274
    %v310 = vpop.f32.mrb[0].mxu0
    %v311 = vadd.f32 %v246, %v310
    %v312 = vpop.f32.mrb[0].mxu0
    %v313 = vpop.f32.mrb[0].mxu0
    %v314 = vadd.f32 %v247, %v313
    %v315 = vpop.f32.mrb[0].mxu0
    %316 = vdwg.mxu0
    %v317 = vpack.c.bf16 %v314, %v311
    %v318 = vld [vmem:[#allocation4] sm:$0xff]
    %v319 = vld [vmem:[#allocation4 + $0x8] sm:$0xf]
    %v320 = vld [vmem:[#allocation4 + $0xc] sm:$0xff]
    %v321 = vld [vmem:[#allocation4 + $0x14] sm:$0xf]
    %v322 = vld [vmem:[#allocation4 + $0x18] sm:$0xff]
    %v323 = vld [vmem:[#allocation4 + $0x20] sm:$0xf]
    %v324 = vld [vmem:[#allocation4 + $0x24] sm:$0xff]
    %v325 = vld [vmem:[#allocation4 + $0x2c] sm:$0xf]
    %v326 = vld [vmem:[#allocation4 + $0x30] sm:$0xff]
    %v327 = vld [vmem:[#allocation4 + $0x38] sm:$0xf]
    %v328 = vld [vmem:[#allocation4 + $0x3c] sm:$0xff]
    %v329 = vld [vmem:[#allocation4 + $0x44] sm:$0xf]
    %v330 = vld [vmem:[#allocation4 + $0x48] sm:$0xff]
    %v331 = vld [vmem:[#allocation4 + $0x50] sm:$0xf]
    %v332 = vld [vmem:[#allocation4 + $0x54] sm:$0xff]
    %v333 = vld [vmem:[#allocation4 + $0x5c] sm:$0xf]
    %v334 = vld [vmem:[#allocation4 + $0x60] sm:$0xff]
    %v335 = vld [vmem:[#allocation4 + $0x68] sm:$0xf]
    %v336 = vld [vmem:[#allocation4 + $0x6c] sm:$0xff]
    %v337 = vld [vmem:[#allocation4 + $0x74] sm:$0xf]
    %v338 = vld [vmem:[#allocation4 + $0x78] sm:$0xff]
    %v339 = vld [vmem:[#allocation4 + $0x80] sm:$0xf]
    %v340 = vld [vmem:[#allocation4 + $0x84] sm:$0xff]
    %v341 = vld [vmem:[#allocation4 + $0x8c] sm:$0xf]
    %v342 = vld [vmem:[#allocation4 + $0x90] sm:$0xff]
    %v343 = vld [vmem:[#allocation4 + $0x98] sm:$0xf]
    %v344 = vld [vmem:[#allocation4 + $0x9c] sm:$0xff]
    %v345 = vld [vmem:[#allocation4 + $0xa4] sm:$0xf]
    %v346 = vld [vmem:[#allocation4 + $0xa8] sm:$0xff]
    %v347 = vld [vmem:[#allocation4 + $0xb0] sm:$0xf]
    %v348 = vld [vmem:[#allocation4 + $0xb4] sm:$0xff]
    %v349 = vld [vmem:[#allocation4 + $0xbc] sm:$0xf]
    %v350 = vld [vmem:[#allocation6] sm:$0x7]
    %v352 = vlaneseq
    %v353 = vshrl.u32 %v352, 7
    %v354 = vsub.s32 0, %v353
    %v355 = vrot.slane %v350, %v354
    %v356 = vlaneseq
    %v357 = vshrl.u32 %v356, 7
    %v358 = vsub.s32 1, %v357
    %v359 = vrot.slane %v350, %v358
    %v360 = vlaneseq
    %v361 = vshrl.u32 %v360, 7
    %v362 = vsub.s32 2, %v361
    %v363 = vrot.slane %v350, %v362
    %v399 = vunpack.c.l.b16 %v318
    %v400 = vunpack.c.h.b16 %v318
    %v401 = vunpack.c.l.b16 %v319
    %v402 = vunpack.c.l.b16 %v320
    %v403 = vunpack.c.h.b16 %v320
    %v404 = vunpack.c.l.b16 %v321
    %v405 = vunpack.c.l.b16 %v322
    %v406 = vunpack.c.h.b16 %v322
    %v407 = vunpack.c.l.b16 %v323
    %v408 = vunpack.c.l.b16 %v324
    %v409 = vunpack.c.h.b16 %v324
    %v410 = vunpack.c.l.b16 %v325
    %v411 = vunpack.c.l.b16 %v326
    %v412 = vunpack.c.h.b16 %v326
    %v413 = vunpack.c.l.b16 %v327
    %v414 = vunpack.c.l.b16 %v328
    %v415 = vunpack.c.h.b16 %v328
    %v416 = vunpack.c.l.b16 %v329
    %v417 = vunpack.c.l.b16 %v330
    %v418 = vunpack.c.h.b16 %v330
    %v419 = vunpack.c.l.b16 %v331
    %v420 = vunpack.c.l.b16 %v332
    %v421 = vunpack.c.h.b16 %v332
    %v422 = vunpack.c.l.b16 %v333
    %v423 = vunpack.c.l.b16 %v334
    %v424 = vunpack.c.h.b16 %v334
    %v425 = vunpack.c.l.b16 %v335
    %v426 = vunpack.c.l.b16 %v336
    %v427 = vunpack.c.h.b16 %v336
    %v428 = vunpack.c.l.b16 %v337
    %v429 = vunpack.c.l.b16 %v338
    %v430 = vunpack.c.h.b16 %v338
    %v431 = vunpack.c.l.b16 %v339
    %v432 = vunpack.c.l.b16 %v340
    %v433 = vunpack.c.h.b16 %v340
    %v434 = vunpack.c.l.b16 %v341
    %v435 = vunpack.c.l.b16 %v342
    %v436 = vunpack.c.h.b16 %v342
    %v437 = vunpack.c.l.b16 %v343
    %v438 = vunpack.c.l.b16 %v344
    %v439 = vunpack.c.h.b16 %v344
    %v440 = vunpack.c.l.b16 %v345
    %v441 = vunpack.c.l.b16 %v346
    %v442 = vunpack.c.h.b16 %v346
    %v443 = vunpack.c.l.b16 %v347
    %v444 = vunpack.c.l.b16 %v348
    %v445 = vunpack.c.h.b16 %v348
    %v446 = vunpack.c.l.b16 %v349
    %v447 = vpack.c.b16 %v402, %v399
    %v448 = vpack.c.b16 %v403, %v400
    %v449 = vpack.c.b16 %v404, %v401
    %v450 = vpack.c.b16 %v408, %v405
    %v451 = vpack.c.b16 %v409, %v406
    %v452 = vpack.c.b16 %v410, %v407
    %v453 = vpack.c.b16 %v414, %v411
    %v454 = vpack.c.b16 %v415, %v412
    %v455 = vpack.c.b16 %v416, %v413
    %v456 = vpack.c.b16 %v420, %v417
    %v457 = vpack.c.b16 %v421, %v418
    %v458 = vpack.c.b16 %v422, %v419
    %v459 = vpack.c.b16 %v426, %v423
    %v460 = vpack.c.b16 %v427, %v424
    %v461 = vpack.c.b16 %v428, %v425
    %v462 = vpack.c.b16 %v432, %v429
    %v463 = vpack.c.b16 %v433, %v430
    %v464 = vpack.c.b16 %v434, %v431
    %v465 = vpack.c.b16 %v438, %v435
    %v466 = vpack.c.b16 %v439, %v436
    %v467 = vpack.c.b16 %v440, %v437
    %v468 = vpack.c.b16 %v444, %v441
    %v469 = vpack.c.b16 %v445, %v442
    %v470 = vpack.c.b16 %v446, %v443
    %495 = vmatprep.subr.bf16.mxu0 %v448
    %496 = vmatpush1.bf16.msra.mxu0 %v447
    %497 = vmatprep.subr.bf16.mxu0 %v451
    %498 = vmatpush1.bf16.msra.mxu0 %v450
    %499 = vmatprep.subr.bf16.mxu0 %v454
    %500 = vmatpush1.bf16.msra.mxu0 %v453
    %501 = vmatprep.subr.bf16.mxu0 %v457
    %502 = vmatpush1.bf16.msra.mxu0 %v456
    %503 = vmatprep.subr.bf16.mxu0 %v460
    %504 = vmatpush1.bf16.msra.mxu0 %v459
    %505 = vmatprep.subr.bf16.mxu0 %v463
    %506 = vmatpush1.bf16.msra.mxu0 %v462
    %507 = vmatprep.subr.bf16.mxu0 %v466
    %508 = vmatpush1.bf16.msra.mxu0 %v465
    %509 = vmatprep.subr.bf16.mxu0 %v469
    %510 = vmatpush1.bf16.msra.mxu0 %v468
    %511 = vmatprep.subr.bf16.mxu0 0
    %512 = vmatpush1.bf16.msra.mxu0 0
    %513 = vmatprep.subr.bf16.mxu0 0
    %514 = vmatpush1.bf16.msra.mxu0 0
    %515 = vmatprep.subr.bf16.mxu0 0
    %516 = vmatpush1.bf16.msra.mxu0 0
    %517 = vmatprep.subr.bf16.mxu0 0
    %518 = vmatpush1.bf16.msra.mxu0 0
    %519 = vmatprep.subr.bf16.mxu0 0
    %520 = vmatpush1.bf16.msra.mxu0 0
    %521 = vmatprep.subr.bf16.mxu0 0
    %522 = vmatpush1.bf16.msra.mxu0 0
    %523 = vmatprep.subr.bf16.mxu0 0
    %524 = vmatpush1.bf16.msra.mxu0 0
    %525 = vmatprep.subr.bf16.mxu0 0
    %526 = vmatpush1.bf16.msra.mxu0 0
    %527 = vmatprep.mubr.bf16.mxu0 0
    %528 = vmatmul.mubr.bf16.gmra.mrb[0].mxu0 %v317
    %v529 = vpop.f32.mrb[0].mxu0
    %v530 = vadd.f32 %v355, %v529
    %v531 = vpop.f32.mrb[0].mxu0
    %v532 = vadd.f32 %v359, %v531
    %v533 = vpop.f32.mrb[0].mxu0
    %v534 = vadd.f32 %v355, %v533
    %v535 = vpop.f32.mrb[0].mxu0
    %v536 = vadd.f32 %v359, %v535
    %537 = vdwg.mxu0
    %538 = vmatprep.subr.bf16.mxu0 0
    %539 = vmatpush1.bf16.msra.mxu0 %v449
    %540 = vmatprep.subr.bf16.mxu0 0
    %541 = vmatpush1.bf16.msra.mxu0 %v452
    %542 = vmatprep.subr.bf16.mxu0 0
    %543 = vmatpush1.bf16.msra.mxu0 %v455
    %544 = vmatprep.subr.bf16.mxu0 0
    %545 = vmatpush1.bf16.msra.mxu0 %v458
    %546 = vmatprep.subr.bf16.mxu0 0
    %547 = vmatpush1.bf16.msra.mxu0 %v461
    %548 = vmatprep.subr.bf16.mxu0 0
    %549 = vmatpush1.bf16.msra.mxu0 %v464
    %550 = vmatprep.subr.bf16.mxu0 0
    %551 = vmatpush1.bf16.msra.mxu0 %v467
    %552 = vmatprep.subr.bf16.mxu0 0
    %553 = vmatpush1.bf16.msra.mxu0 %v470
    %554 = vmatprep.subr.bf16.mxu0 0
    %555 = vmatpush1.bf16.msra.mxu0 0
    %556 = vmatprep.subr.bf16.mxu0 0
    %557 = vmatpush1.bf16.msra.mxu0 0
    %558 = vmatprep.subr.bf16.mxu0 0
    %559 = vmatpush1.bf16.msra.mxu0 0
    %560 = vmatprep.subr.bf16.mxu0 0
    %561 = vmatpush1.bf16.msra.mxu0 0
    %562 = vmatprep.subr.bf16.mxu0 0
    %563 = vmatpush1.bf16.msra.mxu0 0
    %564 = vmatprep.subr.bf16.mxu0 0
    %565 = vmatpush1.bf16.msra.mxu0 0
    %566 = vmatprep.subr.bf16.mxu0 0
    %567 = vmatpush1.bf16.msra.mxu0 0
    %568 = vmatprep.subr.bf16.mxu0 0
    %569 = vmatpush1.bf16.msra.mxu0 0
    %570 = vmatprep.mubr.bf16.mxu0 0
    %571 = vmatmul.mubr.bf16.gmra.mrb[0].mxu0 %v317
    %v572 = vpop.f32.mrb[0].mxu0
    %v573 = vadd.f32 %v363, %v572
    %v574 = vpop.f32.mrb[0].mxu0
    %v575 = vpop.f32.mrb[0].mxu0
    %v576 = vadd.f32 %v363, %v575
    %v577 = vpop.f32.mrb[0].mxu0
    %578 = vdwg.mxu0
    %v579 = vpack.c.bf16 %v534, %v530
    %v580 = vpack.c.bf16 %v536, %v532
    %v581 = vpack.c.bf16 %v576, %v573
    %v582 = vld [vmem:[#allocation2] sm:$0xff]
    %v583 = vld [vmem:[#allocation2 + $0x8] sm:$0xff]
    %vm584 = vcmask 261120
    %v586 = vsel %vm584, %v579, 0
    %v589 = vsel %vm584, %v580, 0
    %591 = vmatprep.subr.bf16.mxu0 0
    %592 = vmatpush1.bf16.xpose.msra.mxu0 %v589
    %593 = vmatprep.subr.bf16.mxu0 0
    %594 = vmatpush1.bf16.xpose.msra.mxu0 0
    %595 = vmatprep.subr.bf16.mxu0 0
    %596 = vmatpush1.bf16.xpose.msra.mxu0 0
    %597 = vmatprep.subr.bf16.mxu0 0
    %598 = vmatpush1.bf16.xpose.msra.mxu0 0
    %599 = vmatprep.subr.bf16.mxu0 0
    %600 = vmatpush1.bf16.xpose.msra.mxu0 0
    %601 = vmatprep.subr.bf16.mxu0 0
    %602 = vmatpush1.bf16.xpose.msra.mxu0 0
    %603 = vmatprep.subr.bf16.mxu0 0
    %604 = vmatpush1.bf16.xpose.msra.mxu0 0
    %605 = vmatprep.subr.bf16.mxu0 0
    %606 = vmatpush1.bf16.xpose.msra.mxu0 0
    %607 = vmatprep.subr.bf16.mxu0 0
    %608 = vmatpush1.bf16.xpose.msra.mxu0 0
    %609 = vmatprep.subr.bf16.mxu0 0
    %610 = vmatpush1.bf16.xpose.msra.mxu0 0
    %611 = vmatprep.subr.bf16.mxu0 0
    %612 = vmatpush1.bf16.xpose.msra.mxu0 0
    %613 = vmatprep.subr.bf16.mxu0 0
    %614 = vmatpush1.bf16.xpose.msra.mxu0 0
    %615 = vmatprep.subr.bf16.mxu0 0
    %616 = vmatpush1.bf16.xpose.msra.mxu0 0
    %617 = vmatprep.subr.bf16.mxu0 0
    %618 = vmatpush1.bf16.xpose.msra.mxu0 0
    %619 = vmatprep.subr.bf16.mxu0 0
    %620 = vmatpush1.bf16.xpose.msra.mxu0 0
    %621 = vmatprep.subr.bf16.mxu0 0
    %622 = vmatpush1.bf16.xpose.msra.mxu0 0
    %623 = vmatprep.mubr.bf16.mxu0 0
    %624 = vmatmul.mubr.bf16.gmra.mrb[0].mxu0 %v586
    %v625 = vpop.f32.mrb[0].mxu0
    %v626 = vadd.f32 %v582, %v625
    %v627 = vpop.f32.mrb[0].mxu0
    %v628 = vpop.f32.mrb[0].mxu0
    %v629 = vadd.f32 %v583, %v628
    %v630 = vpop.f32.mrb[0].mxu0
    %631 = vdwg.mxu0
    %vm632 = vcmask 130048
    %v633 = vsel %vm632, %v626, -inf
    %634 = vmax.xlane.f32.xlu0 %v633
    %v635 = vpop.xlane.xlu0 %634
    %v636 = vsel %vm632, %v629, -inf
    %637 = vmax.xlane.f32.xlu0 %v636
    %v638 = vpop.xlane.xlu0 %637
    %v639 = vsub.f32 %v626, %v635
    %v640 = vsub.f32 %v629, %v638
    %v641 = vmul.f32 %v639, 1.442695
    %v642 = vpow.pop %v641
    %v643 = vmul.f32 %v640, 1.442695
    %v644 = vpow.pop %v643
    %v645 = vsel %vm632, %v642, 0.0
    %646 = vadd.xlane.f32.xlu0 %v645
    %v647 = vpop.xlane.xlu0 %646
    %v648 = vsel %vm632, %v644, 0.0
    %649 = vadd.xlane.f32.xlu0 %v648
    %v650 = vpop.xlane.xlu0 %649
    %v651 = vrcp.pop %v647
    %v652 = vrcp.pop %v650
    %v653 = vmul.f32 %v642, %v651
    %v654 = vmul.f32 %v644, %v652
    %v655 = vpack.c.bf16 %v654, %v653
    %v657 = vsel %vm632, %v655, 0
    %659 = vmatprep.subr.bf16.mxu0 0
    %660 = vmatpush1.bf16.msra.mxu0 %v581
    %661 = vmatprep.subr.bf16.mxu0 0
    %662 = vmatpush1.bf16.msra.mxu0 0
    %663 = vmatprep.subr.bf16.mxu0 0
    %664 = vmatpush1.bf16.msra.mxu0 0
    %665 = vmatprep.subr.bf16.mxu0 0
    %666 = vmatpush1.bf16.msra.mxu0 0
    %667 = vmatprep.subr.bf16.mxu0 0
    %668 = vmatpush1.bf16.msra.mxu0 0
    %669 = vmatprep.subr.bf16.mxu0 0
    %670 = vmatpush1.bf16.msra.mxu0 0
    %671 = vmatprep.subr.bf16.mxu0 0
    %672 = vmatpush1.bf16.msra.mxu0 0
    %673 = vmatprep.subr.bf16.mxu0 0
    %674 = vmatpush1.bf16.msra.mxu0 0
    %675 = vmatprep.subr.bf16.mxu0 0
    %676 = vmatpush1.bf16.msra.mxu0 0
    %677 = vmatprep.subr.bf16.mxu0 0
    %678 = vmatpush1.bf16.msra.mxu0 0
    %679 = vmatprep.subr.bf16.mxu0 0
    %680 = vmatpush1.bf16.msra.mxu0 0
    %681 = vmatprep.subr.bf16.mxu0 0
    %682 = vmatpush1.bf16.msra.mxu0 0
    %683 = vmatprep.subr.bf16.mxu0 0
    %684 = vmatpush1.bf16.msra.mxu0 0
    %685 = vmatprep.subr.bf16.mxu0 0
    %686 = vmatpush1.bf16.msra.mxu0 0
    %687 = vmatprep.subr.bf16.mxu0 0
    %688 = vmatpush1.bf16.msra.mxu0 0
    %689 = vmatprep.subr.bf16.mxu0 0
    %690 = vmatpush1.bf16.msra.mxu0 0
    %691 = vmatprep.mubr.bf16.mxu0 0
    %692 = vmatmul.mubr.bf16.gmra.mrb[0].mxu0 %v657
    %v693 = vpop.f32.mrb[0].mxu0
    %v694 = vadd.f32 0.0, %v693
    %v695 = vpop.f32.mrb[0].mxu0
    %v696 = vpop.f32.mrb[0].mxu0
    %v697 = vadd.f32 0.0, %v696
    %v698 = vpop.f32.mrb[0].mxu0
    %699 = vdwg.mxu0
    %v700 = vpack.c.bf16 %v697, %v694
    %v701 = vld [vmem:[#allocation7] sm:$0xf]
    %v702 = vld [vmem:[#allocation7 + $0x4] sm:$0xf]
    %v703 = vld [vmem:[#allocation7 + $0x8] sm:$0xf]
    %v704 = vld [vmem:[#allocation7 + $0xc] sm:$0xf]
    %706 = vrot.lane.b32.xlu0 %v579, 96
    %v707 = vpop.permute.xlu0 %706
    %709 = vrot.lane.b32.xlu0 %v580, 96
    %v710 = vpop.permute.xlu0 %709
    %v712 = vsel %vm584, %v707, 0
    %v715 = vsel %vm584, %v710, 0
    %717 = vmatprep.subr.bf16.mxu0 0
    %718 = vmatpush1.bf16.xpose.msra.mxu0 %v715
    %719 = vmatprep.subr.bf16.mxu0 0
    %720 = vmatpush1.bf16.xpose.msra.mxu0 0
    %721 = vmatprep.subr.bf16.mxu0 0
    %722 = vmatpush1.bf16.xpose.msra.mxu0 0
    %723 = vmatprep.subr.bf16.mxu0 0
    %724 = vmatpush1.bf16.xpose.msra.mxu0 0
    %725 = vmatprep.subr.bf16.mxu0 0
    %726 = vmatpush1.bf16.xpose.msra.mxu0 0
    %727 = vmatprep.subr.bf16.mxu0 0
    %728 = vmatpush1.bf16.xpose.msra.mxu0 0
    %729 = vmatprep.subr.bf16.mxu0 0
    %730 = vmatpush1.bf16.xpose.msra.mxu0 0
    %731 = vmatprep.subr.bf16.mxu0 0
    %732 = vmatpush1.bf16.xpose.msra.mxu0 0
    %733 = vmatprep.subr.bf16.mxu0 0
    %734 = vmatpush1.bf16.xpose.msra.mxu0 0
    %735 = vmatprep.subr.bf16.mxu0 0
    %736 = vmatpush1.bf16.xpose.msra.mxu0 0
    %737 = vmatprep.subr.bf16.mxu0 0
    %738 = vmatpush1.bf16.xpose.msra.mxu0 0
    %739 = vmatprep.subr.bf16.mxu0 0
    %740 = vmatpush1.bf16.xpose.msra.mxu0 0
    %741 = vmatprep.subr.bf16.mxu0 0
    %742 = vmatpush1.bf16.xpose.msra.mxu0 0
    %743 = vmatprep.subr.bf16.mxu0 0
    %744 = vmatpush1.bf16.xpose.msra.mxu0 0
    %745 = vmatprep.subr.bf16.mxu0 0
    %746 = vmatpush1.bf16.xpose.msra.mxu0 0
    %747 = vmatprep.subr.bf16.mxu0 0
    %748 = vmatpush1.bf16.xpose.msra.mxu0 0
    %749 = vmatprep.mubr.bf16.mxu0 0
    %750 = vmatmul.mubr.bf16.gmra.mrb[0].mxu0 %v712
    %v751 = vpop.f32.mrb[0].mxu0
    %v752 = vadd.f32 %v582, %v751
    %v753 = vpop.f32.mrb[0].mxu0
    %v754 = vpop.f32.mrb[0].mxu0
    %v755 = vadd.f32 %v583, %v754
    %v756 = vpop.f32.mrb[0].mxu0
    %757 = vdwg.mxu0
    %v758 = vsel %vm632, %v752, -inf
    %759 = vmax.xlane.f32.xlu0 %v758
    %v760 = vpop.xlane.xlu0 %759
    %v761 = vsel %vm632, %v755, -inf
    %762 = vmax.xlane.f32.xlu0 %v761
    %v763 = vpop.xlane.xlu0 %762
    %v764 = vsub.f32 %v752, %v760
    %v765 = vsub.f32 %v755, %v763
    %v766 = vmul.f32 %v764, 1.442695
    %v767 = vpow.pop %v766
    %v768 = vmul.f32 %v765, 1.442695
    %v769 = vpow.pop %v768
    %v770 = vsel %vm632, %v767, 0.0
    %771 = vadd.xlane.f32.xlu0 %v770
    %v772 = vpop.xlane.xlu0 %771
    %v773 = vsel %vm632, %v769, 0.0
    %774 = vadd.xlane.f32.xlu0 %v773
    %v775 = vpop.xlane.xlu0 %774
    %v776 = vrcp.pop %v772
    %v777 = vrcp.pop %v775
    %v778 = vmul.f32 %v767, %v776
    %v779 = vmul.f32 %v769, %v777
    %v780 = vpack.c.bf16 %v779, %v778
    %782 = vrot.lane.b32.xlu0 %v581, 96
    %v783 = vpop.permute.xlu0 %782
    %v786 = vsel %vm632, %v780, 0
    %788 = vmatprep.subr.bf16.mxu0 0
    %789 = vmatpush1.bf16.msra.mxu0 %v783
    %790 = vmatprep.subr.bf16.mxu0 0
    %791 = vmatpush1.bf16.msra.mxu0 0
    %792 = vmatprep.subr.bf16.mxu0 0
    %793 = vmatpush1.bf16.msra.mxu0 0
    %794 = vmatprep.subr.bf16.mxu0 0
    %795 = vmatpush1.bf16.msra.mxu0 0
    %796 = vmatprep.subr.bf16.mxu0 0
    %797 = vmatpush1.bf16.msra.mxu0 0
    %798 = vmatprep.subr.bf16.mxu0 0
    %799 = vmatpush1.bf16.msra.mxu0 0
    %800 = vmatprep.subr.bf16.mxu0 0
    %801 = vmatpush1.bf16.msra.mxu0 0
    %802 = vmatprep.subr.bf16.mxu0 0
    %803 = vmatpush1.bf16.msra.mxu0 0
    %804 = vmatprep.subr.bf16.mxu0 0
    %805 = vmatpush1.bf16.msra.mxu0 0
    %806 = vmatprep.subr.bf16.mxu0 0
    %807 = vmatpush1.bf16.msra.mxu0 0
    %808 = vmatprep.subr.bf16.mxu0 0
    %809 = vmatpush1.bf16.msra.mxu0 0
    %810 = vmatprep.subr.bf16.mxu0 0
    %811 = vmatpush1.bf16.msra.mxu0 0
    %812 = vmatprep.subr.bf16.mxu0 0
    %813 = vmatpush1.bf16.msra.mxu0 0
    %814 = vmatprep.subr.bf16.mxu0 0
    %815 = vmatpush1.bf16.msra.mxu0 0
    %816 = vmatprep.subr.bf16.mxu0 0
    %817 = vmatpush1.bf16.msra.mxu0 0
    %818 = vmatprep.subr.bf16.mxu0 0
    %819 = vmatpush1.bf16.msra.mxu0 0
    %820 = vmatprep.mubr.bf16.mxu0 0
    %821 = vmatmul.mubr.bf16.gmra.mrb[0].mxu0 %v786
    %v822 = vpop.f32.mrb[0].mxu0
    %v823 = vadd.f32 0.0, %v822
    %v824 = vpop.f32.mrb[0].mxu0
    %v825 = vpop.f32.mrb[0].mxu0
    %v826 = vadd.f32 0.0, %v825
    %v827 = vpop.f32.mrb[0].mxu0
    %828 = vdwg.mxu0
    %v829 = vpack.c.bf16 %v826, %v823
    %s830 = scalar_lea.vmem [#allocation7], 16
    %v831 = vld [vmem:[%s830] sm:$0xf]
    %v832 = vld [vmem:[%s830 + $0x4] sm:$0xf]
    %v833 = vld [vmem:[%s830 + $0x8] sm:$0xf]
    %v834 = vld [vmem:[%s830 + $0xc] sm:$0xf]
    %v839 = vunpack.c.l.b16 %v831
    %v840 = vunpack.c.l.b16 %v832
    %v841 = vunpack.c.l.b16 %v833
    %v842 = vunpack.c.l.b16 %v834
    %v843 = vpack.c.b16 %v840, %v839
    %v844 = vpack.c.b16 %v842, %v841
    %v848 = vsel %vm584, %v829, 0
    %850 = vmatprep.subr.bf16.mxu0 0
    %851 = vmatpush1.bf16.msra.mxu0 %v843
    %852 = vmatprep.subr.bf16.mxu0 0
    %853 = vmatpush1.bf16.msra.mxu0 %v844
    %854 = vmatprep.subr.bf16.mxu0 0
    %855 = vmatpush1.bf16.msra.mxu0 0
    %856 = vmatprep.subr.bf16.mxu0 0
    %857 = vmatpush1.bf16.msra.mxu0 0
    %858 = vmatprep.subr.bf16.mxu0 0
    %859 = vmatpush1.bf16.msra.mxu0 0
    %860 = vmatprep.subr.bf16.mxu0 0
    %861 = vmatpush1.bf16.msra.mxu0 0
    %862 = vmatprep.subr.bf16.mxu0 0
    %863 = vmatpush1.bf16.msra.mxu0 0
    %864 = vmatprep.subr.bf16.mxu0 0
    %865 = vmatpush1.bf16.msra.mxu0 0
    %866 = vmatprep.subr.bf16.mxu0 0
    %867 = vmatpush1.bf16.msra.mxu0 0
    %868 = vmatprep.subr.bf16.mxu0 0
    %869 = vmatpush1.bf16.msra.mxu0 0
    %870 = vmatprep.subr.bf16.mxu0 0
    %871 = vmatpush1.bf16.msra.mxu0 0
    %872 = vmatprep.subr.bf16.mxu0 0
    %873 = vmatpush1.bf16.msra.mxu0 0
    %874 = vmatprep.subr.bf16.mxu0 0
    %875 = vmatpush1.bf16.msra.mxu0 0
    %876 = vmatprep.subr.bf16.mxu0 0
    %877 = vmatpush1.bf16.msra.mxu0 0
    %878 = vmatprep.subr.bf16.mxu0 0
    %879 = vmatpush1.bf16.msra.mxu0 0
    %880 = vmatprep.subr.bf16.mxu0 0
    %881 = vmatpush1.bf16.msra.mxu0 0
    %882 = vmatprep.mubr.bf16.mxu0 0
    %883 = vmatmul.mubr.bf16.gmra.mrb[0].mxu0 %v848
    %v884 = vpop.f32.mrb[0].mxu0
    %v885 = vadd.f32 0.0, %v884
    %v886 = vpop.f32.mrb[0].mxu0
    %v887 = vpop.f32.mrb[0].mxu0
    %v888 = vadd.f32 0.0, %v887
    %v889 = vpop.f32.mrb[0].mxu0
    %890 = vdwg.mxu0
    %v895 = vunpack.c.l.b16 %v701
    %v896 = vunpack.c.l.b16 %v702
    %v897 = vunpack.c.l.b16 %v703
    %v898 = vunpack.c.l.b16 %v704
    %v899 = vpack.c.b16 %v896, %v895
    %v900 = vpack.c.b16 %v898, %v897
    %v904 = vsel %vm584, %v700, 0
    %906 = vmatprep.subr.bf16.mxu0 0
    %907 = vmatpush1.bf16.msra.mxu0 %v899
    %908 = vmatprep.subr.bf16.mxu0 0
    %909 = vmatpush1.bf16.msra.mxu0 %v900
    %910 = vmatprep.subr.bf16.mxu0 0
    %911 = vmatpush1.bf16.msra.mxu0 0
    %912 = vmatprep.subr.bf16.mxu0 0
    %913 = vmatpush1.bf16.msra.mxu0 0
    %914 = vmatprep.subr.bf16.mxu0 0
    %915 = vmatpush1.bf16.msra.mxu0 0
    %916 = vmatprep.subr.bf16.mxu0 0
    %917 = vmatpush1.bf16.msra.mxu0 0
    %918 = vmatprep.subr.bf16.mxu0 0
    %919 = vmatpush1.bf16.msra.mxu0 0
    %920 = vmatprep.subr.bf16.mxu0 0
    %921 = vmatpush1.bf16.msra.mxu0 0
    %922 = vmatprep.subr.bf16.mxu0 0
    %923 = vmatpush1.bf16.msra.mxu0 0
    %924 = vmatprep.subr.bf16.mxu0 0
    %925 = vmatpush1.bf16.msra.mxu0 0
    %926 = vmatprep.subr.bf16.mxu0 0
    %927 = vmatpush1.bf16.msra.mxu0 0
    %928 = vmatprep.subr.bf16.mxu0 0
    %929 = vmatpush1.bf16.msra.mxu0 0
    %930 = vmatprep.subr.bf16.mxu0 0
    %931 = vmatpush1.bf16.msra.mxu0 0
    %932 = vmatprep.subr.bf16.mxu0 0
    %933 = vmatpush1.bf16.msra.mxu0 0
    %934 = vmatprep.subr.bf16.mxu0 0
    %935 = vmatpush1.bf16.msra.mxu0 0
    %936 = vmatprep.subr.bf16.mxu0 0
    %937 = vmatpush1.bf16.msra.mxu0 0
    %938 = vmatprep.mubr.bf16.mxu0 0
    %939 = vmatmul.mubr.bf16.gmra.mrb[0].mxu0 %v904
    %v940 = vpop.f32.mrb[0].mxu0
    %v941 = vadd.f32 %v885, %v940
    %v942 = vpop.f32.mrb[0].mxu0
    %v943 = vpop.f32.mrb[0].mxu0
    %v944 = vadd.f32 %v888, %v943
    %v945 = vpop.f32.mrb[0].mxu0
    %946 = vdwg.mxu0
    %947 = vrot.lane.b32.xlu0 %v579, 64
    %v948 = vpop.permute.xlu0 %947
    %949 = vrot.lane.b32.xlu0 %v580, 64
    %v950 = vpop.permute.xlu0 %949
    %v952 = vsel %vm584, %v948, 0
    %v955 = vsel %vm584, %v950, 0
    %957 = vmatprep.subr.bf16.mxu0 0
    %958 = vmatpush1.bf16.xpose.msra.mxu0 %v955
    %959 = vmatprep.subr.bf16.mxu0 0
    %960 = vmatpush1.bf16.xpose.msra.mxu0 0
    %961 = vmatprep.subr.bf16.mxu0 0
    %962 = vmatpush1.bf16.xpose.msra.mxu0 0
    %963 = vmatprep.subr.bf16.mxu0 0
    %964 = vmatpush1.bf16.xpose.msra.mxu0 0
    %965 = vmatprep.subr.bf16.mxu0 0
    %966 = vmatpush1.bf16.xpose.msra.mxu0 0
    %967 = vmatprep.subr.bf16.mxu0 0
    %968 = vmatpush1.bf16.xpose.msra.mxu0 0
    %969 = vmatprep.subr.bf16.mxu0 0
    %970 = vmatpush1.bf16.xpose.msra.mxu0 0
    %971 = vmatprep.subr.bf16.mxu0 0
    %972 = vmatpush1.bf16.xpose.msra.mxu0 0
    %973 = vmatprep.subr.bf16.mxu0 0
    %974 = vmatpush1.bf16.xpose.msra.mxu0 0
    %975 = vmatprep.subr.bf16.mxu0 0
    %976 = vmatpush1.bf16.xpose.msra.mxu0 0
    %977 = vmatprep.subr.bf16.mxu0 0
    %978 = vmatpush1.bf16.xpose.msra.mxu0 0
    %979 = vmatprep.subr.bf16.mxu0 0
    %980 = vmatpush1.bf16.xpose.msra.mxu0 0
    %981 = vmatprep.subr.bf16.mxu0 0
    %982 = vmatpush1.bf16.xpose.msra.mxu0 0
    %983 = vmatprep.subr.bf16.mxu0 0
    %984 = vmatpush1.bf16.xpose.msra.mxu0 0
    %985 = vmatprep.subr.bf16.mxu0 0
    %986 = vmatpush1.bf16.xpose.msra.mxu0 0
    %987 = vmatprep.subr.bf16.mxu0 0
    %988 = vmatpush1.bf16.xpose.msra.mxu0 0
    %989 = vmatprep.mubr.bf16.mxu0 0
    %990 = vmatmul.mubr.bf16.gmra.mrb[0].mxu0 %v952
    %v991 = vpop.f32.mrb[0].mxu0
    %v992 = vadd.f32 %v582, %v991
    %v993 = vpop.f32.mrb[0].mxu0
    %v994 = vpop.f32.mrb[0].mxu0
    %v995 = vadd.f32 %v583, %v994
    %v996 = vpop.f32.mrb[0].mxu0
    %997 = vdwg.mxu0
    %v998 = vsel %vm632, %v992, -inf
    %999 = vmax.xlane.f32.xlu0 %v998
    %v1000 = vpop.xlane.xlu0 %999
    %v1001 = vsel %vm632, %v995, -inf
    %1002 = vmax.xlane.f32.xlu0 %v1001
    %v1003 = vpop.xlane.xlu0 %1002
    %v1004 = vsub.f32 %v992, %v1000
    %v1005 = vsub.f32 %v995, %v1003
    %v1006 = vmul.f32 %v1004, 1.442695
    %v1007 = vpow.pop %v1006
    %v1008 = vmul.f32 %v1005, 1.442695
    %v1009 = vpow.pop %v1008
    %v1010 = vsel %vm632, %v1007, 0.0
    %1011 = vadd.xlane.f32.xlu0 %v1010
    %v1012 = vpop.xlane.xlu0 %1011
    %v1013 = vsel %vm632, %v1009, 0.0
    %1014 = vadd.xlane.f32.xlu0 %v1013
    %v1015 = vpop.xlane.xlu0 %1014
    %v1016 = vrcp.pop %v1012
    %v1017 = vrcp.pop %v1015
    %v1018 = vmul.f32 %v1007, %v1016
    %v1019 = vmul.f32 %v1009, %v1017
    %v1020 = vpack.c.bf16 %v1019, %v1018
    %1021 = vrot.lane.b32.xlu0 %v581, 64
    %v1022 = vpop.permute.xlu0 %1021
    %v1025 = vsel %vm632, %v1020, 0
    %1027 = vmatprep.subr.bf16.mxu0 0
    %1028 = vmatpush1.bf16.msra.mxu0 %v1022
    %1029 = vmatprep.subr.bf16.mxu0 0
    %1030 = vmatpush1.bf16.msra.mxu0 0
    %1031 = vmatprep.subr.bf16.mxu0 0
    %1032 = vmatpush1.bf16.msra.mxu0 0
    %1033 = vmatprep.subr.bf16.mxu0 0
    %1034 = vmatpush1.bf16.msra.mxu0 0
    %1035 = vmatprep.subr.bf16.mxu0 0
    %1036 = vmatpush1.bf16.msra.mxu0 0
    %1037 = vmatprep.subr.bf16.mxu0 0
    %1038 = vmatpush1.bf16.msra.mxu0 0
    %1039 = vmatprep.subr.bf16.mxu0 0
    %1040 = vmatpush1.bf16.msra.mxu0 0
    %1041 = vmatprep.subr.bf16.mxu0 0
    %1042 = vmatpush1.bf16.msra.mxu0 0
    %1043 = vmatprep.subr.bf16.mxu0 0
    %1044 = vmatpush1.bf16.msra.mxu0 0
    %1045 = vmatprep.subr.bf16.mxu0 0
    %1046 = vmatpush1.bf16.msra.mxu0 0
    %1047 = vmatprep.subr.bf16.mxu0 0
    %1048 = vmatpush1.bf16.msra.mxu0 0
    %1049 = vmatprep.subr.bf16.mxu0 0
    %1050 = vmatpush1.bf16.msra.mxu0 0
    %1051 = vmatprep.subr.bf16.mxu0 0
    %1052 = vmatpush1.bf16.msra.mxu0 0
    %1053 = vmatprep.subr.bf16.mxu0 0
    %1054 = vmatpush1.bf16.msra.mxu0 0
    %1055 = vmatprep.subr.bf16.mxu0 0
    %1056 = vmatpush1.bf16.msra.mxu0 0
    %1057 = vmatprep.subr.bf16.mxu0 0
    %1058 = vmatpush1.bf16.msra.mxu0 0
    %1059 = vmatprep.mubr.bf16.mxu0 0
    %1060 = vmatmul.mubr.bf16.gmra.mrb[0].mxu0 %v1025
    %v1061 = vpop.f32.mrb[0].mxu0
    %v1062 = vadd.f32 0.0, %v1061
    %v1063 = vpop.f32.mrb[0].mxu0
    %v1064 = vpop.f32.mrb[0].mxu0
    %v1065 = vadd.f32 0.0, %v1064
    %v1066 = vpop.f32.mrb[0].mxu0
    %1067 = vdwg.mxu0
    %v1068 = vpack.c.bf16 %v1065, %v1062
    %s1069 = scalar_lea.vmem [#allocation7], 32
    %v1070 = vld [vmem:[%s1069] sm:$0xf]
    %v1071 = vld [vmem:[%s1069 + $0x4] sm:$0xf]
    %v1072 = vld [vmem:[%s1069 + $0x8] sm:$0xf]
    %v1073 = vld [vmem:[%s1069 + $0xc] sm:$0xf]
    %v1078 = vunpack.c.l.b16 %v1070
    %v1079 = vunpack.c.l.b16 %v1071
    %v1080 = vunpack.c.l.b16 %v1072
    %v1081 = vunpack.c.l.b16 %v1073
    %v1082 = vpack.c.b16 %v1079, %v1078
    %v1083 = vpack.c.b16 %v1081, %v1080
    %v1087 = vsel %vm584, %v1068, 0
    %1089 = vmatprep.subr.bf16.mxu0 0
    %1090 = vmatpush1.bf16.msra.mxu0 %v1082
    %1091 = vmatprep.subr.bf16.mxu0 0
    %1092 = vmatpush1.bf16.msra.mxu0 %v1083
    %1093 = vmatprep.subr.bf16.mxu0 0
    %1094 = vmatpush1.bf16.msra.mxu0 0
    %1095 = vmatprep.subr.bf16.mxu0 0
    %1096 = vmatpush1.bf16.msra.mxu0 0
    %1097 = vmatprep.subr.bf16.mxu0 0
    %1098 = vmatpush1.bf16.msra.mxu0 0
    %1099 = vmatprep.subr.bf16.mxu0 0
    %1100 = vmatpush1.bf16.msra.mxu0 0
    %1101 = vmatprep.subr.bf16.mxu0 0
    %1102 = vmatpush1.bf16.msra.mxu0 0
    %1103 = vmatprep.subr.bf16.mxu0 0
    %1104 = vmatpush1.bf16.msra.mxu0 0
    %1105 = vmatprep.subr.bf16.mxu0 0
    %1106 = vmatpush1.bf16.msra.mxu0 0
    %1107 = vmatprep.subr.bf16.mxu0 0
    %1108 = vmatpush1.bf16.msra.mxu0 0
    %1109 = vmatprep.subr.bf16.mxu0 0
    %1110 = vmatpush1.bf16.msra.mxu0 0
    %1111 = vmatprep.subr.bf16.mxu0 0
    %1112 = vmatpush1.bf16.msra.mxu0 0
    %1113 = vmatprep.subr.bf16.mxu0 0
    %1114 = vmatpush1.bf16.msra.mxu0 0
    %1115 = vmatprep.subr.bf16.mxu0 0
    %1116 = vmatpush1.bf16.msra.mxu0 0
    %1117 = vmatprep.subr.bf16.mxu0 0
    %1118 = vmatpush1.bf16.msra.mxu0 0
    %1119 = vmatprep.subr.bf16.mxu0 0
    %1120 = vmatpush1.bf16.msra.mxu0 0
    %1121 = vmatprep.mubr.bf16.mxu0 0
    %1122 = vmatmul.mubr.bf16.gmra.mrb[0].mxu0 %v1087
    %v1123 = vpop.f32.mrb[0].mxu0
    %v1124 = vadd.f32 0.0, %v1123
    %v1125 = vpop.f32.mrb[0].mxu0
    %v1126 = vpop.f32.mrb[0].mxu0
    %v1127 = vadd.f32 0.0, %v1126
    %v1128 = vpop.f32.mrb[0].mxu0
    %1129 = vdwg.mxu0
    %v1130 = vadd.f32 %v941, %v1124
    %v1131 = vadd.f32 %v944, %v1127
    %1132 = vrot.lane.b32.xlu0 %v579, 32
    %v1133 = vpop.permute.xlu0 %1132
    %1134 = vrot.lane.b32.xlu0 %v580, 32
    %v1135 = vpop.permute.xlu0 %1134
    %v1137 = vsel %vm584, %v1133, 0
    %v1140 = vsel %vm584, %v1135, 0
    %1142 = vmatprep.subr.bf16.mxu0 0
    %1143 = vmatpush1.bf16.xpose.msra.mxu0 %v1140
    %1144 = vmatprep.subr.bf16.mxu0 0
    %1145 = vmatpush1.bf16.xpose.msra.mxu0 0
    %1146 = vmatprep.subr.bf16.mxu0 0
    %1147 = vmatpush1.bf16.xpose.msra.mxu0 0
    %1148 = vmatprep.subr.bf16.mxu0 0
    %1149 = vmatpush1.bf16.xpose.msra.mxu0 0
    %1150 = vmatprep.subr.bf16.mxu0 0
    %1151 = vmatpush1.bf16.xpose.msra.mxu0 0
    %1152 = vmatprep.subr.bf16.mxu0 0
    %1153 = vmatpush1.bf16.xpose.msra.mxu0 0
    %1154 = vmatprep.subr.bf16.mxu0 0
    %1155 = vmatpush1.bf16.xpose.msra.mxu0 0
    %1156 = vmatprep.subr.bf16.mxu0 0
    %1157 = vmatpush1.bf16.xpose.msra.mxu0 0
    %1158 = vmatprep.subr.bf16.mxu0 0
    %1159 = vmatpush1.bf16.xpose.msra.mxu0 0
    %1160 = vmatprep.subr.bf16.mxu0 0
    %1161 = vmatpush1.bf16.xpose.msra.mxu0 0
    %1162 = vmatprep.subr.bf16.mxu0 0
    %1163 = vmatpush1.bf16.xpose.msra.mxu0 0
    %1164 = vmatprep.subr.bf16.mxu0 0
    %1165 = vmatpush1.bf16.xpose.msra.mxu0 0
    %1166 = vmatprep.subr.bf16.mxu0 0
    %1167 = vmatpush1.bf16.xpose.msra.mxu0 0
    %1168 = vmatprep.subr.bf16.mxu0 0
    %1169 = vmatpush1.bf16.xpose.msra.mxu0 0
    %1170 = vmatprep.subr.bf16.mxu0 0
    %1171 = vmatpush1.bf16.xpose.msra.mxu0 0
    %1172 = vmatprep.subr.bf16.mxu0 0
    %1173 = vmatpush1.bf16.xpose.msra.mxu0 0
    %1174 = vmatprep.mubr.bf16.mxu0 0
    %1175 = vmatmul.mubr.bf16.gmra.mrb[0].mxu0 %v1137
    %v1176 = vpop.f32.mrb[0].mxu0
    %v1177 = vadd.f32 %v582, %v1176
    %v1178 = vpop.f32.mrb[0].mxu0
    %v1179 = vpop.f32.mrb[0].mxu0
    %v1180 = vadd.f32 %v583, %v1179
    %v1181 = vpop.f32.mrb[0].mxu0
    %1182 = vdwg.mxu0
    %v1183 = vsel %vm632, %v1177, -inf
    %1184 = vmax.xlane.f32.xlu0 %v1183
    %v1185 = vpop.xlane.xlu0 %1184
    %v1186 = vsel %vm632, %v1180, -inf
    %1187 = vmax.xlane.f32.xlu0 %v1186
    %v1188 = vpop.xlane.xlu0 %1187
    %v1189 = vsub.f32 %v1177, %v1185
    %v1190 = vsub.f32 %v1180, %v1188
    %v1191 = vmul.f32 %v1189, 1.442695
    %v1192 = vpow.pop %v1191
    %v1193 = vmul.f32 %v1190, 1.442695
    %v1194 = vpow.pop %v1193
    %v1195 = vsel %vm632, %v1192, 0.0
    %1196 = vadd.xlane.f32.xlu0 %v1195
    %v1197 = vpop.xlane.xlu0 %1196
    %v1198 = vsel %vm632, %v1194, 0.0
    %1199 = vadd.xlane.f32.xlu0 %v1198
    %v1200 = vpop.xlane.xlu0 %1199
    %v1201 = vrcp.pop %v1197
    %v1202 = vrcp.pop %v1200
    %v1203 = vmul.f32 %v1192, %v1201
    %v1204 = vmul.f32 %v1194, %v1202
    %v1205 = vpack.c.bf16 %v1204, %v1203
    %1206 = vrot.lane.b32.xlu0 %v581, 32
    %v1207 = vpop.permute.xlu0 %1206
    %v1210 = vsel %vm632, %v1205, 0
    %1212 = vmatprep.subr.bf16.mxu0 0
    %1213 = vmatpush1.bf16.msra.mxu0 %v1207
    %1214 = vmatprep.subr.bf16.mxu0 0
    %1215 = vmatpush1.bf16.msra.mxu0 0
    %1216 = vmatprep.subr.bf16.mxu0 0
    %1217 = vmatpush1.bf16.msra.mxu0 0
    %1218 = vmatprep.subr.bf16.mxu0 0
    %1219 = vmatpush1.bf16.msra.mxu0 0
    %1220 = vmatprep.subr.bf16.mxu0 0
    %1221 = vmatpush1.bf16.msra.mxu0 0
    %1222 = vmatprep.subr.bf16.mxu0 0
    %1223 = vmatpush1.bf16.msra.mxu0 0
    %1224 = vmatprep.subr.bf16.mxu0 0
    %1225 = vmatpush1.bf16.msra.mxu0 0
    %1226 = vmatprep.subr.bf16.mxu0 0
    %1227 = vmatpush1.bf16.msra.mxu0 0
    %1228 = vmatprep.subr.bf16.mxu0 0
    %1229 = vmatpush1.bf16.msra.mxu0 0
    %1230 = vmatprep.subr.bf16.mxu0 0
    %1231 = vmatpush1.bf16.msra.mxu0 0
    %1232 = vmatprep.subr.bf16.mxu0 0
    %1233 = vmatpush1.bf16.msra.mxu0 0
    %1234 = vmatprep.subr.bf16.mxu0 0
    %1235 = vmatpush1.bf16.msra.mxu0 0
    %1236 = vmatprep.subr.bf16.mxu0 0
    %1237 = vmatpush1.bf16.msra.mxu0 0
    %1238 = vmatprep.subr.bf16.mxu0 0
    %1239 = vmatpush1.bf16.msra.mxu0 0
    %1240 = vmatprep.subr.bf16.mxu0 0
    %1241 = vmatpush1.bf16.msra.mxu0 0
    %1242 = vmatprep.subr.bf16.mxu0 0
    %1243 = vmatpush1.bf16.msra.mxu0 0
    %1244 = vmatprep.mubr.bf16.mxu0 0
    %1245 = vmatmul.mubr.bf16.gmra.mrb[0].mxu0 %v1210
    %v1246 = vpop.f32.mrb[0].mxu0
    %v1247 = vadd.f32 0.0, %v1246
    %v1248 = vpop.f32.mrb[0].mxu0
    %v1249 = vpop.f32.mrb[0].mxu0
    %v1250 = vadd.f32 0.0, %v1249
    %v1251 = vpop.f32.mrb[0].mxu0
    %1252 = vdwg.mxu0
    %v1253 = vpack.c.bf16 %v1250, %v1247
    %s1254 = scalar_lea.vmem [#allocation7], 48
    %v1255 = vld [vmem:[%s1254] sm:$0xf]
    %v1256 = vld [vmem:[%s1254 + $0x4] sm:$0xf]
    %v1257 = vld [vmem:[%s1254 + $0x8] sm:$0xf]
    %v1258 = vld [vmem:[%s1254 + $0xc] sm:$0xf]
    %v1263 = vunpack.c.l.b16 %v1255
    %v1264 = vunpack.c.l.b16 %v1256
    %v1265 = vunpack.c.l.b16 %v1257
    %v1266 = vunpack.c.l.b16 %v1258
    %v1267 = vpack.c.b16 %v1264, %v1263
    %v1268 = vpack.c.b16 %v1266, %v1265
    %v1272 = vsel %vm584, %v1253, 0
    %1274 = vmatprep.subr.bf16.mxu0 0
    %1275 = vmatpush1.bf16.msra.mxu0 %v1267
    %1276 = vmatprep.subr.bf16.mxu0 0
    %1277 = vmatpush1.bf16.msra.mxu0 %v1268
    %1278 = vmatprep.subr.bf16.mxu0 0
    %1279 = vmatpush1.bf16.msra.mxu0 0
    %1280 = vmatprep.subr.bf16.mxu0 0
    %1281 = vmatpush1.bf16.msra.mxu0 0
    %1282 = vmatprep.subr.bf16.mxu0 0
    %1283 = vmatpush1.bf16.msra.mxu0 0
    %1284 = vmatprep.subr.bf16.mxu0 0
    %1285 = vmatpush1.bf16.msra.mxu0 0
    %1286 = vmatprep.subr.bf16.mxu0 0
    %1287 = vmatpush1.bf16.msra.mxu0 0
    %1288 = vmatprep.subr.bf16.mxu0 0
    %1289 = vmatpush1.bf16.msra.mxu0 0
    %1290 = vmatprep.subr.bf16.mxu0 0
    %1291 = vmatpush1.bf16.msra.mxu0 0
    %1292 = vmatprep.subr.bf16.mxu0 0
    %1293 = vmatpush1.bf16.msra.mxu0 0
    %1294 = vmatprep.subr.bf16.mxu0 0
    %1295 = vmatpush1.bf16.msra.mxu0 0
    %1296 = vmatprep.subr.bf16.mxu0 0
    %1297 = vmatpush1.bf16.msra.mxu0 0
    %1298 = vmatprep.subr.bf16.mxu0 0
    %1299 = vmatpush1.bf16.msra.mxu0 0
    %1300 = vmatprep.subr.bf16.mxu0 0
    %1301 = vmatpush1.bf16.msra.mxu0 0
    %1302 = vmatprep.subr.bf16.mxu0 0
    %1303 = vmatpush1.bf16.msra.mxu0 0
    %1304 = vmatprep.subr.bf16.mxu0 0
    %1305 = vmatpush1.bf16.msra.mxu0 0
    %1306 = vmatprep.mubr.bf16.mxu0 0
    %1307 = vmatmul.mubr.bf16.gmra.mrb[0].mxu0 %v1272
    %v1308 = vpop.f32.mrb[0].mxu0
    %v1309 = vadd.f32 0.0, %v1308
    %v1310 = vpop.f32.mrb[0].mxu0
    %v1311 = vpop.f32.mrb[0].mxu0
    %v1312 = vadd.f32 0.0, %v1311
    %v1313 = vpop.f32.mrb[0].mxu0
    %1314 = vdwg.mxu0
    %v1315 = vadd.f32 %v1130, %v1309
    %v1316 = vadd.f32 %v1131, %v1312
    %v1317 = vld [vmem:[#allocation9] sm:$0x1]
    %v1319 = vlaneseq
    %v1320 = vshrl.u32 %v1319, 7
    %v1321 = vsub.s32 0, %v1320
    %v1322 = vrot.slane %v1317, %v1321
    %v1324 = vadd.f32 %v1315, %v1322
    %v1325 = vadd.f32 %v1316, %v1322
    %v1326 = vadd.f32 %v311, %v1324
    %v1327 = vadd.f32 %v314, %v1325
    %v1328 = vld [vmem:[%s8] sm:$0x1]
    %v1329 = vld [vmem:[#allocation10] sm:$0x1]
    %1330 = vadd.xlane.f32.xlu0 %v1326
    %v1331 = vpop.xlane.xlu0 %1330
    %1332 = vadd.xlane.f32.xlu0 %v1327
    %v1333 = vpop.xlane.xlu0 %1332
    %v1334 = vrcp.pop 128.0
    %v1335 = vmul.f32 %v1331, %v1334
    %v1336 = vmul.f32 %v1333, %v1334
    %v1337 = vsub.f32 %v1326, %v1335
    %v1338 = vsub.f32 %v1327, %v1336
    %v1339 = vmul.f32 %v1337, %v1337
    %v1340 = vmul.f32 %v1338, %v1338
    %1341 = vadd.xlane.f32.xlu0 %v1339
    %v1342 = vpop.xlane.xlu0 %1341
    %1343 = vadd.xlane.f32.xlu0 %v1340
    %v1344 = vpop.xlane.xlu0 %1343
    %v1345 = vmul.f32 %v1342, %v1334
    %v1346 = vmul.f32 %v1344, %v1334
    %v1347 = vadd.f32 %v1345, 1e-05
    %v1348 = vadd.f32 %v1346, 1e-05
    %v1349 = vrsqrt.pop %v1347
    %v1350 = vrsqrt.pop %v1348
    %v1351 = vmul.f32 %v1337, %v1349
    %v1352 = vmul.f32 %v1338, %v1350
    %v1354 = vlaneseq
    %v1355 = vshrl.u32 %v1354, 7
    %v1356 = vsub.s32 0, %v1355
    %v1357 = vrot.slane %v1328, %v1356
    %v1359 = vmul.f32 %v1351, %v1357
    %v1360 = vmul.f32 %v1352, %v1357
    %v1362 = vlaneseq
    %v1363 = vshrl.u32 %v1362, 7
    %v1364 = vsub.s32 0, %v1363
    %v1365 = vrot.slane %v1329, %v1364
    %v1367 = vadd.f32 %v1359, %v1365
    %v1368 = vadd.f32 %v1360, %v1365
    %v1369 = vpack.c.bf16 %v1368, %v1367
    %v1370 = vld [vmem:[#allocation12] sm:$0xff]
    %v1371 = vld [vmem:[#allocation12 + $0x8] sm:$0xff]
    %v1372 = vld [vmem:[#allocation12 + $0x10] sm:$0xff]
    %v1373 = vld [vmem:[#allocation12 + $0x18] sm:$0xff]
    %v1374 = vld [vmem:[#allocation12 + $0x20] sm:$0xff]
    %v1375 = vld [vmem:[#allocation12 + $0x28] sm:$0xff]
    %v1376 = vld [vmem:[#allocation12 + $0x30] sm:$0xff]
    %v1377 = vld [vmem:[#allocation12 + $0x38] sm:$0xff]
    %v1378 = vld [vmem:[#allocation12 + $0x40] sm:$0xff]
    %v1379 = vld [vmem:[#allocation12 + $0x48] sm:$0xff]
    %v1380 = vld [vmem:[#allocation12 + $0x50] sm:$0xff]
    %v1381 = vld [vmem:[#allocation12 + $0x58] sm:$0xff]
    %v1382 = vld [vmem:[#allocation12 + $0x60] sm:$0xff]
    %v1383 = vld [vmem:[#allocation12 + $0x68] sm:$0xff]
    %v1384 = vld [vmem:[#allocation12 + $0x70] sm:$0xff]
    %v1385 = vld [vmem:[#allocation12 + $0x78] sm:$0xff]
    %v1386 = vld [vmem:[#allocation12 + $0x80] sm:$0xff]
    %v1387 = vld [vmem:[#allocation12 + $0x88] sm:$0xff]
    %v1388 = vld [vmem:[#allocation12 + $0x90] sm:$0xff]
    %v1389 = vld [vmem:[#allocation12 + $0x98] sm:$0xff]
    %v1390 = vld [vmem:[#allocation12 + $0xa0] sm:$0xff]
    %v1391 = vld [vmem:[#allocation12 + $0xa8] sm:$0xff]
    %v1392 = vld [vmem:[#allocation12 + $0xb0] sm:$0xff]
    %v1393 = vld [vmem:[#allocation12 + $0xb8] sm:$0xff]
    %v1394 = vld [vmem:[#allocation12 + $0xc0] sm:$0xff]
    %v1395 = vld [vmem:[#allocation12 + $0xc8] sm:$0xff]
    %v1396 = vld [vmem:[#allocation12 + $0xd0] sm:$0xff]
    %v1397 = vld [vmem:[#allocation12 + $0xd8] sm:$0xff]
    %v1398 = vld [vmem:[#allocation12 + $0xe0] sm:$0xff]
    %v1399 = vld [vmem:[#allocation12 + $0xe8] sm:$0xff]
    %v1400 = vld [vmem:[#allocation12 + $0xf0] sm:$0xff]
    %v1401 = vld [vmem:[#allocation12 + $0xf8] sm:$0xff]
    %v1402 = vld [vmem:[#allocation13] sm:$0xf]
    %v1404 = vlaneseq
    %v1405 = vshrl.u32 %v1404, 7
    %v1406 = vsub.s32 0, %v1405
    %v1407 = vrot.slane %v1402, %v1406
    %v1408 = vlaneseq
    %v1409 = vshrl.u32 %v1408, 7
    %v1410 = vsub.s32 1, %v1409
    %v1411 = vrot.slane %v1402, %v1410
    %v1412 = vlaneseq
    %v1413 = vshrl.u32 %v1412, 7
    %v1414 = vsub.s32 2, %v1413
    %v1415 = vrot.slane %v1402, %v1414
    %v1416 = vlaneseq
    %v1417 = vshrl.u32 %v1416, 7
    %v1418 = vsub.s32 3, %v1417
    %v1419 = vrot.slane %v1402, %v1418
    %v1456 = vunpack.c.l.b16 %v1370
    %v1457 = vunpack.c.h.b16 %v1370
    %v1458 = vunpack.c.l.b16 %v1371
    %v1459 = vunpack.c.h.b16 %v1371
    %v1460 = vunpack.c.l.b16 %v1372
    %v1461 = vunpack.c.h.b16 %v1372
    %v1462 = vunpack.c.l.b16 %v1373
    %v1463 = vunpack.c.h.b16 %v1373
    %v1464 = vunpack.c.l.b16 %v1374
    %v1465 = vunpack.c.h.b16 %v1374
    %v1466 = vunpack.c.l.b16 %v1375
    %v1467 = vunpack.c.h.b16 %v1375
    %v1468 = vunpack.c.l.b16 %v1376
    %v1469 = vunpack.c.h.b16 %v1376
    %v1470 = vunpack.c.l.b16 %v1377
    %v1471 = vunpack.c.h.b16 %v1377
    %v1472 = vunpack.c.l.b16 %v1378
    %v1473 = vunpack.c.h.b16 %v1378
    %v1474 = vunpack.c.l.b16 %v1379
    %v1475 = vunpack.c.h.b16 %v1379
    %v1476 = vunpack.c.l.b16 %v1380
    %v1477 = vunpack.c.h.b16 %v1380
    %v1478 = vunpack.c.l.b16 %v1381
    %v1479 = vunpack.c.h.b16 %v1381
    %v1480 = vunpack.c.l.b16 %v1382
    %v1481 = vunpack.c.h.b16 %v1382
    %v1482 = vunpack.c.l.b16 %v1383
    %v1483 = vunpack.c.h.b16 %v1383
    %v1484 = vunpack.c.l.b16 %v1384
    %v1485 = vunpack.c.h.b16 %v1384
    %v1486 = vunpack.c.l.b16 %v1385
    %v1487 = vunpack.c.h.b16 %v1385
    %v1488 = vunpack.c.l.b16 %v1386
    %v1489 = vunpack.c.h.b16 %v1386
    %v1490 = vunpack.c.l.b16 %v1387
    %v1491 = vunpack.c.h.b16 %v1387
    %v1492 = vunpack.c.l.b16 %v1388
    %v1493 = vunpack.c.h.b16 %v1388
    %v1494 = vunpack.c.l.b16 %v1389
    %v1495 = vunpack.c.h.b16 %v1389
    %v1496 = vunpack.c.l.b16 %v1390
    %v1497 = vunpack.c.h.b16 %v1390
    %v1498 = vunpack.c.l.b16 %v1391
    %v1499 = vunpack.c.h.b16 %v1391
    %v1500 = vunpack.c.l.b16 %v1392
    %v1501 = vunpack.c.h.b16 %v1392
    %v1502 = vunpack.c.l.b16 %v1393
    %v1503 = vunpack.c.h.b16 %v1393
    %v1504 = vunpack.c.l.b16 %v1394
    %v1505 = vunpack.c.h.b16 %v1394
    %v1506 = vunpack.c.l.b16 %v1395
    %v1507 = vunpack.c.h.b16 %v1395
    %v1508 = vunpack.c.l.b16 %v1396
    %v1509 = vunpack.c.h.b16 %v1396
    %v1510 = vunpack.c.l.b16 %v1397
    %v1511 = vunpack.c.h.b16 %v1397
    %v1512 = vunpack.c.l.b16 %v1398
    %v1513 = vunpack.c.h.b16 %v1398
    %v1514 = vunpack.c.l.b16 %v1399
    %v1515 = vunpack.c.h.b16 %v1399
    %v1516 = vunpack.c.l.b16 %v1400
    %v1517 = vunpack.c.h.b16 %v1400
    %v1518 = vunpack.c.l.b16 %v1401
    %v1519 = vunpack.c.h.b16 %v1401
    %v1520 = vpack.c.b16 %v1460, %v1456
    %v1521 = vpack.c.b16 %v1461, %v1457
    %v1522 = vpack.c.b16 %v1462, %v1458
    %v1523 = vpack.c.b16 %v1463, %v1459
    %v1524 = vpack.c.b16 %v1468, %v1464
    %v1525 = vpack.c.b16 %v1469, %v1465
    %v1526 = vpack.c.b16 %v1470, %v1466
    %v1527 = vpack.c.b16 %v1471, %v1467
    %v1528 = vpack.c.b16 %v1476, %v1472
    %v1529 = vpack.c.b16 %v1477, %v1473
    %v1530 = vpack.c.b16 %v1478, %v1474
    %v1531 = vpack.c.b16 %v1479, %v1475
    %v1532 = vpack.c.b16 %v1484, %v1480
    %v1533 = vpack.c.b16 %v1485, %v1481
    %v1534 = vpack.c.b16 %v1486, %v1482
    %v1535 = vpack.c.b16 %v1487, %v1483
    %v1536 = vpack.c.b16 %v1492, %v1488
    %v1537 = vpack.c.b16 %v1493, %v1489
    %v1538 = vpack.c.b16 %v1494, %v1490
    %v1539 = vpack.c.b16 %v1495, %v1491
    %v1540 = vpack.c.b16 %v1500, %v1496
    %v1541 = vpack.c.b16 %v1501, %v1497
    %v1542 = vpack.c.b16 %v1502, %v1498
    %v1543 = vpack.c.b16 %v1503, %v1499
    %v1544 = vpack.c.b16 %v1508, %v1504
    %v1545 = vpack.c.b16 %v1509, %v1505
    %v1546 = vpack.c.b16 %v1510, %v1506
    %v1547 = vpack.c.b16 %v1511, %v1507
    %v1548 = vpack.c.b16 %v1516, %v1512
    %v1549 = vpack.c.b16 %v1517, %v1513
    %v1550 = vpack.c.b16 %v1518, %v1514
    %v1551 = vpack.c.b16 %v1519, %v1515
    %1584 = vmatprep.subr.bf16.mxu0 %v1521
    %1585 = vmatpush1.bf16.msra.mxu0 %v1520
    %1586 = vmatprep.subr.bf16.mxu0 %v1525
    %1587 = vmatpush1.bf16.msra.mxu0 %v1524
    %1588 = vmatprep.subr.bf16.mxu0 %v1529
    %1589 = vmatpush1.bf16.msra.mxu0 %v1528
    %1590 = vmatprep.subr.bf16.mxu0 %v1533
    %1591 = vmatpush1.bf16.msra.mxu0 %v1532
    %1592 = vmatprep.subr.bf16.mxu0 %v1537
    %1593 = vmatpush1.bf16.msra.mxu0 %v1536
    %1594 = vmatprep.subr.bf16.mxu0 %v1541
    %1595 = vmatpush1.bf16.msra.mxu0 %v1540
    %1596 = vmatprep.subr.bf16.mxu0 %v1545
    %1597 = vmatpush1.bf16.msra.mxu0 %v1544
    %1598 = vmatprep.subr.bf16.mxu0 %v1549
    %1599 = vmatpush1.bf16.msra.mxu0 %v1548
    %1600 = vmatprep.subr.bf16.mxu0 0
    %1601 = vmatpush1.bf16.msra.mxu0 0
    %1602 = vmatprep.subr.bf16.mxu0 0
    %1603 = vmatpush1.bf16.msra.mxu0 0
    %1604 = vmatprep.subr.bf16.mxu0 0
    %1605 = vmatpush1.bf16.msra.mxu0 0
    %1606 = vmatprep.subr.bf16.mxu0 0
    %1607 = vmatpush1.bf16.msra.mxu0 0
    %1608 = vmatprep.subr.bf16.mxu0 0
    %1609 = vmatpush1.bf16.msra.mxu0 0
    %1610 = vmatprep.subr.bf16.mxu0 0
    %1611 = vmatpush1.bf16.msra.mxu0 0
    %1612 = vmatprep.subr.bf16.mxu0 0
    %1613 = vmatpush1.bf16.msra.mxu0 0
    %1614 = vmatprep.subr.bf16.mxu0 0
    %1615 = vmatpush1.bf16.msra.mxu0 0
    %1616 = vmatprep.mubr.bf16.mxu0 0
    %1617 = vmatmul.mubr.bf16.gmra.mrb[0].mxu0 %v1369
    %v1618 = vpop.f32.mrb[0].mxu0
    %v1619 = vadd.f32 %v1407, %v1618
    %v1620 = vpop.f32.mrb[0].mxu0
    %v1621 = vadd.f32 %v1411, %v1620
    %v1622 = vpop.f32.mrb[0].mxu0
    %v1623 = vadd.f32 %v1407, %v1622
    %v1624 = vpop.f32.mrb[0].mxu0
    %v1625 = vadd.f32 %v1411, %v1624
    %1626 = vdwg.mxu0
    %1627 = vmatprep.subr.bf16.mxu0 %v1523
    %1628 = vmatpush1.bf16.msra.mxu0 %v1522
    %1629 = vmatprep.subr.bf16.mxu0 %v1527
    %1630 = vmatpush1.bf16.msra.mxu0 %v1526
    %1631 = vmatprep.subr.bf16.mxu0 %v1531
    %1632 = vmatpush1.bf16.msra.mxu0 %v1530
    %1633 = vmatprep.subr.bf16.mxu0 %v1535
    %1634 = vmatpush1.bf16.msra.mxu0 %v1534
    %1635 = vmatprep.subr.bf16.mxu0 %v1539
    %1636 = vmatpush1.bf16.msra.mxu0 %v1538
    %1637 = vmatprep.subr.bf16.mxu0 %v1543
    %1638 = vmatpush1.bf16.msra.mxu0 %v1542
    %1639 = vmatprep.subr.bf16.mxu0 %v1547
    %1640 = vmatpush1.bf16.msra.mxu0 %v1546
    %1641 = vmatprep.subr.bf16.mxu0 %v1551
    %1642 = vmatpush1.bf16.msra.mxu0 %v1550
    %1643 = vmatprep.subr.bf16.mxu0 0
    %1644 = vmatpush1.bf16.msra.mxu0 0
    %1645 = vmatprep.subr.bf16.mxu0 0
    %1646 = vmatpush1.bf16.msra.mxu0 0
    %1647 = vmatprep.subr.bf16.mxu0 0
    %1648 = vmatpush1.bf16.msra.mxu0 0
    %1649 = vmatprep.subr.bf16.mxu0 0
    %1650 = vmatpush1.bf16.msra.mxu0 0
    %1651 = vmatprep.subr.bf16.mxu0 0
    %1652 = vmatpush1.bf16.msra.mxu0 0
    %1653 = vmatprep.subr.bf16.mxu0 0
    %1654 = vmatpush1.bf16.msra.mxu0 0
    %1655 = vmatprep.subr.bf16.mxu0 0
    %1656 = vmatpush1.bf16.msra.mxu0 0
    %1657 = vmatprep.subr.bf16.mxu0 0
    %1658 = vmatpush1.bf16.msra.mxu0 0
    %1659 = vmatprep.mubr.bf16.mxu0 0
    %1660 = vmatmul.mubr.bf16.gmra.mrb[0].mxu0 %v1369
    %v1661 = vpop.f32.mrb[0].mxu0
    %v1662 = vadd.f32 %v1415, %v1661
    %v1663 = vpop.f32.mrb[0].mxu0
    %v1664 = vadd.f32 %v1419, %v1663
    %v1665 = vpop.f32.mrb[0].mxu0
    %v1666 = vadd.f32 %v1415, %v1665
    %v1667 = vpop.f32.mrb[0].mxu0
    %v1668 = vadd.f32 %v1419, %v1667
    %1669 = vdwg.mxu0
    %v1670 = vmax.f32 %v1619, 0.0
    %v1671 = vmax.f32 %v1621, 0.0
    %v1672 = vmax.f32 %v1662, 0.0
    %v1673 = vmax.f32 %v1664, 0.0
    %v1674 = vmax.f32 %v1623, 0.0
    %v1675 = vmax.f32 %v1625, 0.0
    %v1676 = vmax.f32 %v1666, 0.0
    %v1677 = vmax.f32 %v1668, 0.0
    %v1678 = vpack.c.bf16 %v1674, %v1670
    %v1679 = vpack.c.bf16 %v1675, %v1671
    %v1680 = vpack.c.bf16 %v1676, %v1672
    %v1681 = vpack.c.bf16 %v1677, %v1673
    %v1682 = vld [vmem:[#allocation15] sm:$0xf]
    %v1683 = vld [vmem:[#allocation15 + $0x4] sm:$0xf]
    %v1684 = vld [vmem:[#allocation15 + $0x8] sm:$0xf]
    %v1685 = vld [vmem:[#allocation15 + $0xc] sm:$0xf]
    %v1686 = vld [vmem:[#allocation15 + $0x10] sm:$0xf]
    %v1687 = vld [vmem:[#allocation15 + $0x14] sm:$0xf]
    %v1688 = vld [vmem:[#allocation15 + $0x18] sm:$0xf]
    %v1689 = vld [vmem:[#allocation15 + $0x1c] sm:$0xf]
    %v1690 = vld [vmem:[#allocation15 + $0x20] sm:$0xf]
    %v1691 = vld [vmem:[#allocation15 + $0x24] sm:$0xf]
    %v1692 = vld [vmem:[#allocation15 + $0x28] sm:$0xf]
    %v1693 = vld [vmem:[#allocation15 + $0x2c] sm:$0xf]
    %v1694 = vld [vmem:[#allocation15 + $0x30] sm:$0xf]
    %v1695 = vld [vmem:[#allocation15 + $0x34] sm:$0xf]
    %v1696 = vld [vmem:[#allocation15 + $0x38] sm:$0xf]
    %v1697 = vld [vmem:[#allocation15 + $0x3c] sm:$0xf]
    %v1698 = vld [vmem:[#allocation15 + $0x40] sm:$0xf]
    %v1699 = vld [vmem:[#allocation15 + $0x44] sm:$0xf]
    %v1700 = vld [vmem:[#allocation15 + $0x48] sm:$0xf]
    %v1701 = vld [vmem:[#allocation15 + $0x4c] sm:$0xf]
    %v1702 = vld [vmem:[#allocation15 + $0x50] sm:$0xf]
    %v1703 = vld [vmem:[#allocation15 + $0x54] sm:$0xf]
    %v1704 = vld [vmem:[#allocation15 + $0x58] sm:$0xf]
    %v1705 = vld [vmem:[#allocation15 + $0x5c] sm:$0xf]
    %v1706 = vld [vmem:[#allocation15 + $0x60] sm:$0xf]
    %v1707 = vld [vmem:[#allocation15 + $0x64] sm:$0xf]
    %v1708 = vld [vmem:[#allocation15 + $0x68] sm:$0xf]
    %v1709 = vld [vmem:[#allocation15 + $0x6c] sm:$0xf]
    %v1710 = vld [vmem:[#allocation15 + $0x70] sm:$0xf]
    %v1711 = vld [vmem:[#allocation15 + $0x74] sm:$0xf]
    %v1712 = vld [vmem:[#allocation15 + $0x78] sm:$0xf]
    %v1713 = vld [vmem:[#allocation15 + $0x7c] sm:$0xf]
    %v1714 = vld [vmem:[#allocation15 + $0x80] sm:$0xf]
    %v1715 = vld [vmem:[#allocation15 + $0x84] sm:$0xf]
    %v1716 = vld [vmem:[#allocation15 + $0x88] sm:$0xf]
    %v1717 = vld [vmem:[#allocation15 + $0x8c] sm:$0xf]
    %v1718 = vld [vmem:[#allocation15 + $0x90] sm:$0xf]
    %v1719 = vld [vmem:[#allocation15 + $0x94] sm:$0xf]
    %v1720 = vld [vmem:[#allocation15 + $0x98] sm:$0xf]
    %v1721 = vld [vmem:[#allocation15 + $0x9c] sm:$0xf]
    %v1722 = vld [vmem:[#allocation15 + $0xa0] sm:$0xf]
    %v1723 = vld [vmem:[#allocation15 + $0xa4] sm:$0xf]
    %v1724 = vld [vmem:[#allocation15 + $0xa8] sm:$0xf]
    %v1725 = vld [vmem:[#allocation15 + $0xac] sm:$0xf]
    %v1726 = vld [vmem:[#allocation15 + $0xb0] sm:$0xf]
    %v1727 = vld [vmem:[#allocation15 + $0xb4] sm:$0xf]
    %v1728 = vld [vmem:[#allocation15 + $0xb8] sm:$0xf]
    %v1729 = vld [vmem:[#allocation15 + $0xbc] sm:$0xf]
    %v1730 = vld [vmem:[#allocation15 + $0xc0] sm:$0xf]
    %v1731 = vld [vmem:[#allocation15 + $0xc4] sm:$0xf]
    %v1732 = vld [vmem:[#allocation15 + $0xc8] sm:$0xf]
    %v1733 = vld [vmem:[#allocation15 + $0xcc] sm:$0xf]
    %v1734 = vld [vmem:[#allocation15 + $0xd0] sm:$0xf]
    %v1735 = vld [vmem:[#allocation15 + $0xd4] sm:$0xf]
    %v1736 = vld [vmem:[#allocation15 + $0xd8] sm:$0xf]
    %v1737 = vld [vmem:[#allocation15 + $0xdc] sm:$0xf]
    %v1738 = vld [vmem:[#allocation15 + $0xe0] sm:$0xf]
    %v1739 = vld [vmem:[#allocation15 + $0xe4] sm:$0xf]
    %v1740 = vld [vmem:[#allocation15 + $0xe8] sm:$0xf]
    %v1741 = vld [vmem:[#allocation15 + $0xec] sm:$0xf]
    %v1742 = vld [vmem:[#allocation15 + $0xf0] sm:$0xf]
    %v1743 = vld [vmem:[#allocation15 + $0xf4] sm:$0xf]
    %v1744 = vld [vmem:[#allocation15 + $0xf8] sm:$0xf]
    %v1745 = vld [vmem:[#allocation15 + $0xfc] sm:$0xf]
    %v1746 = vld [vmem:[#allocation16] sm:$0x1]
    %v1748 = vlaneseq
    %v1749 = vshrl.u32 %v1748, 7
    %v1750 = vsub.s32 0, %v1749
    %v1751 = vrot.slane %v1746, %v1750
    %v1817 = vunpack.c.l.b16 %v1682
    %v1818 = vunpack.c.l.b16 %v1683
    %v1819 = vunpack.c.l.b16 %v1684
    %v1820 = vunpack.c.l.b16 %v1685
    %v1821 = vunpack.c.l.b16 %v1686
    %v1822 = vunpack.c.l.b16 %v1687
    %v1823 = vunpack.c.l.b16 %v1688
    %v1824 = vunpack.c.l.b16 %v1689
    %v1825 = vunpack.c.l.b16 %v1690
    %v1826 = vunpack.c.l.b16 %v1691
    %v1827 = vunpack.c.l.b16 %v1692
    %v1828 = vunpack.c.l.b16 %v1693
    %v1829 = vunpack.c.l.b16 %v1694
    %v1830 = vunpack.c.l.b16 %v1695
    %v1831 = vunpack.c.l.b16 %v1696
    %v1832 = vunpack.c.l.b16 %v1697
    %v1833 = vunpack.c.l.b16 %v1698
    %v1834 = vunpack.c.l.b16 %v1699
    %v1835 = vunpack.c.l.b16 %v1700
    %v1836 = vunpack.c.l.b16 %v1701
    %v1837 = vunpack.c.l.b16 %v1702
    %v1838 = vunpack.c.l.b16 %v1703
    %v1839 = vunpack.c.l.b16 %v1704
    %v1840 = vunpack.c.l.b16 %v1705
    %v1841 = vunpack.c.l.b16 %v1706
    %v1842 = vunpack.c.l.b16 %v1707
    %v1843 = vunpack.c.l.b16 %v1708
    %v1844 = vunpack.c.l.b16 %v1709
    %v1845 = vunpack.c.l.b16 %v1710
    %v1846 = vunpack.c.l.b16 %v1711
    %v1847 = vunpack.c.l.b16 %v1712
    %v1848 = vunpack.c.l.b16 %v1713
    %v1849 = vunpack.c.l.b16 %v1714
    %v1850 = vunpack.c.l.b16 %v1715
    %v1851 = vunpack.c.l.b16 %v1716
    %v1852 = vunpack.c.l.b16 %v1717
    %v1853 = vunpack.c.l.b16 %v1718
    %v1854 = vunpack.c.l.b16 %v1719
    %v1855 = vunpack.c.l.b16 %v1720
    %v1856 = vunpack.c.l.b16 %v1721
    %v1857 = vunpack.c.l.b16 %v1722
    %v1858 = vunpack.c.l.b16 %v1723
    %v1859 = vunpack.c.l.b16 %v1724
    %v1860 = vunpack.c.l.b16 %v1725
    %v1861 = vunpack.c.l.b16 %v1726
    %v1862 = vunpack.c.l.b16 %v1727
    %v1863 = vunpack.c.l.b16 %v1728
    %v1864 = vunpack.c.l.b16 %v1729
    %v1865 = vunpack.c.l.b16 %v1730
    %v1866 = vunpack.c.l.b16 %v1731
    %v1867 = vunpack.c.l.b16 %v1732
    %v1868 = vunpack.c.l.b16 %v1733
    %v1869 = vunpack.c.l.b16 %v1734
    %v1870 = vunpack.c.l.b16 %v1735
    %v1871 = vunpack.c.l.b16 %v1736
    %v1872 = vunpack.c.l.b16 %v1737
    %v1873 = vunpack.c.l.b16 %v1738
    %v1874 = vunpack.c.l.b16 %v1739
    %v1875 = vunpack.c.l.b16 %v1740
    %v1876 = vunpack.c.l.b16 %v1741
    %v1877 = vunpack.c.l.b16 %v1742
    %v1878 = vunpack.c.l.b16 %v1743
    %v1879 = vunpack.c.l.b16 %v1744
    %v1880 = vunpack.c.l.b16 %v1745
    %v1881 = vpack.c.b16 %v1818, %v1817
    %v1882 = vpack.c.b16 %v1820, %v1819
    %v1883 = vpack.c.b16 %v1822, %v1821
    %v1884 = vpack.c.b16 %v1824, %v1823
    %v1885 = vpack.c.b16 %v1826, %v1825
    %v1886 = vpack.c.b16 %v1828, %v1827
    %v1887 = vpack.c.b16 %v1830, %v1829
    %v1888 = vpack.c.b16 %v1832, %v1831
    %v1889 = vpack.c.b16 %v1834, %v1833
    %v1890 = vpack.c.b16 %v1836, %v1835
    %v1891 = vpack.c.b16 %v1838, %v1837
    %v1892 = vpack.c.b16 %v1840, %v1839
    %v1893 = vpack.c.b16 %v1842, %v1841
    %v1894 = vpack.c.b16 %v1844, %v1843
    %v1895 = vpack.c.b16 %v1846, %v1845
    %v1896 = vpack.c.b16 %v1848, %v1847
    %v1897 = vpack.c.b16 %v1850, %v1849
    %v1898 = vpack.c.b16 %v1852, %v1851
    %v1899 = vpack.c.b16 %v1854, %v1853
    %v1900 = vpack.c.b16 %v1856, %v1855
    %v1901 = vpack.c.b16 %v1858, %v1857
    %v1902 = vpack.c.b16 %v1860, %v1859
    %v1903 = vpack.c.b16 %v1862, %v1861
    %v1904 = vpack.c.b16 %v1864, %v1863
    %v1905 = vpack.c.b16 %v1866, %v1865
    %v1906 = vpack.c.b16 %v1868, %v1867
    %v1907 = vpack.c.b16 %v1870, %v1869
    %v1908 = vpack.c.b16 %v1872, %v1871
    %v1909 = vpack.c.b16 %v1874, %v1873
    %v1910 = vpack.c.b16 %v1876, %v1875
    %v1911 = vpack.c.b16 %v1878, %v1877
    %v1912 = vpack.c.b16 %v1880, %v1879
    %1945 = vmatprep.subr.bf16.mxu0 0
    %1946 = vmatpush1.bf16.msra.mxu0 %v1881
    %1947 = vmatprep.subr.bf16.mxu0 0
    %1948 = vmatpush1.bf16.msra.mxu0 %v1882
    %1949 = vmatprep.subr.bf16.mxu0 0
    %1950 = vmatpush1.bf16.msra.mxu0 %v1883
    %1951 = vmatprep.subr.bf16.mxu0 0
    %1952 = vmatpush1.bf16.msra.mxu0 %v1884
    %1953 = vmatprep.subr.bf16.mxu0 0
    %1954 = vmatpush1.bf16.msra.mxu0 %v1885
    %1955 = vmatprep.subr.bf16.mxu0 0
    %1956 = vmatpush1.bf16.msra.mxu0 %v1886
    %1957 = vmatprep.subr.bf16.mxu0 0
    %1958 = vmatpush1.bf16.msra.mxu0 %v1887
    %1959 = vmatprep.subr.bf16.mxu0 0
    %1960 = vmatpush1.bf16.msra.mxu0 %v1888
    %1961 = vmatprep.subr.bf16.mxu0 0
    %1962 = vmatpush1.bf16.msra.mxu0 %v1889
    %1963 = vmatprep.subr.bf16.mxu0 0
    %1964 = vmatpush1.bf16.msra.mxu0 %v1890
    %1965 = vmatprep.subr.bf16.mxu0 0
    %1966 = vmatpush1.bf16.msra.mxu0 %v1891
    %1967 = vmatprep.subr.bf16.mxu0 0
    %1968 = vmatpush1.bf16.msra.mxu0 %v1892
    %1969 = vmatprep.subr.bf16.mxu0 0
    %1970 = vmatpush1.bf16.msra.mxu0 %v1893
    %1971 = vmatprep.subr.bf16.mxu0 0
    %1972 = vmatpush1.bf16.msra.mxu0 %v1894
    %1973 = vmatprep.subr.bf16.mxu0 0
    %1974 = vmatpush1.bf16.msra.mxu0 %v1895
    %1975 = vmatprep.subr.bf16.mxu0 0
    %1976 = vmatpush1.bf16.msra.mxu0 %v1896
    %1977 = vmatprep.mubr.bf16.mxu0 %v1679
    %1978 = vmatmul.mubr.bf16.gmra.mrb[0].mxu0 %v1678
    %v1979 = vpop.f32.mrb[0].mxu0
    %v1980 = vadd.f32 %v1751, %v1979
    %v1981 = vpop.f32.mrb[0].mxu0
    %v1982 = vpop.f32.mrb[0].mxu0
    %v1983 = vadd.f32 %v1751, %v1982
    %v1984 = vpop.f32.mrb[0].mxu0
    %1985 = vdwg.mxu0
    %1986 = vmatprep.subr.bf16.mxu0 0
    %1987 = vmatpush1.bf16.msra.mxu0 %v1897
    %1988 = vmatprep.subr.bf16.mxu0 0
    %1989 = vmatpush1.bf16.msra.mxu0 %v1898
    %1990 = vmatprep.subr.bf16.mxu0 0
    %1991 = vmatpush1.bf16.msra.mxu0 %v1899
    %1992 = vmatprep.subr.bf16.mxu0 0
    %1993 = vmatpush1.bf16.msra.mxu0 %v1900
    %1994 = vmatprep.subr.bf16.mxu0 0
    %1995 = vmatpush1.bf16.msra.mxu0 %v1901
    %1996 = vmatprep.subr.bf16.mxu0 0
    %1997 = vmatpush1.bf16.msra.mxu0 %v1902
    %1998 = vmatprep.subr.bf16.mxu0 0
    %1999 = vmatpush1.bf16.msra.mxu0 %v1903
    %2000 = vmatprep.subr.bf16.mxu0 0
    %2001 = vmatpush1.bf16.msra.mxu0 %v1904
    %2002 = vmatprep.subr.bf16.mxu0 0
    %2003 = vmatpush1.bf16.msra.mxu0 %v1905
    %2004 = vmatprep.subr.bf16.mxu0 0
    %2005 = vmatpush1.bf16.msra.mxu0 %v1906
    %2006 = vmatprep.subr.bf16.mxu0 0
    %2007 = vmatpush1.bf16.msra.mxu0 %v1907
    %2008 = vmatprep.subr.bf16.mxu0 0
    %2009 = vmatpush1.bf16.msra.mxu0 %v1908
    %2010 = vmatprep.subr.bf16.mxu0 0
    %2011 = vmatpush1.bf16.msra.mxu0 %v1909
    %2012 = vmatprep.subr.bf16.mxu0 0
    %2013 = vmatpush1.bf16.msra.mxu0 %v1910
    %2014 = vmatprep.subr.bf16.mxu0 0
    %2015 = vmatpush1.bf16.msra.mxu0 %v1911
    %2016 = vmatprep.subr.bf16.mxu0 0
    %2017 = vmatpush1.bf16.msra.mxu0 %v1912
    %2018 = vmatprep.mubr.bf16.mxu0 %v1681
    %2019 = vmatmul.mubr.bf16.gmra.mrb[0].mxu0 %v1680
    %v2020 = vpop.f32.mrb[0].mxu0
    %v2021 = vadd.f32 %v1980, %v2020
    %v2022 = vpop.f32.mrb[0].mxu0
    %v2023 = vpop.f32.mrb[0].mxu0
    %v2024 = vadd.f32 %v1983, %v2023
    %v2025 = vpop.f32.mrb[0].mxu0
    %2026 = vdwg.mxu0
    %v2027 = vadd.f32 %v1367, %v2021
    %v2028 = vadd.f32 %v1368, %v2024
    %v2029 = vld [vmem:[%s14] sm:$0x1]
    %v2030 = vld [vmem:[%s15] sm:$0x1]
    %2031 = vadd.xlane.f32.xlu0 %v2027
    %v2032 = vpop.xlane.xlu0 %2031
    %2033 = vadd.xlane.f32.xlu0 %v2028
    %v2034 = vpop.xlane.xlu0 %2033
    %v2035 = vmul.f32 %v2032, %v1334
    %v2036 = vmul.f32 %v2034, %v1334
    %v2037 = vsub.f32 %v2027, %v2035
    %v2038 = vsub.f32 %v2028, %v2036
    %v2039 = vmul.f32 %v2037, %v2037
    %v2040 = vmul.f32 %v2038, %v2038
    %2041 = vadd.xlane.f32.xlu0 %v2039
    %v2042 = vpop.xlane.xlu0 %2041
    %2043 = vadd.xlane.f32.xlu0 %v2040
    %v2044 = vpop.xlane.xlu0 %2043
    %v2045 = vmul.f32 %v2042, %v1334
    %v2046 = vmul.f32 %v2044, %v1334
    %v2047 = vadd.f32 %v2045, 1e-05
    %v2048 = vadd.f32 %v2046, 1e-05
    %v2049 = vrsqrt.pop %v2047
    %v2050 = vrsqrt.pop %v2048
    %v2051 = vmul.f32 %v2037, %v2049
    %v2052 = vmul.f32 %v2038, %v2050
    %v2054 = vlaneseq
    %v2055 = vshrl.u32 %v2054, 7
    %v2056 = vsub.s32 0, %v2055
    %v2057 = vrot.slane %v2029, %v2056
    %v2059 = vmul.f32 %v2051, %v2057
    %v2060 = vmul.f32 %v2052, %v2057
    %v2062 = vlaneseq
    %v2063 = vshrl.u32 %v2062, 7
    %v2064 = vsub.s32 0, %v2063
    %v2065 = vrot.slane %v2030, %v2064
    %v2067 = vadd.f32 %v2059, %v2065
    %v2068 = vadd.f32 %v2060, %v2065
    %v2069 = vpack.c.bf16 %v2068, %v2067
    %s2070 = scalar_lea.vmem [#allocation4], 192
    %v2071 = vld [vmem:[%s2070] sm:$0xff]
    %v2072 = vld [vmem:[%s2070 + $0x8] sm:$0xf]
    %v2073 = vld [vmem:[%s2070 + $0xc] sm:$0xff]
    %v2074 = vld [vmem:[%s2070 + $0x14] sm:$0xf]
    %v2075 = vld [vmem:[%s2070 + $0x18] sm:$0xff]
    %v2076 = vld [vmem:[%s2070 + $0x20] sm:$0xf]
    %v2077 = vld [vmem:[%s2070 + $0x24] sm:$0xff]
    %v2078 = vld [vmem:[%s2070 + $0x2c] sm:$0xf]
    %v2079 = vld [vmem:[%s2070 + $0x30] sm:$0xff]
    %v2080 = vld [vmem:[%s2070 + $0x38] sm:$0xf]
    %v2081 = vld [vmem:[%s2070 + $0x3c] sm:$0xff]
    %v2082 = vld [vmem:[%s2070 + $0x44] sm:$0xf]
    %v2083 = vld [vmem:[%s2070 + $0x48] sm:$0xff]
    %v2084 = vld [vmem:[%s2070 + $0x50] sm:$0xf]
    %v2085 = vld [vmem:[%s2070 + $0x54] sm:$0xff]
    %v2086 = vld [vmem:[%s2070 + $0x5c] sm:$0xf]
    %v2087 = vld [vmem:[%s2070 + $0x60] sm:$0xff]
    %v2088 = vld [vmem:[%s2070 + $0x68] sm:$0xf]
    %v2089 = vld [vmem:[%s2070 + $0x6c] sm:$0xff]
    %v2090 = vld [vmem:[%s2070 + $0x74] sm:$0xf]
    %v2091 = vld [vmem:[%s2070 + $0x78] sm:$0xff]
    %v2092 = vld [vmem:[%s2070 + $0x80] sm:$0xf]
    %v2093 = vld [vmem:[%s2070 + $0x84] sm:$0xff]
    %v2094 = vld [vmem:[%s2070 + $0x8c] sm:$0xf]
    %v2095 = vld [vmem:[%s2070 + $0x90] sm:$0xff]
    %v2096 = vld [vmem:[%s2070 + $0x98] sm:$0xf]
    %v2097 = vld [vmem:[%s2070 + $0x9c] sm:$0xff]
    %v2098 = vld [vmem:[%s2070 + $0xa4] sm:$0xf]
    %v2099 = vld [vmem:[%s2070 + $0xa8] sm:$0xff]
    %v2100 = vld [vmem:[%s2070 + $0xb0] sm:$0xf]
    %v2101 = vld [vmem:[%s2070 + $0xb4] sm:$0xff]
    %v2102 = vld [vmem:[%s2070 + $0xbc] sm:$0xf]
    %s2103 = scalar_lea.vmem [#allocation6], 3
    %v2104 = vld [vmem:[%s2103] sm:$0x7]
    %v2106 = vlaneseq
    %v2107 = vshrl.u32 %v2106, 7
    %v2108 = vsub.s32 0, %v2107
    %v2109 = vrot.slane %v2104, %v2108
    %v2110 = vlaneseq
    %v2111 = vshrl.u32 %v2110, 7
    %v2112 = vsub.s32 1, %v2111
    %v2113 = vrot.slane %v2104, %v2112
    %v2114 = vlaneseq
    %v2115 = vshrl.u32 %v2114, 7
    %v2116 = vsub.s32 2, %v2115
    %v2117 = vrot.slane %v2104, %v2116
    %v2153 = vunpack.c.l.b16 %v2071
    %v2154 = vunpack.c.h.b16 %v2071
    %v2155 = vunpack.c.l.b16 %v2072
    %v2156 = vunpack.c.l.b16 %v2073
    %v2157 = vunpack.c.h.b16 %v2073
    %v2158 = vunpack.c.l.b16 %v2074
    %v2159 = vunpack.c.l.b16 %v2075
    %v2160 = vunpack.c.h.b16 %v2075
    %v2161 = vunpack.c.l.b16 %v2076
    %v2162 = vunpack.c.l.b16 %v2077
    %v2163 = vunpack.c.h.b16 %v2077
    %v2164 = vunpack.c.l.b16 %v2078
    %v2165 = vunpack.c.l.b16 %v2079
    %v2166 = vunpack.c.h.b16 %v2079
    %v2167 = vunpack.c.l.b16 %v2080
    %v2168 = vunpack.c.l.b16 %v2081
    %v2169 = vunpack.c.h.b16 %v2081
    %v2170 = vunpack.c.l.b16 %v2082
    %v2171 = vunpack.c.l.b16 %v2083
    %v2172 = vunpack.c.h.b16 %v2083
    %v2173 = vunpack.c.l.b16 %v2084
    %v2174 = vunpack.c.l.b16 %v2085
    %v2175 = vunpack.c.h.b16 %v2085
    %v2176 = vunpack.c.l.b16 %v2086
    %v2177 = vunpack.c.l.b16 %v2087
    %v2178 = vunpack.c.h.b16 %v2087
    %v2179 = vunpack.c.l.b16 %v2088
    %v2180 = vunpack.c.l.b16 %v2089
    %v2181 = vunpack.c.h.b16 %v2089
    %v2182 = vunpack.c.l.b16 %v2090
    %v2183 = vunpack.c.l.b16 %v2091
    %v2184 = vunpack.c.h.b16 %v2091
    %v2185 = vunpack.c.l.b16 %v2092
    %v2186 = vunpack.c.l.b16 %v2093
    %v2187 = vunpack.c.h.b16 %v2093
    %v2188 = vunpack.c.l.b16 %v2094
    %v2189 = vunpack.c.l.b16 %v2095
    %v2190 = vunpack.c.h.b16 %v2095
    %v2191 = vunpack.c.l.b16 %v2096
    %v2192 = vunpack.c.l.b16 %v2097
    %v2193 = vunpack.c.h.b16 %v2097
    %v2194 = vunpack.c.l.b16 %v2098
    %v2195 = vunpack.c.l.b16 %v2099
    %v2196 = vunpack.c.h.b16 %v2099
    %v2197 = vunpack.c.l.b16 %v2100
    %v2198 = vunpack.c.l.b16 %v2101
    %v2199 = vunpack.c.h.b16 %v2101
    %v2200 = vunpack.c.l.b16 %v2102
    %v2201 = vpack.c.b16 %v2156, %v2153
    %v2202 = vpack.c.b16 %v2157, %v2154
    %v2203 = vpack.c.b16 %v2158, %v2155
    %v2204 = vpack.c.b16 %v2162, %v2159
    %v2205 = vpack.c.b16 %v2163, %v2160
    %v2206 = vpack.c.b16 %v2164, %v2161
    %v2207 = vpack.c.b16 %v2168, %v2165
    %v2208 = vpack.c.b16 %v2169, %v2166
    %v2209 = vpack.c.b16 %v2170, %v2167
    %v2210 = vpack.c.b16 %v2174, %v2171
    %v2211 = vpack.c.b16 %v2175, %v2172
    %v2212 = vpack.c.b16 %v2176, %v2173
    %v2213 = vpack.c.b16 %v2180, %v2177
    %v2214 = vpack.c.b16 %v2181, %v2178
    %v2215 = vpack.c.b16 %v2182, %v2179
    %v2216 = vpack.c.b16 %v2186, %v2183
    %v2217 = vpack.c.b16 %v2187, %v2184
    %v2218 = vpack.c.b16 %v2188, %v2185
    %v2219 = vpack.c.b16 %v2192, %v2189
    %v2220 = vpack.c.b16 %v2193, %v2190
    %v2221 = vpack.c.b16 %v2194, %v2191
    %v2222 = vpack.c.b16 %v2198, %v2195
    %v2223 = vpack.c.b16 %v2199, %v2196
    %v2224 = vpack.c.b16 %v2200, %v2197
    %2249 = vmatprep.subr.bf16.mxu0 %v2202
    %2250 = vmatpush1.bf16.msra.mxu0 %v2201
    %2251 = vmatprep.subr.bf16.mxu0 %v2205
    %2252 = vmatpush1.bf16.msra.mxu0 %v2204
    %2253 = vmatprep.subr.bf16.mxu0 %v2208
    %2254 = vmatpush1.bf16.msra.mxu0 %v2207
    %2255 = vmatprep.subr.bf16.mxu0 %v2211
    %2256 = vmatpush1.bf16.msra.mxu0 %v2210
    %2257 = vmatprep.subr.bf16.mxu0 %v2214
    %2258 = vmatpush1.bf16.msra.mxu0 %v2213
    %2259 = vmatprep.subr.bf16.mxu0 %v2217
    %2260 = vmatpush1.bf16.msra.mxu0 %v2216
    %2261 = vmatprep.subr.bf16.mxu0 %v2220
    %2262 = vmatpush1.bf16.msra.mxu0 %v2219
    %2263 = vmatprep.subr.bf16.mxu0 %v2223
    %2264 = vmatpush1.bf16.msra.mxu0 %v2222
    %2265 = vmatprep.subr.bf16.mxu0 0
    %2266 = vmatpush1.bf16.msra.mxu0 0
    %2267 = vmatprep.subr.bf16.mxu0 0
    %2268 = vmatpush1.bf16.msra.mxu0 0
    %2269 = vmatprep.subr.bf16.mxu0 0
    %2270 = vmatpush1.bf16.msra.mxu0 0
    %2271 = vmatprep.subr.bf16.mxu0 0
    %2272 = vmatpush1.bf16.msra.mxu0 0
    %2273 = vmatprep.subr.bf16.mxu0 0
    %2274 = vmatpush1.bf16.msra.mxu0 0
    %2275 = vmatprep.subr.bf16.mxu0 0
    %2276 = vmatpush1.bf16.msra.mxu0 0
    %2277 = vmatprep.subr.bf16.mxu0 0
    %2278 = vmatpush1.bf16.msra.mxu0 0
    %2279 = vmatprep.subr.bf16.mxu0 0
    %2280 = vmatpush1.bf16.msra.mxu0 0
    %2281 = vmatprep.mubr.bf16.mxu0 0
    %2282 = vmatmul.mubr.bf16.gmra.mrb[0].mxu0 %v2069
    %v2283 = vpop.f32.mrb[0].mxu0
    %v2284 = vadd.f32 %v2109, %v2283
    %v2285 = vpop.f32.mrb[0].mxu0
    %v2286 = vadd.f32 %v2113, %v2285
    %v2287 = vpop.f32.mrb[0].mxu0
    %v2288 = vadd.f32 %v2109, %v2287
    %v2289 = vpop.f32.mrb[0].mxu0
    %v2290 = vadd.f32 %v2113, %v2289
    %2291 = vdwg.mxu0
    %2292 = vmatprep.subr.bf16.mxu0 0
    %2293 = vmatpush1.bf16.msra.mxu0 %v2203
    %2294 = vmatprep.subr.bf16.mxu0 0
    %2295 = vmatpush1.bf16.msra.mxu0 %v2206
    %2296 = vmatprep.subr.bf16.mxu0 0
    %2297 = vmatpush1.bf16.msra.mxu0 %v2209
    %2298 = vmatprep.subr.bf16.mxu0 0
    %2299 = vmatpush1.bf16.msra.mxu0 %v2212
    %2300 = vmatprep.subr.bf16.mxu0 0
    %2301 = vmatpush1.bf16.msra.mxu0 %v2215
    %2302 = vmatprep.subr.bf16.mxu0 0
    %2303 = vmatpush1.bf16.msra.mxu0 %v2218
    %2304 = vmatprep.subr.bf16.mxu0 0
    %2305 = vmatpush1.bf16.msra.mxu0 %v2221
    %2306 = vmatprep.subr.bf16.mxu0 0
    %2307 = vmatpush1.bf16.msra.mxu0 %v2224
    %2308 = vmatprep.subr.bf16.mxu0 0
    %2309 = vmatpush1.bf16.msra.mxu0 0
    %2310 = vmatprep.subr.bf16.mxu0 0
    %2311 = vmatpush1.bf16.msra.mxu0 0
    %2312 = vmatprep.subr.bf16.mxu0 0
    %2313 = vmatpush1.bf16.msra.mxu0 0
    %2314 = vmatprep.subr.bf16.mxu0 0
    %2315 = vmatpush1.bf16.msra.mxu0 0
    %2316 = vmatprep.subr.bf16.mxu0 0
    %2317 = vmatpush1.bf16.msra.mxu0 0
    %2318 = vmatprep.subr.bf16.mxu0 0
    %2319 = vmatpush1.bf16.msra.mxu0 0
    %2320 = vmatprep.subr.bf16.mxu0 0
    %2321 = vmatpush1.bf16.msra.mxu0 0
    %2322 = vmatprep.subr.bf16.mxu0 0
    %2323 = vmatpush1.bf16.msra.mxu0 0
    %2324 = vmatprep.mubr.bf16.mxu0 0
    %2325 = vmatmul.mubr.bf16.gmra.mrb[0].mxu0 %v2069
    %v2326 = vpop.f32.mrb[0].mxu0
    %v2327 = vadd.f32 %v2117, %v2326
    %v2328 = vpop.f32.mrb[0].mxu0
    %v2329 = vpop.f32.mrb[0].mxu0
    %v2330 = vadd.f32 %v2117, %v2329
    %v2331 = vpop.f32.mrb[0].mxu0
    %2332 = vdwg.mxu0
    %v2333 = vpack.c.bf16 %v2288, %v2284
    %v2334 = vpack.c.bf16 %v2290, %v2286
    %v2335 = vpack.c.bf16 %v2330, %v2327
    %v2337 = vsel %vm584, %v2333, 0
    %v2340 = vsel %vm584, %v2334, 0
    %2342 = vmatprep.subr.bf16.mxu0 0
    %2343 = vmatpush1.bf16.xpose.msra.mxu0 %v2340
    %2344 = vmatprep.subr.bf16.mxu0 0
    %2345 = vmatpush1.bf16.xpose.msra.mxu0 0
    %2346 = vmatprep.subr.bf16.mxu0 0
    %2347 = vmatpush1.bf16.xpose.msra.mxu0 0
    %2348 = vmatprep.subr.bf16.mxu0 0
    %2349 = vmatpush1.bf16.xpose.msra.mxu0 0
    %2350 = vmatprep.subr.bf16.mxu0 0
    %2351 = vmatpush1.bf16.xpose.msra.mxu0 0
    %2352 = vmatprep.subr.bf16.mxu0 0
    %2353 = vmatpush1.bf16.xpose.msra.mxu0 0
    %2354 = vmatprep.subr.bf16.mxu0 0
    %2355 = vmatpush1.bf16.xpose.msra.mxu0 0
    %2356 = vmatprep.subr.bf16.mxu0 0
    %2357 = vmatpush1.bf16.xpose.msra.mxu0 0
    %2358 = vmatprep.subr.bf16.mxu0 0
    %2359 = vmatpush1.bf16.xpose.msra.mxu0 0
    %2360 = vmatprep.subr.bf16.mxu0 0
    %2361 = vmatpush1.bf16.xpose.msra.mxu0 0
    %2362 = vmatprep.subr.bf16.mxu0 0
    %2363 = vmatpush1.bf16.xpose.msra.mxu0 0
    %2364 = vmatprep.subr.bf16.mxu0 0
    %2365 = vmatpush1.bf16.xpose.msra.mxu0 0
    %2366 = vmatprep.subr.bf16.mxu0 0
    %2367 = vmatpush1.bf16.xpose.msra.mxu0 0
    %2368 = vmatprep.subr.bf16.mxu0 0
    %2369 = vmatpush1.bf16.xpose.msra.mxu0 0
    %2370 = vmatprep.subr.bf16.mxu0 0
    %2371 = vmatpush1.bf16.xpose.msra.mxu0 0
    %2372 = vmatprep.subr.bf16.mxu0 0
    %2373 = vmatpush1.bf16.xpose.msra.mxu0 0
    %2374 = vmatprep.mubr.bf16.mxu0 0
    %2375 = vmatmul.mubr.bf16.gmra.mrb[0].mxu0 %v2337
    %v2376 = vpop.f32.mrb[0].mxu0
    %v2377 = vadd.f32 %v582, %v2376
    %v2378 = vpop.f32.mrb[0].mxu0
    %v2379 = vpop.f32.mrb[0].mxu0
    %v2380 = vadd.f32 %v583, %v2379
    %v2381 = vpop.f32.mrb[0].mxu0
    %2382 = vdwg.mxu0
    %v2383 = vsel %vm632, %v2377, -inf
    %2384 = vmax.xlane.f32.xlu0 %v2383
    %v2385 = vpop.xlane.xlu0 %2384
    %v2386 = vsel %vm632, %v2380, -inf
    %2387 = vmax.xlane.f32.xlu0 %v2386
    %v2388 = vpop.xlane.xlu0 %2387
    %v2389 = vsub.f32 %v2377, %v2385
    %v2390 = vsub.f32 %v2380, %v2388
    %v2391 = vmul.f32 %v2389, 1.442695
    %v2392 = vpow.pop %v2391
    %v2393 = vmul.f32 %v2390, 1.442695
    %v2394 = vpow.pop %v2393
    %v2395 = vsel %vm632, %v2392, 0.0
    %2396 = vadd.xlane.f32.xlu0 %v2395
    %v2397 = vpop.xlane.xlu0 %2396
    %v2398 = vsel %vm632, %v2394, 0.0
    %2399 = vadd.xlane.f32.xlu0 %v2398
    %v2400 = vpop.xlane.xlu0 %2399
    %v2401 = vrcp.pop %v2397
    %v2402 = vrcp.pop %v2400
    %v2403 = vmul.f32 %v2392, %v2401
    %v2404 = vmul.f32 %v2394, %v2402
    %v2405 = vpack.c.bf16 %v2404, %v2403
    %v2407 = vsel %vm632, %v2405, 0
    %2409 = vmatprep.subr.bf16.mxu0 0
    %2410 = vmatpush1.bf16.msra.mxu0 %v2335
    %2411 = vmatprep.subr.bf16.mxu0 0
    %2412 = vmatpush1.bf16.msra.mxu0 0
    %2413 = vmatprep.subr.bf16.mxu0 0
    %2414 = vmatpush1.bf16.msra.mxu0 0
    %2415 = vmatprep.subr.bf16.mxu0 0
    %2416 = vmatpush1.bf16.msra.mxu0 0
    %2417 = vmatprep.subr.bf16.mxu0 0
    %2418 = vmatpush1.bf16.msra.mxu0 0
    %2419 = vmatprep.subr.bf16.mxu0 0
    %2420 = vmatpush1.bf16.msra.mxu0 0
    %2421 = vmatprep.subr.bf16.mxu0 0
    %2422 = vmatpush1.bf16.msra.mxu0 0
    %2423 = vmatprep.subr.bf16.mxu0 0
    %2424 = vmatpush1.bf16.msra.mxu0 0
    %2425 = vmatprep.subr.bf16.mxu0 0
    %2426 = vmatpush1.bf16.msra.mxu0 0
    %2427 = vmatprep.subr.bf16.mxu0 0
    %2428 = vmatpush1.bf16.msra.mxu0 0
    %2429 = vmatprep.subr.bf16.mxu0 0
    %2430 = vmatpush1.bf16.msra.mxu0 0
    %2431 = vmatprep.subr.bf16.mxu0 0
    %2432 = vmatpush1.bf16.msra.mxu0 0
    %2433 = vmatprep.subr.bf16.mxu0 0
    %2434 = vmatpush1.bf16.msra.mxu0 0
    %2435 = vmatprep.subr.bf16.mxu0 0
    %2436 = vmatpush1.bf16.msra.mxu0 0
    %2437 = vmatprep.subr.bf16.mxu0 0
    %2438 = vmatpush1.bf16.msra.mxu0 0
    %2439 = vmatprep.subr.bf16.mxu0 0
    %2440 = vmatpush1.bf16.msra.mxu0 0
    %2441 = vmatprep.mubr.bf16.mxu0 0
    %2442 = vmatmul.mubr.bf16.gmra.mrb[0].mxu0 %v2407
    %v2443 = vpop.f32.mrb[0].mxu0
    %v2444 = vadd.f32 0.0, %v2443
    %v2445 = vpop.f32.mrb[0].mxu0
    %v2446 = vpop.f32.mrb[0].mxu0
    %v2447 = vadd.f32 0.0, %v2446
    %v2448 = vpop.f32.mrb[0].mxu0
    %2449 = vdwg.mxu0
    %v2450 = vpack.c.bf16 %v2447, %v2444
    %s2451 = scalar_lea.vmem [#allocation7], 64
    %v2452 = vld [vmem:[%s2451] sm:$0xf]
    %v2453 = vld [vmem:[%s2451 + $0x4] sm:$0xf]
    %v2454 = vld [vmem:[%s2451 + $0x8] sm:$0xf]
    %v2455 = vld [vmem:[%s2451 + $0xc] sm:$0xf]
    %2457 = vrot.lane.b32.xlu0 %v2333, 96
    %v2458 = vpop.permute.xlu0 %2457
    %2460 = vrot.lane.b32.xlu0 %v2334, 96
    %v2461 = vpop.permute.xlu0 %2460
    %v2463 = vsel %vm584, %v2458, 0
    %v2466 = vsel %vm584, %v2461, 0
    %2468 = vmatprep.subr.bf16.mxu0 0
    %2469 = vmatpush1.bf16.xpose.msra.mxu0 %v2466
    %2470 = vmatprep.subr.bf16.mxu0 0
    %2471 = vmatpush1.bf16.xpose.msra.mxu0 0
    %2472 = vmatprep.subr.bf16.mxu0 0
    %2473 = vmatpush1.bf16.xpose.msra.mxu0 0
    %2474 = vmatprep.subr.bf16.mxu0 0
    %2475 = vmatpush1.bf16.xpose.msra.mxu0 0
    %2476 = vmatprep.subr.bf16.mxu0 0
    %2477 = vmatpush1.bf16.xpose.msra.mxu0 0
    %2478 = vmatprep.subr.bf16.mxu0 0
    %2479 = vmatpush1.bf16.xpose.msra.mxu0 0
    %2480 = vmatprep.subr.bf16.mxu0 0
    %2481 = vmatpush1.bf16.xpose.msra.mxu0 0
    %2482 = vmatprep.subr.bf16.mxu0 0
    %2483 = vmatpush1.bf16.xpose.msra.mxu0 0
    %2484 = vmatprep.subr.bf16.mxu0 0
    %2485 = vmatpush1.bf16.xpose.msra.mxu0 0
    %2486 = vmatprep.subr.bf16.mxu0 0
    %2487 = vmatpush1.bf16.xpose.msra.mxu0 0
    %2488 = vmatprep.subr.bf16.mxu0 0
    %2489 = vmatpush1.bf16.xpose.msra.mxu0 0
    %2490 = vmatprep.subr.bf16.mxu0 0
    %2491 = vmatpush1.bf16.xpose.msra.mxu0 0
    %2492 = vmatprep.subr.bf16.mxu0 0
    %2493 = vmatpush1.bf16.xpose.msra.mxu0 0
    %2494 = vmatprep.subr.bf16.mxu0 0
    %2495 = vmatpush1.bf16.xpose.msra.mxu0 0
    %2496 = vmatprep.subr.bf16.mxu0 0
    %2497 = vmatpush1.bf16.xpose.msra.mxu0 0
    %2498 = vmatprep.subr.bf16.mxu0 0
    %2499 = vmatpush1.bf16.xpose.msra.mxu0 0
    %2500 = vmatprep.mubr.bf16.mxu0 0
    %2501 = vmatmul.mubr.bf16.gmra.mrb[0].mxu0 %v2463
    %v2502 = vpop.f32.mrb[0].mxu0
    %v2503 = vadd.f32 %v582, %v2502
    %v2504 = vpop.f32.mrb[0].mxu0
    %v2505 = vpop.f32.mrb[0].mxu0
    %v2506 = vadd.f32 %v583, %v2505
    %v2507 = vpop.f32.mrb[0].mxu0
    %2508 = vdwg.mxu0
    %v2509 = vsel %vm632, %v2503, -inf
    %2510 = vmax.xlane.f32.xlu0 %v2509
    %v2511 = vpop.xlane.xlu0 %2510
    %v2512 = vsel %vm632, %v2506, -inf
    %2513 = vmax.xlane.f32.xlu0 %v2512
    %v2514 = vpop.xlane.xlu0 %2513
    %v2515 = vsub.f32 %v2503, %v2511
    %v2516 = vsub.f32 %v2506, %v2514
    %v2517 = vmul.f32 %v2515, 1.442695
    %v2518 = vpow.pop %v2517
    %v2519 = vmul.f32 %v2516, 1.442695
    %v2520 = vpow.pop %v2519
    %v2521 = vsel %vm632, %v2518, 0.0
    %2522 = vadd.xlane.f32.xlu0 %v2521
    %v2523 = vpop.xlane.xlu0 %2522
    %v2524 = vsel %vm632, %v2520, 0.0
    %2525 = vadd.xlane.f32.xlu0 %v2524
    %v2526 = vpop.xlane.xlu0 %2525
    %v2527 = vrcp.pop %v2523
    %v2528 = vrcp.pop %v2526
    %v2529 = vmul.f32 %v2518, %v2527
    %v2530 = vmul.f32 %v2520, %v2528
    %v2531 = vpack.c.bf16 %v2530, %v2529
    %2533 = vrot.lane.b32.xlu0 %v2335, 96
    %v2534 = vpop.permute.xlu0 %2533
    %v2537 = vsel %vm632, %v2531, 0
    %2539 = vmatprep.subr.bf16.mxu0 0
    %2540 = vmatpush1.bf16.msra.mxu0 %v2534
    %2541 = vmatprep.subr.bf16.mxu0 0
    %2542 = vmatpush1.bf16.msra.mxu0 0
    %2543 = vmatprep.subr.bf16.mxu0 0
    %2544 = vmatpush1.bf16.msra.mxu0 0
    %2545 = vmatprep.subr.bf16.mxu0 0
    %2546 = vmatpush1.bf16.msra.mxu0 0
    %2547 = vmatprep.subr.bf16.mxu0 0
    %2548 = vmatpush1.bf16.msra.mxu0 0
    %2549 = vmatprep.subr.bf16.mxu0 0
    %2550 = vmatpush1.bf16.msra.mxu0 0
    %2551 = vmatprep.subr.bf16.mxu0 0
    %2552 = vmatpush1.bf16.msra.mxu0 0
    %2553 = vmatprep.subr.bf16.mxu0 0
    %2554 = vmatpush1.bf16.msra.mxu0 0
    %2555 = vmatprep.subr.bf16.mxu0 0
    %2556 = vmatpush1.bf16.msra.mxu0 0
    %2557 = vmatprep.subr.bf16.mxu0 0
    %2558 = vmatpush1.bf16.msra.mxu0 0
    %2559 = vmatprep.subr.bf16.mxu0 0
    %2560 = vmatpush1.bf16.msra.mxu0 0
    %2561 = vmatprep.subr.bf16.mxu0 0
    %2562 = vmatpush1.bf16.msra.mxu0 0
    %2563 = vmatprep.subr.bf16.mxu0 0
    %2564 = vmatpush1.bf16.msra.mxu0 0
    %2565 = vmatprep.subr.bf16.mxu0 0
    %2566 = vmatpush1.bf16.msra.mxu0 0
    %2567 = vmatprep.subr.bf16.mxu0 0
    %2568 = vmatpush1.bf16.msra.mxu0 0
    %2569 = vmatprep.subr.bf16.mxu0 0
    %2570 = vmatpush1.bf16.msra.mxu0 0
    %2571 = vmatprep.mubr.bf16.mxu0 0
    %2572 = vmatmul.mubr.bf16.gmra.mrb[0].mxu0 %v2537
    %v2573 = vpop.f32.mrb[0].mxu0
    %v2574 = vadd.f32 0.0, %v2573
    %v2575 = vpop.f32.mrb[0].mxu0
    %v2576 = vpop.f32.mrb[0].mxu0
    %v2577 = vadd.f32 0.0, %v2576
    %v2578 = vpop.f32.mrb[0].mxu0
    %2579 = vdwg.mxu0
    %v2580 = vpack.c.bf16 %v2577, %v2574
    %s2581 = scalar_lea.vmem [#allocation7], 80
    %v2582 = vld [vmem:[%s2581] sm:$0xf]
    %v2583 = vld [vmem:[%s2581 + $0x4] sm:$0xf]
    %v2584 = vld [vmem:[%s2581 + $0x8] sm:$0xf]
    %v2585 = vld [vmem:[%s2581 + $0xc] sm:$0xf]
    %v2590 = vunpack.c.l.b16 %v2582
    %v2591 = vunpack.c.l.b16 %v2583
    %v2592 = vunpack.c.l.b16 %v2584
    %v2593 = vunpack.c.l.b16 %v2585
    %v2594 = vpack.c.b16 %v2591, %v2590
    %v2595 = vpack.c.b16 %v2593, %v2592
    %v2599 = vsel %vm584, %v2580, 0
    %2601 = vmatprep.subr.bf16.mxu0 0
    %2602 = vmatpush1.bf16.msra.mxu0 %v2594
    %2603 = vmatprep.subr.bf16.mxu0 0
    %2604 = vmatpush1.bf16.msra.mxu0 %v2595
    %2605 = vmatprep.subr.bf16.mxu0 0
    %2606 = vmatpush1.bf16.msra.mxu0 0
    %2607 = vmatprep.subr.bf16.mxu0 0
    %2608 = vmatpush1.bf16.msra.mxu0 0
    %2609 = vmatprep.subr.bf16.mxu0 0
    %2610 = vmatpush1.bf16.msra.mxu0 0
    %2611 = vmatprep.subr.bf16.mxu0 0
    %2612 = vmatpush1.bf16.msra.mxu0 0
    %2613 = vmatprep.subr.bf16.mxu0 0
    %2614 = vmatpush1.bf16.msra.mxu0 0
    %2615 = vmatprep.subr.bf16.mxu0 0
    %2616 = vmatpush1.bf16.msra.mxu0 0
    %2617 = vmatprep.subr.bf16.mxu0 0
    %2618 = vmatpush1.bf16.msra.mxu0 0
    %2619 = vmatprep.subr.bf16.mxu0 0
    %2620 = vmatpush1.bf16.msra.mxu0 0
    %2621 = vmatprep.subr.bf16.mxu0 0
    %2622 = vmatpush1.bf16.msra.mxu0 0
    %2623 = vmatprep.subr.bf16.mxu0 0
    %2624 = vmatpush1.bf16.msra.mxu0 0
    %2625 = vmatprep.subr.bf16.mxu0 0
    %2626 = vmatpush1.bf16.msra.mxu0 0
    %2627 = vmatprep.subr.bf16.mxu0 0
    %2628 = vmatpush1.bf16.msra.mxu0 0
    %2629 = vmatprep.subr.bf16.mxu0 0
    %2630 = vmatpush1.bf16.msra.mxu0 0
    %2631 = vmatprep.subr.bf16.mxu0 0
    %2632 = vmatpush1.bf16.msra.mxu0 0
    %2633 = vmatprep.mubr.bf16.mxu0 0
    %2634 = vmatmul.mubr.bf16.gmra.mrb[0].mxu0 %v2599
    %v2635 = vpop.f32.mrb[0].mxu0
    %v2636 = vadd.f32 0.0, %v2635
    %v2637 = vpop.f32.mrb[0].mxu0
    %v2638 = vpop.f32.mrb[0].mxu0
    %v2639 = vadd.f32 0.0, %v2638
    %v2640 = vpop.f32.mrb[0].mxu0
    %2641 = vdwg.mxu0
    %v2646 = vunpack.c.l.b16 %v2452
    %v2647 = vunpack.c.l.b16 %v2453
    %v2648 = vunpack.c.l.b16 %v2454
    %v2649 = vunpack.c.l.b16 %v2455
    %v2650 = vpack.c.b16 %v2647, %v2646
    %v2651 = vpack.c.b16 %v2649, %v2648
    %v2655 = vsel %vm584, %v2450, 0
    %2657 = vmatprep.subr.bf16.mxu0 0
    %2658 = vmatpush1.bf16.msra.mxu0 %v2650
    %2659 = vmatprep.subr.bf16.mxu0 0
    %2660 = vmatpush1.bf16.msra.mxu0 %v2651
    %2661 = vmatprep.subr.bf16.mxu0 0
    %2662 = vmatpush1.bf16.msra.mxu0 0
    %2663 = vmatprep.subr.bf16.mxu0 0
    %2664 = vmatpush1.bf16.msra.mxu0 0
    %2665 = vmatprep.subr.bf16.mxu0 0
    %2666 = vmatpush1.bf16.msra.mxu0 0
    %2667 = vmatprep.subr.bf16.mxu0 0
    %2668 = vmatpush1.bf16.msra.mxu0 0
    %2669 = vmatprep.subr.bf16.mxu0 0
    %2670 = vmatpush1.bf16.msra.mxu0 0
    %2671 = vmatprep.subr.bf16.mxu0 0
    %2672 = vmatpush1.bf16.msra.mxu0 0
    %2673 = vmatprep.subr.bf16.mxu0 0
    %2674 = vmatpush1.bf16.msra.mxu0 0
    %2675 = vmatprep.subr.bf16.mxu0 0
    %2676 = vmatpush1.bf16.msra.mxu0 0
    %2677 = vmatprep.subr.bf16.mxu0 0
    %2678 = vmatpush1.bf16.msra.mxu0 0
    %2679 = vmatprep.subr.bf16.mxu0 0
    %2680 = vmatpush1.bf16.msra.mxu0 0
    %2681 = vmatprep.subr.bf16.mxu0 0
    %2682 = vmatpush1.bf16.msra.mxu0 0
    %2683 = vmatprep.subr.bf16.mxu0 0
    %2684 = vmatpush1.bf16.msra.mxu0 0
    %2685 = vmatprep.subr.bf16.mxu0 0
    %2686 = vmatpush1.bf16.msra.mxu0 0
    %2687 = vmatprep.subr.bf16.mxu0 0
    %2688 = vmatpush1.bf16.msra.mxu0 0
    %2689 = vmatprep.mubr.bf16.mxu0 0
    %2690 = vmatmul.mubr.bf16.gmra.mrb[0].mxu0 %v2655
    %v2691 = vpop.f32.mrb[0].mxu0
    %v2692 = vadd.f32 %v2636, %v2691
    %v2693 = vpop.f32.mrb[0].mxu0
    %v2694 = vpop.f32.mrb[0].mxu0
    %v2695 = vadd.f32 %v2639, %v2694
    %v2696 = vpop.f32.mrb[0].mxu0
    %2697 = vdwg.mxu0
    %2698 = vrot.lane.b32.xlu0 %v2333, 64
    %v2699 = vpop.permute.xlu0 %2698
    %2700 = vrot.lane.b32.xlu0 %v2334, 64
    %v2701 = vpop.permute.xlu0 %2700
    %v2703 = vsel %vm584, %v2699, 0
    %v2706 = vsel %vm584, %v2701, 0
    %2708 = vmatprep.subr.bf16.mxu0 0
    %2709 = vmatpush1.bf16.xpose.msra.mxu0 %v2706
    %2710 = vmatprep.subr.bf16.mxu0 0
    %2711 = vmatpush1.bf16.xpose.msra.mxu0 0
    %2712 = vmatprep.subr.bf16.mxu0 0
    %2713 = vmatpush1.bf16.xpose.msra.mxu0 0
    %2714 = vmatprep.subr.bf16.mxu0 0
    %2715 = vmatpush1.bf16.xpose.msra.mxu0 0
    %2716 = vmatprep.subr.bf16.mxu0 0
    %2717 = vmatpush1.bf16.xpose.msra.mxu0 0
    %2718 = vmatprep.subr.bf16.mxu0 0
    %2719 = vmatpush1.bf16.xpose.msra.mxu0 0
    %2720 = vmatprep.subr.bf16.mxu0 0
    %2721 = vmatpush1.bf16.xpose.msra.mxu0 0
    %2722 = vmatprep.subr.bf16.mxu0 0
    %2723 = vmatpush1.bf16.xpose.msra.mxu0 0
    %2724 = vmatprep.subr.bf16.mxu0 0
    %2725 = vmatpush1.bf16.xpose.msra.mxu0 0
    %2726 = vmatprep.subr.bf16.mxu0 0
    %2727 = vmatpush1.bf16.xpose.msra.mxu0 0
    %2728 = vmatprep.subr.bf16.mxu0 0
    %2729 = vmatpush1.bf16.xpose.msra.mxu0 0
    %2730 = vmatprep.subr.bf16.mxu0 0
    %2731 = vmatpush1.bf16.xpose.msra.mxu0 0
    %2732 = vmatprep.subr.bf16.mxu0 0
    %2733 = vmatpush1.bf16.xpose.msra.mxu0 0
    %2734 = vmatprep.subr.bf16.mxu0 0
    %2735 = vmatpush1.bf16.xpose.msra.mxu0 0
    %2736 = vmatprep.subr.bf16.mxu0 0
    %2737 = vmatpush1.bf16.xpose.msra.mxu0 0
    %2738 = vmatprep.subr.bf16.mxu0 0
    %2739 = vmatpush1.bf16.xpose.msra.mxu0 0
    %2740 = vmatprep.mubr.bf16.mxu0 0
    %2741 = vmatmul.mubr.bf16.gmra.mrb[0].mxu0 %v2703
    %v2742 = vpop.f32.mrb[0].mxu0
    %v2743 = vadd.f32 %v582, %v2742
    %v2744 = vpop.f32.mrb[0].mxu0
    %v2745 = vpop.f32.mrb[0].mxu0
    %v2746 = vadd.f32 %v583, %v2745
    %v2747 = vpop.f32.mrb[0].mxu0
    %2748 = vdwg.mxu0
    %v2749 = vsel %vm632, %v2743, -inf
    %2750 = vmax.xlane.f32.xlu0 %v2749
    %v2751 = vpop.xlane.xlu0 %2750
    %v2752 = vsel %vm632, %v2746, -inf
    %2753 = vmax.xlane.f32.xlu0 %v2752
    %v2754 = vpop.xlane.xlu0 %2753
    %v2755 = vsub.f32 %v2743, %v2751
    %v2756 = vsub.f32 %v2746, %v2754
    %v2757 = vmul.f32 %v2755, 1.442695
    %v2758 = vpow.pop %v2757
    %v2759 = vmul.f32 %v2756, 1.442695
    %v2760 = vpow.pop %v2759
    %v2761 = vsel %vm632, %v2758, 0.0
    %2762 = vadd.xlane.f32.xlu0 %v2761
    %v2763 = vpop.xlane.xlu0 %2762
    %v2764 = vsel %vm632, %v2760, 0.0
    %2765 = vadd.xlane.f32.xlu0 %v2764
    %v2766 = vpop.xlane.xlu0 %2765
    %v2767 = vrcp.pop %v2763
    %v2768 = vrcp.pop %v2766
    %v2769 = vmul.f32 %v2758, %v2767
    %v2770 = vmul.f32 %v2760, %v2768
    %v2771 = vpack.c.bf16 %v2770, %v2769
    %2772 = vrot.lane.b32.xlu0 %v2335, 64
    %v2773 = vpop.permute.xlu0 %2772
    %v2776 = vsel %vm632, %v2771, 0
    %2778 = vmatprep.subr.bf16.mxu0 0
    %2779 = vmatpush1.bf16.msra.mxu0 %v2773
    %2780 = vmatprep.subr.bf16.mxu0 0
    %2781 = vmatpush1.bf16.msra.mxu0 0
    %2782 = vmatprep.subr.bf16.mxu0 0
    %2783 = vmatpush1.bf16.msra.mxu0 0
    %2784 = vmatprep.subr.bf16.mxu0 0
    %2785 = vmatpush1.bf16.msra.mxu0 0
    %2786 = vmatprep.subr.bf16.mxu0 0
    %2787 = vmatpush1.bf16.msra.mxu0 0
    %2788 = vmatprep.subr.bf16.mxu0 0
    %2789 = vmatpush1.bf16.msra.mxu0 0
    %2790 = vmatprep.subr.bf16.mxu0 0
    %2791 = vmatpush1.bf16.msra.mxu0 0
    %2792 = vmatprep.subr.bf16.mxu0 0
    %2793 = vmatpush1.bf16.msra.mxu0 0
    %2794 = vmatprep.subr.bf16.mxu0 0
    %2795 = vmatpush1.bf16.msra.mxu0 0
    %2796 = vmatprep.subr.bf16.mxu0 0
    %2797 = vmatpush1.bf16.msra.mxu0 0
    %2798 = vmatprep.subr.bf16.mxu0 0
    %2799 = vmatpush1.bf16.msra.mxu0 0
    %2800 = vmatprep.subr.bf16.mxu0 0
    %2801 = vmatpush1.bf16.msra.mxu0 0
    %2802 = vmatprep.subr.bf16.mxu0 0
    %2803 = vmatpush1.bf16.msra.mxu0 0
    %2804 = vmatprep.subr.bf16.mxu0 0
    %2805 = vmatpush1.bf16.msra.mxu0 0
    %2806 = vmatprep.subr.bf16.mxu0 0
    %2807 = vmatpush1.bf16.msra.mxu0 0
    %2808 = vmatprep.subr.bf16.mxu0 0
    %2809 = vmatpush1.bf16.msra.mxu0 0
    %2810 = vmatprep.mubr.bf16.mxu0 0
    %2811 = vmatmul.mubr.bf16.gmra.mrb[0].mxu0 %v2776
    %v2812 = vpop.f32.mrb[0].mxu0
    %v2813 = vadd.f32 0.0, %v2812
    %v2814 = vpop.f32.mrb[0].mxu0
    %v2815 = vpop.f32.mrb[0].mxu0
    %v2816 = vadd.f32 0.0, %v2815
    %v2817 = vpop.f32.mrb[0].mxu0
    %2818 = vdwg.mxu0
    %v2819 = vpack.c.bf16 %v2816, %v2813
    %s2820 = scalar_lea.vmem [#allocation7], 96
    %v2821 = vld [vmem:[%s2820] sm:$0xf]
    %v2822 = vld [vmem:[%s2820 + $0x4] sm:$0xf]
    %v2823 = vld [vmem:[%s2820 + $0x8] sm:$0xf]
    %v2824 = vld [vmem:[%s2820 + $0xc] sm:$0xf]
    %v2829 = vunpack.c.l.b16 %v2821
    %v2830 = vunpack.c.l.b16 %v2822
    %v2831 = vunpack.c.l.b16 %v2823
    %v2832 = vunpack.c.l.b16 %v2824
    %v2833 = vpack.c.b16 %v2830, %v2829
    %v2834 = vpack.c.b16 %v2832, %v2831
    %v2838 = vsel %vm584, %v2819, 0
    %2840 = vmatprep.subr.bf16.mxu0 0
    %2841 = vmatpush1.bf16.msra.mxu0 %v2833
    %2842 = vmatprep.subr.bf16.mxu0 0
    %2843 = vmatpush1.bf16.msra.mxu0 %v2834
    %2844 = vmatprep.subr.bf16.mxu0 0
    %2845 = vmatpush1.bf16.msra.mxu0 0
    %2846 = vmatprep.subr.bf16.mxu0 0
    %2847 = vmatpush1.bf16.msra.mxu0 0
    %2848 = vmatprep.subr.bf16.mxu0 0
    %2849 = vmatpush1.bf16.msra.mxu0 0
    %2850 = vmatprep.subr.bf16.mxu0 0
    %2851 = vmatpush1.bf16.msra.mxu0 0
    %2852 = vmatprep.subr.bf16.mxu0 0
    %2853 = vmatpush1.bf16.msra.mxu0 0
    %2854 = vmatprep.subr.bf16.mxu0 0
    %2855 = vmatpush1.bf16.msra.mxu0 0
    %2856 = vmatprep.subr.bf16.mxu0 0
    %2857 = vmatpush1.bf16.msra.mxu0 0
    %2858 = vmatprep.subr.bf16.mxu0 0
    %2859 = vmatpush1.bf16.msra.mxu0 0
    %2860 = vmatprep.subr.bf16.mxu0 0
    %2861 = vmatpush1.bf16.msra.mxu0 0
    %2862 = vmatprep.subr.bf16.mxu0 0
    %2863 = vmatpush1.bf16.msra.mxu0 0
    %2864 = vmatprep.subr.bf16.mxu0 0
    %2865 = vmatpush1.bf16.msra.mxu0 0
    %2866 = vmatprep.subr.bf16.mxu0 0
    %2867 = vmatpush1.bf16.msra.mxu0 0
    %2868 = vmatprep.subr.bf16.mxu0 0
    %2869 = vmatpush1.bf16.msra.mxu0 0
    %2870 = vmatprep.subr.bf16.mxu0 0
    %2871 = vmatpush1.bf16.msra.mxu0 0
    %2872 = vmatprep.mubr.bf16.mxu0 0
    %2873 = vmatmul.mubr.bf16.gmra.mrb[0].mxu0 %v2838
    %v2874 = vpop.f32.mrb[0].mxu0
    %v2875 = vadd.f32 0.0, %v2874
    %v2876 = vpop.f32.mrb[0].mxu0
    %v2877 = vpop.f32.mrb[0].mxu0
    %v2878 = vadd.f32 0.0, %v2877
    %v2879 = vpop.f32.mrb[0].mxu0
    %2880 = vdwg.mxu0
    %v2881 = vadd.f32 %v2692, %v2875
    %v2882 = vadd.f32 %v2695, %v2878
    %2883 = vrot.lane.b32.xlu0 %v2333, 32
    %v2884 = vpop.permute.xlu0 %2883
    %2885 = vrot.lane.b32.xlu0 %v2334, 32
    %v2886 = vpop.permute.xlu0 %2885
    %v2888 = vsel %vm584, %v2884, 0
    %v2891 = vsel %vm584, %v2886, 0
    %2893 = vmatprep.subr.bf16.mxu0 0
    %2894 = vmatpush1.bf16.xpose.msra.mxu0 %v2891
    %2895 = vmatprep.subr.bf16.mxu0 0
    %2896 = vmatpush1.bf16.xpose.msra.mxu0 0
    %2897 = vmatprep.subr.bf16.mxu0 0
    %2898 = vmatpush1.bf16.xpose.msra.mxu0 0
    %2899 = vmatprep.subr.bf16.mxu0 0
    %2900 = vmatpush1.bf16.xpose.msra.mxu0 0
    %2901 = vmatprep.subr.bf16.mxu0 0
    %2902 = vmatpush1.bf16.xpose.msra.mxu0 0
    %2903 = vmatprep.subr.bf16.mxu0 0
    %2904 = vmatpush1.bf16.xpose.msra.mxu0 0
    %2905 = vmatprep.subr.bf16.mxu0 0
    %2906 = vmatpush1.bf16.xpose.msra.mxu0 0
    %2907 = vmatprep.subr.bf16.mxu0 0
    %2908 = vmatpush1.bf16.xpose.msra.mxu0 0
    %2909 = vmatprep.subr.bf16.mxu0 0
    %2910 = vmatpush1.bf16.xpose.msra.mxu0 0
    %2911 = vmatprep.subr.bf16.mxu0 0
    %2912 = vmatpush1.bf16.xpose.msra.mxu0 0
    %2913 = vmatprep.subr.bf16.mxu0 0
    %2914 = vmatpush1.bf16.xpose.msra.mxu0 0
    %2915 = vmatprep.subr.bf16.mxu0 0
    %2916 = vmatpush1.bf16.xpose.msra.mxu0 0
    %2917 = vmatprep.subr.bf16.mxu0 0
    %2918 = vmatpush1.bf16.xpose.msra.mxu0 0
    %2919 = vmatprep.subr.bf16.mxu0 0
    %2920 = vmatpush1.bf16.xpose.msra.mxu0 0
    %2921 = vmatprep.subr.bf16.mxu0 0
    %2922 = vmatpush1.bf16.xpose.msra.mxu0 0
    %2923 = vmatprep.subr.bf16.mxu0 0
    %2924 = vmatpush1.bf16.xpose.msra.mxu0 0
    %2925 = vmatprep.mubr.bf16.mxu0 0
    %2926 = vmatmul.mubr.bf16.gmra.mrb[0].mxu0 %v2888
    %v2927 = vpop.f32.mrb[0].mxu0
    %v2928 = vadd.f32 %v582, %v2927
    %v2929 = vpop.f32.mrb[0].mxu0
    %v2930 = vpop.f32.mrb[0].mxu0
    %v2931 = vadd.f32 %v583, %v2930
    %v2932 = vpop.f32.mrb[0].mxu0
    %2933 = vdwg.mxu0
    %v2934 = vsel %vm632, %v2928, -inf
    %2935 = vmax.xlane.f32.xlu0 %v2934
    %v2936 = vpop.xlane.xlu0 %2935
    %v2937 = vsel %vm632, %v2931, -inf
    %2938 = vmax.xlane.f32.xlu0 %v2937
    %v2939 = vpop.xlane.xlu0 %2938
    %v2940 = vsub.f32 %v2928, %v2936
    %v2941 = vsub.f32 %v2931, %v2939
    %v2942 = vmul.f32 %v2940, 1.442695
    %v2943 = vpow.pop %v2942
    %v2944 = vmul.f32 %v2941, 1.442695
    %v2945 = vpow.pop %v2944
    %v2946 = vsel %vm632, %v2943, 0.0
    %2947 = vadd.xlane.f32.xlu0 %v2946
    %v2948 = vpop.xlane.xlu0 %2947
    %v2949 = vsel %vm632, %v2945, 0.0
    %2950 = vadd.xlane.f32.xlu0 %v2949
    %v2951 = vpop.xlane.xlu0 %2950
    %v2952 = vrcp.pop %v2948
    %v2953 = vrcp.pop %v2951
    %v2954 = vmul.f32 %v2943, %v2952
    %v2955 = vmul.f32 %v2945, %v2953
    %v2956 = vpack.c.bf16 %v2955, %v2954
    %2957 = vrot.lane.b32.xlu0 %v2335, 32
    %v2958 = vpop.permute.xlu0 %2957
    %v2961 = vsel %vm632, %v2956, 0
    %2963 = vmatprep.subr.bf16.mxu0 0
    %2964 = vmatpush1.bf16.msra.mxu0 %v2958
    %2965 = vmatprep.subr.bf16.mxu0 0
    %2966 = vmatpush1.bf16.msra.mxu0 0
    %2967 = vmatprep.subr.bf16.mxu0 0
    %2968 = vmatpush1.bf16.msra.mxu0 0
    %2969 = vmatprep.subr.bf16.mxu0 0
    %2970 = vmatpush1.bf16.msra.mxu0 0
    %2971 = vmatprep.subr.bf16.mxu0 0
    %2972 = vmatpush1.bf16.msra.mxu0 0
    %2973 = vmatprep.subr.bf16.mxu0 0
    %2974 = vmatpush1.bf16.msra.mxu0 0
    %2975 = vmatprep.subr.bf16.mxu0 0
    %2976 = vmatpush1.bf16.msra.mxu0 0
    %2977 = vmatprep.subr.bf16.mxu0 0
    %2978 = vmatpush1.bf16.msra.mxu0 0
    %2979 = vmatprep.subr.bf16.mxu0 0
    %2980 = vmatpush1.bf16.msra.mxu0 0
    %2981 = vmatprep.subr.bf16.mxu0 0
    %2982 = vmatpush1.bf16.msra.mxu0 0
    %2983 = vmatprep.subr.bf16.mxu0 0
    %2984 = vmatpush1.bf16.msra.mxu0 0
    %2985 = vmatprep.subr.bf16.mxu0 0
    %2986 = vmatpush1.bf16.msra.mxu0 0
    %2987 = vmatprep.subr.bf16.mxu0 0
    %2988 = vmatpush1.bf16.msra.mxu0 0
    %2989 = vmatprep.subr.bf16.mxu0 0
    %2990 = vmatpush1.bf16.msra.mxu0 0
    %2991 = vmatprep.subr.bf16.mxu0 0
    %2992 = vmatpush1.bf16.msra.mxu0 0
    %2993 = vmatprep.subr.bf16.mxu0 0
    %2994 = vmatpush1.bf16.msra.mxu0 0
    %2995 = vmatprep.mubr.bf16.mxu0 0
    %2996 = vmatmul.mubr.bf16.gmra.mrb[0].mxu0 %v2961
    %v2997 = vpop.f32.mrb[0].mxu0
    %v2998 = vadd.f32 0.0, %v2997
    %v2999 = vpop.f32.mrb[0].mxu0
    %v3000 = vpop.f32.mrb[0].mxu0
    %v3001 = vadd.f32 0.0, %v3000
    %v3002 = vpop.f32.mrb[0].mxu0
    %3003 = vdwg.mxu0
    %v3004 = vpack.c.bf16 %v3001, %v2998
    %s3005 = scalar_lea.vmem [#allocation7], 112
    %v3006 = vld [vmem:[%s3005] sm:$0xf]
    %v3007 = vld [vmem:[%s3005 + $0x4] sm:$0xf]
    %v3008 = vld [vmem:[%s3005 + $0x8] sm:$0xf]
    %v3009 = vld [vmem:[%s3005 + $0xc] sm:$0xf]
    %v3014 = vunpack.c.l.b16 %v3006
    %v3015 = vunpack.c.l.b16 %v3007
    %v3016 = vunpack.c.l.b16 %v3008
    %v3017 = vunpack.c.l.b16 %v3009
    %v3018 = vpack.c.b16 %v3015, %v3014
    %v3019 = vpack.c.b16 %v3017, %v3016
    %v3023 = vsel %vm584, %v3004, 0
    %3025 = vmatprep.subr.bf16.mxu0 0
    %3026 = vmatpush1.bf16.msra.mxu0 %v3018
    %3027 = vmatprep.subr.bf16.mxu0 0
    %3028 = vmatpush1.bf16.msra.mxu0 %v3019
    %3029 = vmatprep.subr.bf16.mxu0 0
    %3030 = vmatpush1.bf16.msra.mxu0 0
    %3031 = vmatprep.subr.bf16.mxu0 0
    %3032 = vmatpush1.bf16.msra.mxu0 0
    %3033 = vmatprep.subr.bf16.mxu0 0
    %3034 = vmatpush1.bf16.msra.mxu0 0
    %3035 = vmatprep.subr.bf16.mxu0 0
    %3036 = vmatpush1.bf16.msra.mxu0 0
    %3037 = vmatprep.subr.bf16.mxu0 0
    %3038 = vmatpush1.bf16.msra.mxu0 0
    %3039 = vmatprep.subr.bf16.mxu0 0
    %3040 = vmatpush1.bf16.msra.mxu0 0
    %3041 = vmatprep.subr.bf16.mxu0 0
    %3042 = vmatpush1.bf16.msra.mxu0 0
    %3043 = vmatprep.subr.bf16.mxu0 0
    %3044 = vmatpush1.bf16.msra.mxu0 0
    %3045 = vmatprep.subr.bf16.mxu0 0
    %3046 = vmatpush1.bf16.msra.mxu0 0
    %3047 = vmatprep.subr.bf16.mxu0 0
    %3048 = vmatpush1.bf16.msra.mxu0 0
    %3049 = vmatprep.subr.bf16.mxu0 0
    %3050 = vmatpush1.bf16.msra.mxu0 0
    %3051 = vmatprep.subr.bf16.mxu0 0
    %3052 = vmatpush1.bf16.msra.mxu0 0
    %3053 = vmatprep.subr.bf16.mxu0 0
    %3054 = vmatpush1.bf16.msra.mxu0 0
    %3055 = vmatprep.subr.bf16.mxu0 0
    %3056 = vmatpush1.bf16.msra.mxu0 0
    %3057 = vmatprep.mubr.bf16.mxu0 0
    %3058 = vmatmul.mubr.bf16.gmra.mrb[0].mxu0 %v3023
    %v3059 = vpop.f32.mrb[0].mxu0
    %v3060 = vadd.f32 0.0, %v3059
    %v3061 = vpop.f32.mrb[0].mxu0
    %v3062 = vpop.f32.mrb[0].mxu0
    %v3063 = vadd.f32 0.0, %v3062
    %v3064 = vpop.f32.mrb[0].mxu0
    %3065 = vdwg.mxu0
    %v3066 = vadd.f32 %v2881, %v3060
    %v3067 = vadd.f32 %v2882, %v3063
    %s3068 = scalar_lea.vmem [#allocation9], 1
    %v3069 = vld [vmem:[%s3068] sm:$0x1]
    %v3071 = vlaneseq
    %v3072 = vshrl.u32 %v3071, 7
    %v3073 = vsub.s32 0, %v3072
    %v3074 = vrot.slane %v3069, %v3073
    %v3076 = vadd.f32 %v3066, %v3074
    %v3077 = vadd.f32 %v3067, %v3074
    %v3078 = vadd.f32 %v2067, %v3076
    %v3079 = vadd.f32 %v2068, %v3077
    %s3080 = scalar_lea.vmem %s8, 1
    %v3081 = vld [vmem:[%s3080] sm:$0x1]
    %s3082 = scalar_lea.vmem [#allocation10], 1
    %v3083 = vld [vmem:[%s3082] sm:$0x1]
    %3084 = vadd.xlane.f32.xlu0 %v3078
    %v3085 = vpop.xlane.xlu0 %3084
    %3086 = vadd.xlane.f32.xlu0 %v3079
    %v3087 = vpop.xlane.xlu0 %3086
    %v3088 = vmul.f32 %v3085, %v1334
    %v3089 = vmul.f32 %v3087, %v1334
    %v3090 = vsub.f32 %v3078, %v3088
    %v3091 = vsub.f32 %v3079, %v3089
    %v3092 = vmul.f32 %v3090, %v3090
    %v3093 = vmul.f32 %v3091, %v3091
    %3094 = vadd.xlane.f32.xlu0 %v3092
    %v3095 = vpop.xlane.xlu0 %3094
    %3096 = vadd.xlane.f32.xlu0 %v3093
    %v3097 = vpop.xlane.xlu0 %3096
    %v3098 = vmul.f32 %v3095, %v1334
    %v3099 = vmul.f32 %v3097, %v1334
    %v3100 = vadd.f32 %v3098, 1e-05
    %v3101 = vadd.f32 %v3099, 1e-05
    %v3102 = vrsqrt.pop %v3100
    %v3103 = vrsqrt.pop %v3101
    %v3104 = vmul.f32 %v3090, %v3102
    %v3105 = vmul.f32 %v3091, %v3103
    %v3107 = vlaneseq
    %v3108 = vshrl.u32 %v3107, 7
    %v3109 = vsub.s32 0, %v3108
    %v3110 = vrot.slane %v3081, %v3109
    %v3112 = vmul.f32 %v3104, %v3110
    %v3113 = vmul.f32 %v3105, %v3110
    %v3115 = vlaneseq
    %v3116 = vshrl.u32 %v3115, 7
    %v3117 = vsub.s32 0, %v3116
    %v3118 = vrot.slane %v3083, %v3117
    %v3120 = vadd.f32 %v3112, %v3118
    %v3121 = vadd.f32 %v3113, %v3118
    %v3122 = vpack.c.bf16 %v3121, %v3120
    %s3123 = scalar_lea.vmem [#allocation12], 256
    %v3124 = vld [vmem:[%s3123] sm:$0xff]
    %v3125 = vld [vmem:[%s3123 + $0x8] sm:$0xff]
    %v3126 = vld [vmem:[%s3123 + $0x10] sm:$0xff]
    %v3127 = vld [vmem:[%s3123 + $0x18] sm:$0xff]
    %v3128 = vld [vmem:[%s3123 + $0x20] sm:$0xff]
    %v3129 = vld [vmem:[%s3123 + $0x28] sm:$0xff]
    %v3130 = vld [vmem:[%s3123 + $0x30] sm:$0xff]
    %v3131 = vld [vmem:[%s3123 + $0x38] sm:$0xff]
    %v3132 = vld [vmem:[%s3123 + $0x40] sm:$0xff]
    %v3133 = vld [vmem:[%s3123 + $0x48] sm:$0xff]
    %v3134 = vld [vmem:[%s3123 + $0x50] sm:$0xff]
    %v3135 = vld [vmem:[%s3123 + $0x58] sm:$0xff]
    %v3136 = vld [vmem:[%s3123 + $0x60] sm:$0xff]
    %v3137 = vld [vmem:[%s3123 + $0x68] sm:$0xff]
    %v3138 = vld [vmem:[%s3123 + $0x70] sm:$0xff]
    %v3139 = vld [vmem:[%s3123 + $0x78] sm:$0xff]
    %v3140 = vld [vmem:[%s3123 + $0x80] sm:$0xff]
    %v3141 = vld [vmem:[%s3123 + $0x88] sm:$0xff]
    %v3142 = vld [vmem:[%s3123 + $0x90] sm:$0xff]
    %v3143 = vld [vmem:[%s3123 + $0x98] sm:$0xff]
    %v3144 = vld [vmem:[%s3123 + $0xa0] sm:$0xff]
    %v3145 = vld [vmem:[%s3123 + $0xa8] sm:$0xff]
    %v3146 = vld [vmem:[%s3123 + $0xb0] sm:$0xff]
    %v3147 = vld [vmem:[%s3123 + $0xb8] sm:$0xff]
    %v3148 = vld [vmem:[%s3123 + $0xc0] sm:$0xff]
    %v3149 = vld [vmem:[%s3123 + $0xc8] sm:$0xff]
    %v3150 = vld [vmem:[%s3123 + $0xd0] sm:$0xff]
    %v3151 = vld [vmem:[%s3123 + $0xd8] sm:$0xff]
    %v3152 = vld [vmem:[%s3123 + $0xe0] sm:$0xff]
    %v3153 = vld [vmem:[%s3123 + $0xe8] sm:$0xff]
    %v3154 = vld [vmem:[%s3123 + $0xf0] sm:$0xff]
    %v3155 = vld [vmem:[%s3123 + $0xf8] sm:$0xff]
    %s3156 = scalar_lea.vmem [#allocation13], 4
    %v3157 = vld [vmem:[%s3156] sm:$0xf]
    %v3159 = vlaneseq
    %v3160 = vshrl.u32 %v3159, 7
    %v3161 = vsub.s32 0, %v3160
    %v3162 = vrot.slane %v3157, %v3161
    %v3163 = vlaneseq
    %v3164 = vshrl.u32 %v3163, 7
    %v3165 = vsub.s32 1, %v3164
    %v3166 = vrot.slane %v3157, %v3165
    %v3167 = vlaneseq
    %v3168 = vshrl.u32 %v3167, 7
    %v3169 = vsub.s32 2, %v3168
    %v3170 = vrot.slane %v3157, %v3169
    %v3171 = vlaneseq
    %v3172 = vshrl.u32 %v3171, 7
    %v3173 = vsub.s32 3, %v3172
    %v3174 = vrot.slane %v3157, %v3173
    %v3211 = vunpack.c.l.b16 %v3124
    %v3212 = vunpack.c.h.b16 %v3124
    %v3213 = vunpack.c.l.b16 %v3125
    %v3214 = vunpack.c.h.b16 %v3125
    %v3215 = vunpack.c.l.b16 %v3126
    %v3216 = vunpack.c.h.b16 %v3126
    %v3217 = vunpack.c.l.b16 %v3127
    %v3218 = vunpack.c.h.b16 %v3127
    %v3219 = vunpack.c.l.b16 %v3128
    %v3220 = vunpack.c.h.b16 %v3128
    %v3221 = vunpack.c.l.b16 %v3129
    %v3222 = vunpack.c.h.b16 %v3129
    %v3223 = vunpack.c.l.b16 %v3130
    %v3224 = vunpack.c.h.b16 %v3130
    %v3225 = vunpack.c.l.b16 %v3131
    %v3226 = vunpack.c.h.b16 %v3131
    %v3227 = vunpack.c.l.b16 %v3132
    %v3228 = vunpack.c.h.b16 %v3132
    %v3229 = vunpack.c.l.b16 %v3133
    %v3230 = vunpack.c.h.b16 %v3133
    %v3231 = vunpack.c.l.b16 %v3134
    %v3232 = vunpack.c.h.b16 %v3134
    %v3233 = vunpack.c.l.b16 %v3135
    %v3234 = vunpack.c.h.b16 %v3135
    %v3235 = vunpack.c.l.b16 %v3136
    %v3236 = vunpack.c.h.b16 %v3136
    %v3237 = vunpack.c.l.b16 %v3137
    %v3238 = vunpack.c.h.b16 %v3137
    %v3239 = vunpack.c.l.b16 %v3138
    %v3240 = vunpack.c.h.b16 %v3138
    %v3241 = vunpack.c.l.b16 %v3139
    %v3242 = vunpack.c.h.b16 %v3139
    %v3243 = vunpack.c.l.b16 %v3140
    %v3244 = vunpack.c.h.b16 %v3140
    %v3245 = vunpack.c.l.b16 %v3141
    %v3246 = vunpack.c.h.b16 %v3141
    %v3247 = vunpack.c.l.b16 %v3142
    %v3248 = vunpack.c.h.b16 %v3142
    %v3249 = vunpack.c.l.b16 %v3143
    %v3250 = vunpack.c.h.b16 %v3143
    %v3251 = vunpack.c.l.b16 %v3144
    %v3252 = vunpack.c.h.b16 %v3144
    %v3253 = vunpack.c.l.b16 %v3145
    %v3254 = vunpack.c.h.b16 %v3145
    %v3255 = vunpack.c.l.b16 %v3146
    %v3256 = vunpack.c.h.b16 %v3146
    %v3257 = vunpack.c.l.b16 %v3147
    %v3258 = vunpack.c.h.b16 %v3147
    %v3259 = vunpack.c.l.b16 %v3148
    %v3260 = vunpack.c.h.b16 %v3148
    %v3261 = vunpack.c.l.b16 %v3149
    %v3262 = vunpack.c.h.b16 %v3149
    %v3263 = vunpack.c.l.b16 %v3150
    %v3264 = vunpack.c.h.b16 %v3150
    %v3265 = vunpack.c.l.b16 %v3151
    %v3266 = vunpack.c.h.b16 %v3151
    %v3267 = vunpack.c.l.b16 %v3152
    %v3268 = vunpack.c.h.b16 %v3152
    %v3269 = vunpack.c.l.b16 %v3153
    %v3270 = vunpack.c.h.b16 %v3153
    %v3271 = vunpack.c.l.b16 %v3154
    %v3272 = vunpack.c.h.b16 %v3154
    %v3273 = vunpack.c.l.b16 %v3155
    %v3274 = vunpack.c.h.b16 %v3155
    %v3275 = vpack.c.b16 %v3215, %v3211
    %v3276 = vpack.c.b16 %v3216, %v3212
    %v3277 = vpack.c.b16 %v3217, %v3213
    %v3278 = vpack.c.b16 %v3218, %v3214
    %v3279 = vpack.c.b16 %v3223, %v3219
    %v3280 = vpack.c.b16 %v3224, %v3220
    %v3281 = vpack.c.b16 %v3225, %v3221
    %v3282 = vpack.c.b16 %v3226, %v3222
    %v3283 = vpack.c.b16 %v3231, %v3227
    %v3284 = vpack.c.b16 %v3232, %v3228
    %v3285 = vpack.c.b16 %v3233, %v3229
    %v3286 = vpack.c.b16 %v3234, %v3230
    %v3287 = vpack.c.b16 %v3239, %v3235
    %v3288 = vpack.c.b16 %v3240, %v3236
    %v3289 = vpack.c.b16 %v3241, %v3237
    %v3290 = vpack.c.b16 %v3242, %v3238
    %v3291 = vpack.c.b16 %v3247, %v3243
    %v3292 = vpack.c.b16 %v3248, %v3244
    %v3293 = vpack.c.b16 %v3249, %v3245
    %v3294 = vpack.c.b16 %v3250, %v3246
    %v3295 = vpack.c.b16 %v3255, %v3251
    %v3296 = vpack.c.b16 %v3256, %v3252
    %v3297 = vpack.c.b16 %v3257, %v3253
    %v3298 = vpack.c.b16 %v3258, %v3254
    %v3299 = vpack.c.b16 %v3263, %v3259
    %v3300 = vpack.c.b16 %v3264, %v3260
    %v3301 = vpack.c.b16 %v3265, %v3261
    %v3302 = vpack.c.b16 %v3266, %v3262
    %v3303 = vpack.c.b16 %v3271, %v3267
    %v3304 = vpack.c.b16 %v3272, %v3268
    %v3305 = vpack.c.b16 %v3273, %v3269
    %v3306 = vpack.c.b16 %v3274, %v3270
    %3339 = vmatprep.subr.bf16.mxu0 %v3276
    %3340 = vmatpush1.bf16.msra.mxu0 %v3275
    %3341 = vmatprep.subr.bf16.mxu0 %v3280
    %3342 = vmatpush1.bf16.msra.mxu0 %v3279
    %3343 = vmatprep.subr.bf16.mxu0 %v3284
    %3344 = vmatpush1.bf16.msra.mxu0 %v3283
    %3345 = vmatprep.subr.bf16.mxu0 %v3288
    %3346 = vmatpush1.bf16.msra.mxu0 %v3287
    %3347 = vmatprep.subr.bf16.mxu0 %v3292
    %3348 = vmatpush1.bf16.msra.mxu0 %v3291
    %3349 = vmatprep.subr.bf16.mxu0 %v3296
    %3350 = vmatpush1.bf16.msra.mxu0 %v3295
    %3351 = vmatprep.subr.bf16.mxu0 %v3300
    %3352 = vmatpush1.bf16.msra.mxu0 %v3299
    %3353 = vmatprep.subr.bf16.mxu0 %v3304
    %3354 = vmatpush1.bf16.msra.mxu0 %v3303
    %3355 = vmatprep.subr.bf16.mxu0 0
    %3356 = vmatpush1.bf16.msra.mxu0 0
    %3357 = vmatprep.subr.bf16.mxu0 0
    %3358 = vmatpush1.bf16.msra.mxu0 0
    %3359 = vmatprep.subr.bf16.mxu0 0
    %3360 = vmatpush1.bf16.msra.mxu0 0
    %3361 = vmatprep.subr.bf16.mxu0 0
    %3362 = vmatpush1.bf16.msra.mxu0 0
    %3363 = vmatprep.subr.bf16.mxu0 0
    %3364 = vmatpush1.bf16.msra.mxu0 0
    %3365 = vmatprep.subr.bf16.mxu0 0
    %3366 = vmatpush1.bf16.msra.mxu0 0
    %3367 = vmatprep.subr.bf16.mxu0 0
    %3368 = vmatpush1.bf16.msra.mxu0 0
    %3369 = vmatprep.subr.bf16.mxu0 0
    %3370 = vmatpush1.bf16.msra.mxu0 0
    %3371 = vmatprep.mubr.bf16.mxu0 0
    %3372 = vmatmul.mubr.bf16.gmra.mrb[0].mxu0 %v3122
    %v3373 = vpop.f32.mrb[0].mxu0
    %v3374 = vadd.f32 %v3162, %v3373
    %v3375 = vpop.f32.mrb[0].mxu0
    %v3376 = vadd.f32 %v3166, %v3375
    %v3377 = vpop.f32.mrb[0].mxu0
    %v3378 = vadd.f32 %v3162, %v3377
    %v3379 = vpop.f32.mrb[0].mxu0
    %v3380 = vadd.f32 %v3166, %v3379
    %3381 = vdwg.mxu0
    %3382 = vmatprep.subr.bf16.mxu0 %v3278
    %3383 = vmatpush1.bf16.msra.mxu0 %v3277
    %3384 = vmatprep.subr.bf16.mxu0 %v3282
    %3385 = vmatpush1.bf16.msra.mxu0 %v3281
    %3386 = vmatprep.subr.bf16.mxu0 %v3286
    %3387 = vmatpush1.bf16.msra.mxu0 %v3285
    %3388 = vmatprep.subr.bf16.mxu0 %v3290
    %3389 = vmatpush1.bf16.msra.mxu0 %v3289
    %3390 = vmatprep.subr.bf16.mxu0 %v3294
    %3391 = vmatpush1.bf16.msra.mxu0 %v3293
    %3392 = vmatprep.subr.bf16.mxu0 %v3298
    %3393 = vmatpush1.bf16.msra.mxu0 %v3297
    %3394 = vmatprep.subr.bf16.mxu0 %v3302
    %3395 = vmatpush1.bf16.msra.mxu0 %v3301
    %3396 = vmatprep.subr.bf16.mxu0 %v3306
    %3397 = vmatpush1.bf16.msra.mxu0 %v3305
    %3398 = vmatprep.subr.bf16.mxu0 0
    %3399 = vmatpush1.bf16.msra.mxu0 0
    %3400 = vmatprep.subr.bf16.mxu0 0
    %3401 = vmatpush1.bf16.msra.mxu0 0
    %3402 = vmatprep.subr.bf16.mxu0 0
    %3403 = vmatpush1.bf16.msra.mxu0 0
    %3404 = vmatprep.subr.bf16.mxu0 0
    %3405 = vmatpush1.bf16.msra.mxu0 0
    %3406 = vmatprep.subr.bf16.mxu0 0
    %3407 = vmatpush1.bf16.msra.mxu0 0
    %3408 = vmatprep.subr.bf16.mxu0 0
    %3409 = vmatpush1.bf16.msra.mxu0 0
    %3410 = vmatprep.subr.bf16.mxu0 0
    %3411 = vmatpush1.bf16.msra.mxu0 0
    %3412 = vmatprep.subr.bf16.mxu0 0
    %3413 = vmatpush1.bf16.msra.mxu0 0
    %3414 = vmatprep.mubr.bf16.mxu0 0
    %3415 = vmatmul.mubr.bf16.gmra.mrb[0].mxu0 %v3122
    %v3416 = vpop.f32.mrb[0].mxu0
    %v3417 = vadd.f32 %v3170, %v3416
    %v3418 = vpop.f32.mrb[0].mxu0
    %v3419 = vadd.f32 %v3174, %v3418
    %v3420 = vpop.f32.mrb[0].mxu0
    %v3421 = vadd.f32 %v3170, %v3420
    %v3422 = vpop.f32.mrb[0].mxu0
    %v3423 = vadd.f32 %v3174, %v3422
    %3424 = vdwg.mxu0
    %v3425 = vmax.f32 %v3374, 0.0
    %v3426 = vmax.f32 %v3376, 0.0
    %v3427 = vmax.f32 %v3417, 0.0
    %v3428 = vmax.f32 %v3419, 0.0
    %v3429 = vmax.f32 %v3378, 0.0
    %v3430 = vmax.f32 %v3380, 0.0
    %v3431 = vmax.f32 %v3421, 0.0
    %v3432 = vmax.f32 %v3423, 0.0
    %v3433 = vpack.c.bf16 %v3429, %v3425
    %v3434 = vpack.c.bf16 %v3430, %v3426
    %v3435 = vpack.c.bf16 %v3431, %v3427
    %v3436 = vpack.c.bf16 %v3432, %v3428
    %s3437 = scalar_lea.vmem [#allocation15], 256
    %v3438 = vld [vmem:[%s3437] sm:$0xf]
    %v3439 = vld [vmem:[%s3437 + $0x4] sm:$0xf]
    %v3440 = vld [vmem:[%s3437 + $0x8] sm:$0xf]
    %v3441 = vld [vmem:[%s3437 + $0xc] sm:$0xf]
    %v3442 = vld [vmem:[%s3437 + $0x10] sm:$0xf]
    %v3443 = vld [vmem:[%s3437 + $0x14] sm:$0xf]
    %v3444 = vld [vmem:[%s3437 + $0x18] sm:$0xf]
    %v3445 = vld [vmem:[%s3437 + $0x1c] sm:$0xf]
    %v3446 = vld [vmem:[%s3437 + $0x20] sm:$0xf]
    %v3447 = vld [vmem:[%s3437 + $0x24] sm:$0xf]
    %v3448 = vld [vmem:[%s3437 + $0x28] sm:$0xf]
    %v3449 = vld [vmem:[%s3437 + $0x2c] sm:$0xf]
    %v3450 = vld [vmem:[%s3437 + $0x30] sm:$0xf]
    %v3451 = vld [vmem:[%s3437 + $0x34] sm:$0xf]
    %v3452 = vld [vmem:[%s3437 + $0x38] sm:$0xf]
    %v3453 = vld [vmem:[%s3437 + $0x3c] sm:$0xf]
    %v3454 = vld [vmem:[%s3437 + $0x40] sm:$0xf]
    %v3455 = vld [vmem:[%s3437 + $0x44] sm:$0xf]
    %v3456 = vld [vmem:[%s3437 + $0x48] sm:$0xf]
    %v3457 = vld [vmem:[%s3437 + $0x4c] sm:$0xf]
    %v3458 = vld [vmem:[%s3437 + $0x50] sm:$0xf]
    %v3459 = vld [vmem:[%s3437 + $0x54] sm:$0xf]
    %v3460 = vld [vmem:[%s3437 + $0x58] sm:$0xf]
    %v3461 = vld [vmem:[%s3437 + $0x5c] sm:$0xf]
    %v3462 = vld [vmem:[%s3437 + $0x60] sm:$0xf]
    %v3463 = vld [vmem:[%s3437 + $0x64] sm:$0xf]
    %v3464 = vld [vmem:[%s3437 + $0x68] sm:$0xf]
    %v3465 = vld [vmem:[%s3437 + $0x6c] sm:$0xf]
    %v3466 = vld [vmem:[%s3437 + $0x70] sm:$0xf]
    %v3467 = vld [vmem:[%s3437 + $0x74] sm:$0xf]
    %v3468 = vld [vmem:[%s3437 + $0x78] sm:$0xf]
    %v3469 = vld [vmem:[%s3437 + $0x7c] sm:$0xf]
    %v3470 = vld [vmem:[%s3437 + $0x80] sm:$0xf]
    %v3471 = vld [vmem:[%s3437 + $0x84] sm:$0xf]
    %v3472 = vld [vmem:[%s3437 + $0x88] sm:$0xf]
    %v3473 = vld [vmem:[%s3437 + $0x8c] sm:$0xf]
    %v3474 = vld [vmem:[%s3437 + $0x90] sm:$0xf]
    %v3475 = vld [vmem:[%s3437 + $0x94] sm:$0xf]
    %v3476 = vld [vmem:[%s3437 + $0x98] sm:$0xf]
    %v3477 = vld [vmem:[%s3437 + $0x9c] sm:$0xf]
    %v3478 = vld [vmem:[%s3437 + $0xa0] sm:$0xf]
    %v3479 = vld [vmem:[%s3437 + $0xa4] sm:$0xf]
    %v3480 = vld [vmem:[%s3437 + $0xa8] sm:$0xf]
    %v3481 = vld [vmem:[%s3437 + $0xac] sm:$0xf]
    %v3482 = vld [vmem:[%s3437 + $0xb0] sm:$0xf]
    %v3483 = vld [vmem:[%s3437 + $0xb4] sm:$0xf]
    %v3484 = vld [vmem:[%s3437 + $0xb8] sm:$0xf]
    %v3485 = vld [vmem:[%s3437 + $0xbc] sm:$0xf]
    %v3486 = vld [vmem:[%s3437 + $0xc0] sm:$0xf]
    %v3487 = vld [vmem:[%s3437 + $0xc4] sm:$0xf]
    %v3488 = vld [vmem:[%s3437 + $0xc8] sm:$0xf]
    %v3489 = vld [vmem:[%s3437 + $0xcc] sm:$0xf]
    %v3490 = vld [vmem:[%s3437 + $0xd0] sm:$0xf]
    %v3491 = vld [vmem:[%s3437 + $0xd4] sm:$0xf]
    %v3492 = vld [vmem:[%s3437 + $0xd8] sm:$0xf]
    %v3493 = vld [vmem:[%s3437 + $0xdc] sm:$0xf]
    %v3494 = vld [vmem:[%s3437 + $0xe0] sm:$0xf]
    %v3495 = vld [vmem:[%s3437 + $0xe4] sm:$0xf]
    %v3496 = vld [vmem:[%s3437 + $0xe8] sm:$0xf]
    %v3497 = vld [vmem:[%s3437 + $0xec] sm:$0xf]
    %v3498 = vld [vmem:[%s3437 + $0xf0] sm:$0xf]
    %v3499 = vld [vmem:[%s3437 + $0xf4] sm:$0xf]
    %v3500 = vld [vmem:[%s3437 + $0xf8] sm:$0xf]
    %v3501 = vld [vmem:[%s3437 + $0xfc] sm:$0xf]
    %s3502 = scalar_lea.vmem [#allocation16], 1
    %v3503 = vld [vmem:[%s3502] sm:$0x1]
    %v3505 = vlaneseq
    %v3506 = vshrl.u32 %v3505, 7
    %v3507 = vsub.s32 0, %v3506
    %v3508 = vrot.slane %v3503, %v3507
    %v3574 = vunpack.c.l.b16 %v3438
    %v3575 = vunpack.c.l.b16 %v3439
    %v3576 = vunpack.c.l.b16 %v3440
    %v3577 = vunpack.c.l.b16 %v3441
    %v3578 = vunpack.c.l.b16 %v3442
    %v3579 = vunpack.c.l.b16 %v3443
    %v3580 = vunpack.c.l.b16 %v3444
    %v3581 = vunpack.c.l.b16 %v3445
    %v3582 = vunpack.c.l.b16 %v3446
    %v3583 = vunpack.c.l.b16 %v3447
    %v3584 = vunpack.c.l.b16 %v3448
    %v3585 = vunpack.c.l.b16 %v3449
    %v3586 = vunpack.c.l.b16 %v3450
    %v3587 = vunpack.c.l.b16 %v3451
    %v3588 = vunpack.c.l.b16 %v3452
    %v3589 = vunpack.c.l.b16 %v3453
    %v3590 = vunpack.c.l.b16 %v3454
    %v3591 = vunpack.c.l.b16 %v3455
    %v3592 = vunpack.c.l.b16 %v3456
    %v3593 = vunpack.c.l.b16 %v3457
    %v3594 = vunpack.c.l.b16 %v3458
    %v3595 = vunpack.c.l.b16 %v3459
    %v3596 = vunpack.c.l.b16 %v3460
    %v3597 = vunpack.c.l.b16 %v3461
    %v3598 = vunpack.c.l.b16 %v3462
    %v3599 = vunpack.c.l.b16 %v3463
    %v3600 = vunpack.c.l.b16 %v3464
    %v3601 = vunpack.c.l.b16 %v3465
    %v3602 = vunpack.c.l.b16 %v3466
    %v3603 = vunpack.c.l.b16 %v3467
    %v3604 = vunpack.c.l.b16 %v3468
    %v3605 = vunpack.c.l.b16 %v3469
    %v3606 = vunpack.c.l.b16 %v3470
    %v3607 = vunpack.c.l.b16 %v3471
    %v3608 = vunpack.c.l.b16 %v3472
    %v3609 = vunpack.c.l.b16 %v3473
    %v3610 = vunpack.c.l.b16 %v3474
    %v3611 = vunpack.c.l.b16 %v3475
    %v3612 = vunpack.c.l.b16 %v3476
    %v3613 = vunpack.c.l.b16 %v3477
    %v3614 = vunpack.c.l.b16 %v3478
    %v3615 = vunpack.c.l.b16 %v3479
    %v3616 = vunpack.c.l.b16 %v3480
    %v3617 = vunpack.c.l.b16 %v3481
    %v3618 = vunpack.c.l.b16 %v3482
    %v3619 = vunpack.c.l.b16 %v3483
    %v3620 = vunpack.c.l.b16 %v3484
    %v3621 = vunpack.c.l.b16 %v3485
    %v3622 = vunpack.c.l.b16 %v3486
    %v3623 = vunpack.c.l.b16 %v3487
    %v3624 = vunpack.c.l.b16 %v3488
    %v3625 = vunpack.c.l.b16 %v3489
    %v3626 = vunpack.c.l.b16 %v3490
    %v3627 = vunpack.c.l.b16 %v3491
    %v3628 = vunpack.c.l.b16 %v3492
    %v3629 = vunpack.c.l.b16 %v3493
    %v3630 = vunpack.c.l.b16 %v3494
    %v3631 = vunpack.c.l.b16 %v3495
    %v3632 = vunpack.c.l.b16 %v3496
    %v3633 = vunpack.c.l.b16 %v3497
    %v3634 = vunpack.c.l.b16 %v3498
    %v3635 = vunpack.c.l.b16 %v3499
    %v3636 = vunpack.c.l.b16 %v3500
    %v3637 = vunpack.c.l.b16 %v3501
    %v3638 = vpack.c.b16 %v3575, %v3574
    %v3639 = vpack.c.b16 %v3577, %v3576
    %v3640 = vpack.c.b16 %v3579, %v3578
    %v3641 = vpack.c.b16 %v3581, %v3580
    %v3642 = vpack.c.b16 %v3583, %v3582
    %v3643 = vpack.c.b16 %v3585, %v3584
    %v3644 = vpack.c.b16 %v3587, %v3586
    %v3645 = vpack.c.b16 %v3589, %v3588
    %v3646 = vpack.c.b16 %v3591, %v3590
    %v3647 = vpack.c.b16 %v3593, %v3592
    %v3648 = vpack.c.b16 %v3595, %v3594
    %v3649 = vpack.c.b16 %v3597, %v3596
    %v3650 = vpack.c.b16 %v3599, %v3598
    %v3651 = vpack.c.b16 %v3601, %v3600
    %v3652 = vpack.c.b16 %v3603, %v3602
    %v3653 = vpack.c.b16 %v3605, %v3604
    %v3654 = vpack.c.b16 %v3607, %v3606
    %v3655 = vpack.c.b16 %v3609, %v3608
    %v3656 = vpack.c.b16 %v3611, %v3610
    %v3657 = vpack.c.b16 %v3613, %v3612
    %v3658 = vpack.c.b16 %v3615, %v3614
    %v3659 = vpack.c.b16 %v3617, %v3616
    %v3660 = vpack.c.b16 %v3619, %v3618
    %v3661 = vpack.c.b16 %v3621, %v3620
    %v3662 = vpack.c.b16 %v3623, %v3622
    %v3663 = vpack.c.b16 %v3625, %v3624
    %v3664 = vpack.c.b16 %v3627, %v3626
    %v3665 = vpack.c.b16 %v3629, %v3628
    %v3666 = vpack.c.b16 %v3631, %v3630
    %v3667 = vpack.c.b16 %v3633, %v3632
    %v3668 = vpack.c.b16 %v3635, %v3634
    %v3669 = vpack.c.b16 %v3637, %v3636
    %3702 = vmatprep.subr.bf16.mxu0 0
    %3703 = vmatpush1.bf16.msra.mxu0 %v3638
    %3704 = vmatprep.subr.bf16.mxu0 0
    %3705 = vmatpush1.bf16.msra.mxu0 %v3639
    %3706 = vmatprep.subr.bf16.mxu0 0
    %3707 = vmatpush1.bf16.msra.mxu0 %v3640
    %3708 = vmatprep.subr.bf16.mxu0 0
    %3709 = vmatpush1.bf16.msra.mxu0 %v3641
    %3710 = vmatprep.subr.bf16.mxu0 0
    %3711 = vmatpush1.bf16.msra.mxu0 %v3642
    %3712 = vmatprep.subr.bf16.mxu0 0
    %3713 = vmatpush1.bf16.msra.mxu0 %v3643
    %3714 = vmatprep.subr.bf16.mxu0 0
    %3715 = vmatpush1.bf16.msra.mxu0 %v3644
    %3716 = vmatprep.subr.bf16.mxu0 0
    %3717 = vmatpush1.bf16.msra.mxu0 %v3645
    %3718 = vmatprep.subr.bf16.mxu0 0
    %3719 = vmatpush1.bf16.msra.mxu0 %v3646
    %3720 = vmatprep.subr.bf16.mxu0 0
    %3721 = vmatpush1.bf16.msra.mxu0 %v3647
    %3722 = vmatprep.subr.bf16.mxu0 0
    %3723 = vmatpush1.bf16.msra.mxu0 %v3648
    %3724 = vmatprep.subr.bf16.mxu0 0
    %3725 = vmatpush1.bf16.msra.mxu0 %v3649
    %3726 = vmatprep.subr.bf16.mxu0 0
    %3727 = vmatpush1.bf16.msra.mxu0 %v3650
    %3728 = vmatprep.subr.bf16.mxu0 0
    %3729 = vmatpush1.bf16.msra.mxu0 %v3651
    %3730 = vmatprep.subr.bf16.mxu0 0
    %3731 = vmatpush1.bf16.msra.mxu0 %v3652
    %3732 = vmatprep.subr.bf16.mxu0 0
    %3733 = vmatpush1.bf16.msra.mxu0 %v3653
    %3734 = vmatprep.mubr.bf16.mxu0 %v3434
    %3735 = vmatmul.mubr.bf16.gmra.mrb[0].mxu0 %v3433
    %v3736 = vpop.f32.mrb[0].mxu0
    %v3737 = vadd.f32 %v3508, %v3736
    %v3738 = vpop.f32.mrb[0].mxu0
    %v3739 = vpop.f32.mrb[0].mxu0
    %v3740 = vadd.f32 %v3508, %v3739
    %v3741 = vpop.f32.mrb[0].mxu0
    %3742 = vdwg.mxu0
    %3743 = vmatprep.subr.bf16.mxu0 0
    %3744 = vmatpush1.bf16.msra.mxu0 %v3654
    %3745 = vmatprep.subr.bf16.mxu0 0
    %3746 = vmatpush1.bf16.msra.mxu0 %v3655
    %3747 = vmatprep.subr.bf16.mxu0 0
    %3748 = vmatpush1.bf16.msra.mxu0 %v3656
    %3749 = vmatprep.subr.bf16.mxu0 0
    %3750 = vmatpush1.bf16.msra.mxu0 %v3657
    %3751 = vmatprep.subr.bf16.mxu0 0
    %3752 = vmatpush1.bf16.msra.mxu0 %v3658
    %3753 = vmatprep.subr.bf16.mxu0 0
    %3754 = vmatpush1.bf16.msra.mxu0 %v3659
    %3755 = vmatprep.subr.bf16.mxu0 0
    %3756 = vmatpush1.bf16.msra.mxu0 %v3660
    %3757 = vmatprep.subr.bf16.mxu0 0
    %3758 = vmatpush1.bf16.msra.mxu0 %v3661
    %3759 = vmatprep.subr.bf16.mxu0 0
    %3760 = vmatpush1.bf16.msra.mxu0 %v3662
    %3761 = vmatprep.subr.bf16.mxu0 0
    %3762 = vmatpush1.bf16.msra.mxu0 %v3663
    %3763 = vmatprep.subr.bf16.mxu0 0
    %3764 = vmatpush1.bf16.msra.mxu0 %v3664
    %3765 = vmatprep.subr.bf16.mxu0 0
    %3766 = vmatpush1.bf16.msra.mxu0 %v3665
    %3767 = vmatprep.subr.bf16.mxu0 0
    %3768 = vmatpush1.bf16.msra.mxu0 %v3666
    %3769 = vmatprep.subr.bf16.mxu0 0
    %3770 = vmatpush1.bf16.msra.mxu0 %v3667
    %3771 = vmatprep.subr.bf16.mxu0 0
    %3772 = vmatpush1.bf16.msra.mxu0 %v3668
    %3773 = vmatprep.subr.bf16.mxu0 0
    %3774 = vmatpush1.bf16.msra.mxu0 %v3669
    %3775 = vmatprep.mubr.bf16.mxu0 %v3436
    %3776 = vmatmul.mubr.bf16.gmra.mrb[0].mxu0 %v3435
    %v3777 = vpop.f32.mrb[0].mxu0
    %v3778 = vadd.f32 %v3737, %v3777
    %v3779 = vpop.f32.mrb[0].mxu0
    %v3780 = vpop.f32.mrb[0].mxu0
    %v3781 = vadd.f32 %v3740, %v3780
    %v3782 = vpop.f32.mrb[0].mxu0
    %3783 = vdwg.mxu0
    %v3784 = vadd.f32 %v3120, %v3778
    %v3785 = vadd.f32 %v3121, %v3781
    %s3786 = scalar_lea.vmem %s14, 1
    %v3787 = vld [vmem:[%s3786] sm:$0x1]
    %s3788 = scalar_lea.vmem %s15, 1
    %v3789 = vld [vmem:[%s3788] sm:$0x1]
    %3790 = vadd.xlane.f32.xlu0 %v3784
    %v3791 = vpop.xlane.xlu0 %3790
    %3792 = vadd.xlane.f32.xlu0 %v3785
    %v3793 = vpop.xlane.xlu0 %3792
    %v3794 = vmul.f32 %v3791, %v1334
    %v3795 = vmul.f32 %v3793, %v1334
    %v3796 = vsub.f32 %v3784, %v3794
    %v3797 = vsub.f32 %v3785, %v3795
    %v3798 = vmul.f32 %v3796, %v3796
    %v3799 = vmul.f32 %v3797, %v3797
    %3800 = vadd.xlane.f32.xlu0 %v3798
    %v3801 = vpop.xlane.xlu0 %3800
    %3802 = vadd.xlane.f32.xlu0 %v3799
    %v3803 = vpop.xlane.xlu0 %3802
    %v3804 = vmul.f32 %v3801, %v1334
    %v3805 = vmul.f32 %v3803, %v1334
    %v3806 = vadd.f32 %v3804, 1e-05
    %v3807 = vadd.f32 %v3805, 1e-05
    %v3808 = vrsqrt.pop %v3806
    %v3809 = vrsqrt.pop %v3807
    %v3810 = vmul.f32 %v3796, %v3808
    %v3811 = vmul.f32 %v3797, %v3809
    %v3813 = vlaneseq
    %v3814 = vshrl.u32 %v3813, 7
    %v3815 = vsub.s32 0, %v3814
    %v3816 = vrot.slane %v3787, %v3815
    %v3818 = vmul.f32 %v3810, %v3816
    %v3819 = vmul.f32 %v3811, %v3816
    %v3821 = vlaneseq
    %v3822 = vshrl.u32 %v3821, 7
    %v3823 = vsub.s32 0, %v3822
    %v3824 = vrot.slane %v3789, %v3823
    %v3826 = vadd.f32 %v3818, %v3824
    %v3827 = vadd.f32 %v3819, %v3824
    %v3828 = vpack.c.bf16 %v3827, %v3826
    %v3829 = vld [vmem:[#allocation18] sm:$0xf]
    %v3830 = vld [vmem:[#allocation18 + $0x4] sm:$0xf]
    %v3831 = vld [vmem:[#allocation18 + $0x8] sm:$0xf]
    %v3832 = vld [vmem:[#allocation18 + $0xc] sm:$0xf]
    %v3833 = vld [vmem:[#allocation18 + $0x10] sm:$0xf]
    %v3834 = vld [vmem:[#allocation18 + $0x14] sm:$0xf]
    %v3835 = vld [vmem:[#allocation18 + $0x18] sm:$0xf]
    %v3836 = vld [vmem:[#allocation18 + $0x1c] sm:$0xf]
    %v3837 = vld [vmem:[#allocation18 + $0x20] sm:$0xf]
    %v3838 = vld [vmem:[#allocation18 + $0x24] sm:$0xf]
    %v3839 = vld [vmem:[#allocation18 + $0x28] sm:$0xf]
    %v3840 = vld [vmem:[#allocation18 + $0x2c] sm:$0xf]
    %v3841 = vld [vmem:[#allocation18 + $0x30] sm:$0xf]
    %v3842 = vld [vmem:[#allocation18 + $0x34] sm:$0xf]
    %v3843 = vld [vmem:[#allocation18 + $0x38] sm:$0xf]
    %v3844 = vld [vmem:[#allocation18 + $0x3c] sm:$0xf]
    %v3845 = vld [vmem:[#allocation19] sm:$0x1]
    %v3847 = vlaneseq
    %v3848 = vshrl.u32 %v3847, 7
    %v3849 = vsub.s32 0, %v3848
    %v3850 = vrot.slane %v3845, %v3849
    %v3868 = vunpack.c.l.b16 %v3829
    %v3869 = vunpack.c.l.b16 %v3830
    %v3870 = vunpack.c.l.b16 %v3831
    %v3871 = vunpack.c.l.b16 %v3832
    %v3872 = vunpack.c.l.b16 %v3833
    %v3873 = vunpack.c.l.b16 %v3834
    %v3874 = vunpack.c.l.b16 %v3835
    %v3875 = vunpack.c.l.b16 %v3836
    %v3876 = vunpack.c.l.b16 %v3837
    %v3877 = vunpack.c.l.b16 %v3838
    %v3878 = vunpack.c.l.b16 %v3839
    %v3879 = vunpack.c.l.b16 %v3840
    %v3880 = vunpack.c.l.b16 %v3841
    %v3881 = vunpack.c.l.b16 %v3842
    %v3882 = vunpack.c.l.b16 %v3843
    %v3883 = vunpack.c.l.b16 %v3844
    %v3884 = vpack.c.b16 %v3869, %v3868
    %v3885 = vpack.c.b16 %v3871, %v3870
    %v3886 = vpack.c.b16 %v3873, %v3872
    %v3887 = vpack.c.b16 %v3875, %v3874
    %v3888 = vpack.c.b16 %v3877, %v3876
    %v3889 = vpack.c.b16 %v3879, %v3878
    %v3890 = vpack.c.b16 %v3881, %v3880
    %v3891 = vpack.c.b16 %v3883, %v3882
    %3900 = vmatprep.subr.bf16.mxu0 0
    %3901 = vmatpush1.bf16.msra.mxu0 %v3884
    %3902 = vmatprep.subr.bf16.mxu0 0
    %3903 = vmatpush1.bf16.msra.mxu0 %v3885
    %3904 = vmatprep.subr.bf16.mxu0 0
    %3905 = vmatpush1.bf16.msra.mxu0 %v3886
    %3906 = vmatprep.subr.bf16.mxu0 0
    %3907 = vmatpush1.bf16.msra.mxu0 %v3887
    %3908 = vmatprep.subr.bf16.mxu0 0
    %3909 = vmatpush1.bf16.msra.mxu0 %v3888
    %3910 = vmatprep.subr.bf16.mxu0 0
    %3911 = vmatpush1.bf16.msra.mxu0 %v3889
    %3912 = vmatprep.subr.bf16.mxu0 0
    %3913 = vmatpush1.bf16.msra.mxu0 %v3890
    %3914 = vmatprep.subr.bf16.mxu0 0
    %3915 = vmatpush1.bf16.msra.mxu0 %v3891
    %3916 = vmatprep.subr.bf16.mxu0 0
    %3917 = vmatpush1.bf16.msra.mxu0 0
    %3918 = vmatprep.subr.bf16.mxu0 0
    %3919 = vmatpush1.bf16.msra.mxu0 0
    %3920 = vmatprep.subr.bf16.mxu0 0
    %3921 = vmatpush1.bf16.msra.mxu0 0
    %3922 = vmatprep.subr.bf16.mxu0 0
    %3923 = vmatpush1.bf16.msra.mxu0 0
    %3924 = vmatprep.subr.bf16.mxu0 0
    %3925 = vmatpush1.bf16.msra.mxu0 0
    %3926 = vmatprep.subr.bf16.mxu0 0
    %3927 = vmatpush1.bf16.msra.mxu0 0
    %3928 = vmatprep.subr.bf16.mxu0 0
    %3929 = vmatpush1.bf16.msra.mxu0 0
    %3930 = vmatprep.subr.bf16.mxu0 0
    %3931 = vmatpush1.bf16.msra.mxu0 0
    %3932 = vmatprep.mubr.bf16.mxu0 0
    %3933 = vmatmul.mubr.bf16.gmra.mrb[0].mxu0 %v3828
    %v3934 = vpop.f32.mrb[0].mxu0
    %v3935 = vadd.f32 %v3850, %v3934
    %v3936 = vpop.f32.mrb[0].mxu0
    %v3937 = vpop.f32.mrb[0].mxu0
    %v3938 = vadd.f32 %v3850, %v3937
    %v3939 = vpop.f32.mrb[0].mxu0
    %3940 = vdwg.mxu0
    %3941 = vst [vmem:[%s18] sm:$0xff] %v3935
    %3942 = vst [vmem:[%s18 + $0x8] sm:$0xff] %v3938
    // Predicated region
    $region122: #{small_transformer_forward.1} parent=1 // pred_check
      _
    $region123: #{small_transformer_forward.1} parent=1 // pred_check_branch
      %3944 = sbr.rel (0) target = $region125
    $region124: #{small_transformer_forward.1} parent=1 // pred_region
      _
    $region125: #{small_transformer_forward.1} parent=1 // pred_fallthru
      _
    // Predicated region
    $region126: #{small_transformer_forward.1} parent=1 // pred_check
      _
    $region127: #{small_transformer_forward.1} parent=1 // pred_check_branch
      %3946 = sbr.rel (0) target = $region129
    $region128: #{small_transformer_forward.1} parent=1 // pred_region
      _
    $region129: #{small_transformer_forward.1} parent=1 // pred_fallthru
      _
    %3947 = vsyncpa [#allocation3], 1
    %3948 = vsyncpa [#allocation5], 1
    %3949 = vsyncpa [#allocation8], 1
    %3950 = vsyncpa [#allocation11], 1
    %3951 = vsyncpa [#allocation14], 1
    %3952 = vsyncpa [#allocation17], 1
    %3953 = vsyncpa [#allocation20], 1

</llo_original>
